<compile_context>
chip_gen: v7x
topology: tpu7x:2x2x1
jax: 0.10.0
libtpu: 0.0.40
codegen_flags: <defaults>
</compile_context>

<pallas_src>
import functools

import jax
import jax.numpy as jnp
import numpy as np
from jax import lax
from jax.experimental import pallas as pl
from jax.experimental.pallas import tpu as pltpu


def _round_up(x, m):
    return ((x + m - 1) // m) * m


def _vmem_capacity_bytes():
    """Best-effort VMEM capacity query; conservative (v7x) fallback."""
    try:
        info = pltpu.get_tpu_info()
        for attr in ("vmem_capacity_bytes", "vmem_bytes", "vmem_size_bytes"):
            v = getattr(info, attr, None)
            if v:
                return int(v)
    except Exception:
        pass
    return 64 * 1024 * 1024


# ---------------------------------------------------------------------------
# Fused kernel: per grid step, (a) one big MXU matmul for the chunk's input
# projection, then (b) the serial GRU recurrence over Tc timesteps.
# Hidden state persists in VMEM scratch across the serial time axis.
# ---------------------------------------------------------------------------
def _gru_fused_kernel(x_ref, wih_ref, bproj_ref, whh_ref, bhn_ref,
                      h_out_ref, gi_scratch, h_scratch,
                      *, tc, hp, ip, seq_len, unroll):
    t = pl.program_id(1)                 # time-chunk index (serial, "arbitrary")

    @pl.when(t == 0)
    def _():
        h_scratch[...] = jnp.zeros_like(h_scratch)

    bc = h_scratch.shape[0]

    # --- input projection for the whole time chunk: one big MXU matmul ------
    # (Tc*Bc, Ip) @ (Ip, 3Hp) + folded bias; off the per-timestep critical path.
    x_chunk = x_ref[...].reshape(tc * bc, ip)
    gi = jnp.dot(x_chunk, wih_ref[...], preferred_element_type=jnp.float32)
    gi = gi + bproj_ref[...]
    gi_scratch[...] = gi.reshape(tc, bc, 3 * hp)

    # hoist loop-invariants (weight slices, b_hn broadcast) out of the loop
    whh = whh_ref[...]                                   # (Hp, 3Hp), VMEM-resident
    whh_rz = whh[:, :2 * hp]
    whh_n = whh[:, 2 * hp:]
    bhn = jnp.broadcast_to(bhn_ref[...], (bc, hp))       # (Bc, Hp)

    t0 = t * tc

    def step(i, h):
        gi_t = gi_scratch[i]                                          # (Bc, 3Hp)
        # split the hidden matmul: sigmoids on gh_rz overlap the n-gate matmul
        gh_rz = jnp.dot(h, whh_rz, preferred_element_type=jnp.float32)
        gh_n = jnp.dot(h, whh_n, preferred_element_type=jnp.float32)
        # gate slices are lane-aligned (Hp is a multiple of 128)
        r = jax.nn.sigmoid(gi_t[:, :hp] + gh_rz[:, :hp])
        z = jax.nn.sigmoid(gi_t[:, hp:2 * hp] + gh_rz[:, hp:])
        n = jnp.tanh(gi_t[:, 2 * hp:] + r * (gh_n + bhn))
        h_new = (1.0 - z) * n + z * h
        if seq_len % tc == 0:            # static: no masking needed
            return h_new
        # mask out padded timesteps of the final partial chunk
        return jnp.where(t0 + i < seq_len, h_new, h)

    h = lax.fori_loop(0, tc, step, h_scratch[...], unroll=unroll)
    h_scratch[...] = h

    @pl.when(t == pl.num_programs(1) - 1)
    def _():
        h_out_ref[...] = h


# ---------------------------------------------------------------------------
# Wrapper
# ---------------------------------------------------------------------------
def my_gru_forward(x, params):
    """x: (T, B, I) float32 (seq-first, PyTorch nn.GRU default layout).
    Returns y: (B,) float32, matching MyGRU.forward."""
    T, B, I = x.shape
    w_ih, w_hh, b_ih, b_hh, w_fc, b_fc = params
    H = w_hh.shape[1]
    f32 = jnp.float32

    # ---- hardware-tile padding ---------------------------------------------
    Ip = _round_up(max(I, 128), 128)                      # lane multiple
    # 256-multiples above H=128 fill v6e/v7x's 256-wide MXU; 128 is enough below
    Hp = _round_up(max(H, 128), 256 if H > 128 else 128)

    Bp = _round_up(max(B, 8), 8)                          # sublane multiple
    if Bp >= 16:
        # >= 2 batch chunks so the "parallel" axis spans both v7x TensorCores
        Bc = min(_round_up(Bp // 2, 8), 128)
    else:
        Bc = Bp
    Bp = _round_up(Bp, Bc)
    n_b = Bp // Bc

    # ---- VMEM-budgeted time chunk & vmem limit ------------------------------
    vmem_cap = _vmem_capacity_bytes()
    vmem_limit = int(min(vmem_cap * 85 // 100, 100 * 1024 * 1024))

    bytes_weights = 4 * (Ip * 3 * Hp + Hp * 3 * Hp + 4 * Hp)   # W_ih + W_hh + biases
    bytes_h = 4 * 3 * Bc * Hp                                  # h scratch + h_out (2x)
    per_tc = 4 * (2 * Bc * Ip + Bc * 3 * Hp)                   # x chunk (2x) + gi scratch
    # weights counted twice in the budget in case Buffered(1) is unavailable
    budget = vmem_limit - 2 * bytes_weights - bytes_h
    Tc = int(max(1, min(16, T, budget // per_tc)))
    n_t = pl.cdiv(T, Tc)
    Tp = n_t * Tc

    # cap the unroll factor when the live hidden tile is large (vreg pressure)
    unroll = Tc if Bc * Hp <= 8 * 1024 else min(Tc, 4)

    # ---- gate-blocked, zero-padded weights / biases --------------------------
    def pad_gates_T(w, in_p):
        # w: (3H, in_dim) -> (in_p, 3*Hp) transposed, one Hp-wide block per gate
        in_dim = w.shape[1]
        blocks = []
        for g in range(3):
            wg = w[g * H:(g + 1) * H, :]                           # (H, in_dim)
            blk = jnp.zeros((in_p, Hp), f32).at[:in_dim, :H].set(wg.T)
            blocks.append(blk)
        return jnp.concatenate(blocks, axis=1)                     # (in_p, 3Hp)

    def pad_gate_bias(b):
        out = jnp.zeros((1, 3 * Hp), f32)
        for g in range(3):
            out = out.at[0, g * Hp:g * Hp + H].set(b[g * H:(g + 1) * H])
        return out

    wih_tp = pad_gates_T(w_ih.astype(f32), Ip)                     # (Ip, 3Hp)
    whh_tp = pad_gates_T(w_hh.astype(f32), Hp)                     # (Hp, 3Hp)

    # fold b_ih (all gates) + b_hh (r,z gates) into the chunk projection;
    # b_hh[n] must stay inside the recurrence: n = tanh(gi_n + r*(gh_n + b_hn))
    bhh_rz = jnp.concatenate([b_hh.astype(f32)[:2 * H], jnp.zeros((H,), f32)])
    bias_proj = pad_gate_bias(b_ih.astype(f32)) + pad_gate_bias(bhh_rz)
    bhn_pad = jnp.zeros((1, Hp), f32).at[0, :H].set(b_hh.astype(f32)[2 * H:])

    # ---- single zero-pad of x to its final (Tp, Bp, Ip) layout ---------------
    x_pad = jnp.zeros((Tp, Bp, Ip), f32).at[:T, :B, :I].set(x.astype(f32))

    kernel = functools.partial(_gru_fused_kernel, tc=Tc, hp=Hp, ip=Ip,
                               seq_len=T, unroll=unroll)

    def const_spec(shape, single_buffer):
        idx = lambda b, t, _s=shape: (0,) * len(_s)
        if single_buffer:
            return pl.BlockSpec(shape, idx, pipeline_mode=pl.Buffered(1))
        return pl.BlockSpec(shape, idx)

    def run(single_buffer):
        return pl.pallas_call(
            kernel,
            out_shape=jax.ShapeDtypeStruct((Bp, Hp), f32),
            grid_spec=pltpu.PrefetchScalarGridSpec(
                num_scalar_prefetch=0,
                grid=(n_b, n_t),                       # (parallel batch, serial time)
                in_specs=[
                    pl.BlockSpec((Tc, Bc, Ip), lambda b, t: (t, b, 0)),   # x chunk
                    const_spec((Ip, 3 * Hp), single_buffer),              # W_ih^T
                    const_spec((1, 3 * Hp), single_buffer),               # folded bias
                    const_spec((Hp, 3 * Hp), single_buffer),              # W_hh^T
                    const_spec((1, Hp), single_buffer),                   # b_hn
                ],
                out_specs=pl.BlockSpec((Bc, Hp), lambda b, t: (b, 0)),
                scratch_shapes=[
                    pltpu.VMEM((Tc, Bc, 3 * Hp), f32),    # gi for the chunk
                    pltpu.VMEM((Bc, Hp), f32),            # hidden state h
                ],
            ),
            compiler_params=pltpu.CompilerParams(
                dimension_semantics=("parallel", "arbitrary"),
                vmem_limit_bytes=vmem_limit),
        )(x_pad, wih_tp, bias_proj, whh_tp, bhn_pad)

    try:
        h_pad = run(True)                # single-buffered constant weights
    except Exception:
        h_pad = run(False)               # fallback: default double-buffering

    # trivial FC head on the lane-dense hidden state (done in XLA, per review)
    h_final = h_pad[:B, :H]
    y = h_final @ w_fc.astype(f32).T + b_fc.astype(f32)
    return y.reshape(-1)


# ---------------------------------------------------------------------------
# Pure-JAX reference of MyGRU.forward (PyTorch GRU semantics, h0 = 0)
# ---------------------------------------------------------------------------
def _reference_forward(x, params):
    w_ih, w_hh, b_ih, b_hh, w_fc, b_fc = params
    H = w_hh.shape[1]
    B = x.shape[1]

    def step(h, x_t):
        gi = x_t @ w_ih.T + b_ih
        gh = h @ w_hh.T + b_hh
        r = jax.nn.sigmoid(gi[:, :H] + gh[:, :H])
        z = jax.nn.sigmoid(gi[:, H:2 * H] + gh[:, H:2 * H])
        n = jnp.tanh(gi[:, 2 * H:] + r * gh[:, 2 * H:])
        h_new = (1.0 - z) * n + z * h
        return h_new, None

    h_final, _ = lax.scan(step, jnp.zeros((B, H), jnp.float32), x)
    y = h_final @ w_fc.T + b_fc
    return y.reshape(-1)


def make_params(key, input_size, hidden_size):
    """Deterministic init matching PyTorch GRU/Linear parameter shapes."""
    H, I = hidden_size, input_size
    k = 1.0 / np.sqrt(H)
    keys = jax.random.split(key, 6)
    w_ih = jax.random.uniform(keys[0], (3 * H, I), jnp.float32, -k, k)
    w_hh = jax.random.uniform(keys[1], (3 * H, H), jnp.float32, -k, k)
    b_ih = jax.random.uniform(keys[2], (3 * H,), jnp.float32, -k, k)
    b_hh = jax.random.uniform(keys[3], (3 * H,), jnp.float32, -k, k)
    w_fc = jax.random.uniform(keys[4], (1, H), jnp.float32, -k, k)
    b_fc = jax.random.uniform(keys[5], (1,), jnp.float32, -k, k)
    return (w_ih, w_hh, b_ih, b_hh, w_fc, b_fc)


if __name__ == "__main__":
    T, B, I, H = 8, 4, 16, 32   # seq=8, batch=4, input_size=16, hidden=32

    key = jax.random.PRNGKey(0)
    k_x, k_p = jax.random.split(key)
    x = jax.random.normal(k_x, (T, B, I), jnp.float32)
    params = make_params(k_p, I, H)

    y = my_gru_forward(x, params)
    y = jax.block_until_ready(y)

    y_ref = _reference_forward(x, params)
    assert y.shape == (B,)
    np.testing.assert_allclose(np.asarray(y), np.asarray(y_ref),
                               rtol=2e-5, atol=2e-5)
    print("KERNEL_OK")
</pallas_src>

<mosaic_0001>
module attributes {stable_mosaic.version = 11 : i64} {
  func.func @_gru_fused_kernel(%arg0: i32, %arg1: i32, %arg2: memref<8x8x128xf32, #tpu.memory_space<vmem>>, %arg3: memref<128x384xf32, #tpu.memory_space<vmem>>, %arg4: memref<1x384xf32, #tpu.memory_space<vmem>>, %arg5: memref<128x384xf32, #tpu.memory_space<vmem>>, %arg6: memref<1x128xf32, #tpu.memory_space<vmem>>, %arg7: memref<8x128xf32, #tpu.memory_space<vmem>>, %arg8: memref<8x8x384xf32, #tpu.memory_space<vmem>>, %arg9: memref<8x128xf32, #tpu.memory_space<vmem>>) attributes {dimension_semantics = [#tpu.dimension_semantics<parallel>, #tpu.dimension_semantics<arbitrary>], iteration_bounds = array<i64: 1, 1>, scalar_prefetch = 0 : i64, scratch_operands = 2 : i64, tpu.core_type = #tpu.core_type<tc>, window_params = [{transform_indices = @transform_0, window_bounds = array<i64: 8, 8, 128>}, {pipeline_mode = #tpu.pipeline_mode<synchronous>, transform_indices = @transform_1, window_bounds = array<i64: 128, 384>}, {pipeline_mode = #tpu.pipeline_mode<synchronous>, transform_indices = @transform_2, window_bounds = array<i64: 1, 384>}, {pipeline_mode = #tpu.pipeline_mode<synchronous>, transform_indices = @transform_3, window_bounds = array<i64: 128, 384>}, {pipeline_mode = #tpu.pipeline_mode<synchronous>, transform_indices = @transform_4, window_bounds = array<i64: 1, 128>}, {transform_indices = @transform_5, window_bounds = array<i64: 8, 128>}]} {
    %c0_i32 = arith.constant 0 : i32
    %0 = arith.cmpi eq, %arg1, %c0_i32 : i32
    %1 = arith.extui %0 : i1 to i32
    %c0_i32_0 = arith.constant 0 : i32
    %2 = arith.cmpi ne, %1, %c0_i32_0 : i32
    scf.if %2 {
      %cst_77 = arith.constant 0.000000e+00 : f32
      %271 = vector.broadcast %cst_77 : f32 to vector<8x128xf32>
      %c0_78 = arith.constant 0 : index
      %c0_79 = arith.constant 0 : index
      %272 = vector.load %arg9[%c0_78, %c0_79] : memref<8x128xf32, #tpu.memory_space<vmem>>, vector<8x128xf32>
      tpu.vector_store %arg9[%c0_78, %c0_79], %271 {strides = array<i32>} : memref<8x128xf32, #tpu.memory_space<vmem>>, vector<8x128xf32>,
    } else {
    }
    %c0 = arith.constant 0 : index
    %c0_1 = arith.constant 0 : index
    %c0_2 = arith.constant 0 : index
    %3 = vector.load %arg2[%c0, %c0_1, %c0_2] : memref<8x8x128xf32, #tpu.memory_space<vmem>>, vector<8x8x128xf32>
    %4 = vector.shape_cast %3 : vector<8x8x128xf32> to vector<64x128xf32>
    %c0_3 = arith.constant 0 : index
    %c0_4 = arith.constant 0 : index
    %5 = vector.load %arg3[%c0_3, %c0_4] : memref<128x384xf32, #tpu.memory_space<vmem>>, vector<128x384xf32>
    %cst = arith.constant dense<0.000000e+00> : vector<64x384xf32>
    %6 = tpu.matmul %4, %5, %cst {dimension_numbers = #tpu.dot_dimension_numbers<[1], [0], [0], [1], [0, 0, 1, 1], [], []>} : vector<64x128xf32>, vector<128x384xf32>, vector<64x384xf32> -> vector<64x384xf32>
    %c0_5 = arith.constant 0 : index
    %c0_6 = arith.constant 0 : index
    %7 = vector.load %arg4[%c0_5, %c0_6] : memref<1x384xf32, #tpu.memory_space<vmem>>, vector<1x384xf32>
    %8 = vector.broadcast %7 : vector<1x384xf32> to vector<64x384xf32>
    %9 = arith.addf %6, %8 : vector<64x384xf32>
    %10 = vector.shape_cast %9 : vector<64x384xf32> to vector<8x8x384xf32>
    %c0_7 = arith.constant 0 : index
    %c0_8 = arith.constant 0 : index
    %c0_9 = arith.constant 0 : index
    %11 = vector.load %arg8[%c0_7, %c0_8, %c0_9] : memref<8x8x384xf32, #tpu.memory_space<vmem>>, vector<8x8x384xf32>
    tpu.vector_store %arg8[%c0_7, %c0_8, %c0_9], %10 {strides = array<i32>} : memref<8x8x384xf32, #tpu.memory_space<vmem>>, vector<8x8x384xf32>,
    %c0_10 = arith.constant 0 : index
    %c0_11 = arith.constant 0 : index
    %12 = vector.load %arg5[%c0_10, %c0_11] : memref<128x384xf32, #tpu.memory_space<vmem>>, vector<128x384xf32>
    %13 = vector.extract_strided_slice %12 {offsets = [0, 0], sizes = [128, 256], strides = [1, 1]} : vector<128x384xf32> to vector<128x256xf32>
    %14 = vector.extract_strided_slice %12 {offsets = [0, 256], sizes = [128, 128], strides = [1, 1]} : vector<128x384xf32> to vector<128x128xf32>
    %c0_12 = arith.constant 0 : index
    %c0_13 = arith.constant 0 : index
    %15 = vector.load %arg6[%c0_12, %c0_13] : memref<1x128xf32, #tpu.memory_space<vmem>>, vector<1x128xf32>
    %16 = vector.shape_cast %15 : vector<1x128xf32> to vector<1x128xf32>
    %17 = vector.broadcast %16 : vector<1x128xf32> to vector<8x128xf32>
    %c0_14 = arith.constant 0 : index
    %c0_15 = arith.constant 0 : index
    %18 = vector.load %arg9[%c0_14, %c0_15] : memref<8x128xf32, #tpu.memory_space<vmem>>, vector<8x128xf32>
    %c0_i32_16 = arith.constant 0 : i32
    %19 = arith.index_cast %c0_i32_16 : i32 to index
    %c0_17 = arith.constant 0 : index
    %c0_18 = arith.constant 0 : index
    %20 = vector.load %arg8[%19, %c0_17, %c0_18] : memref<8x8x384xf32, #tpu.memory_space<vmem>>, vector<1x8x384xf32>
    %21 = vector.shape_cast %20 : vector<1x8x384xf32> to vector<8x384xf32>
    %cst_19 = arith.constant dense<0.000000e+00> : vector<8x256xf32>
    %22 = tpu.matmul %18, %13, %cst_19 {dimension_numbers = #tpu.dot_dimension_numbers<[1], [0], [0], [1], [0, 0, 1, 1], [], []>} : vector<8x128xf32>, vector<128x256xf32>, vector<8x256xf32> -> vector<8x256xf32>
    %cst_20 = arith.constant dense<0.000000e+00> : vector<8x128xf32>
    %23 = tpu.matmul %18, %14, %cst_20 {dimension_numbers = #tpu.dot_dimension_numbers<[1], [0], [0], [1], [0, 0, 1, 1], [], []>} : vector<8x128xf32>, vector<128x128xf32>, vector<8x128xf32> -> vector<8x128xf32>
    %24 = vector.extract_strided_slice %21 {offsets = [0, 0], sizes = [8, 128], strides = [1, 1]} : vector<8x384xf32> to vector<8x128xf32>
    %25 = vector.extract_strided_slice %22 {offsets = [0, 0], sizes = [8, 128], strides = [1, 1]} : vector<8x256xf32> to vector<8x128xf32>
    %26 = arith.addf %24, %25 : vector<8x128xf32>
    %27 = arith.negf %26 : vector<8x128xf32>
    %28 = math.exp %27 : vector<8x128xf32>
    %cst_21 = arith.constant 1.000000e+00 : f32
    %29 = vector.broadcast %cst_21 : f32 to vector<8x128xf32>
    %30 = arith.addf %29, %28 : vector<8x128xf32>
    %31 = arith.divf %29, %30 : vector<8x128xf32>
    %32 = vector.extract_strided_slice %21 {offsets = [0, 128], sizes = [8, 128], strides = [1, 1]} : vector<8x384xf32> to vector<8x128xf32>
    %33 = vector.extract_strided_slice %22 {offsets = [0, 128], sizes = [8, 128], strides = [1, 1]} : vector<8x256xf32> to vector<8x128xf32>
    %34 = arith.addf %32, %33 : vector<8x128xf32>
    %35 = arith.negf %34 : vector<8x128xf32>
    %36 = math.exp %35 : vector<8x128xf32>
    %cst_22 = arith.constant 1.000000e+00 : f32
    %37 = vector.broadcast %cst_22 : f32 to vector<8x128xf32>
    %38 = arith.addf %37, %36 : vector<8x128xf32>
    %39 = arith.divf %37, %38 : vector<8x128xf32>
    %40 = vector.extract_strided_slice %21 {offsets = [0, 256], sizes = [8, 128], strides = [1, 1]} : vector<8x384xf32> to vector<8x128xf32>
    %41 = arith.addf %23, %17 : vector<8x128xf32>
    %42 = arith.mulf %31, %41 : vector<8x128xf32>
    %43 = arith.addf %40, %42 : vector<8x128xf32>
    %44 = math.tanh %43 : vector<8x128xf32>
    %cst_23 = arith.constant 1.000000e+00 : f32
    %45 = vector.broadcast %cst_23 : f32 to vector<8x128xf32>
    %46 = arith.subf %45, %39 : vector<8x128xf32>
    %47 = arith.mulf %46, %44 : vector<8x128xf32>
    %48 = arith.mulf %39, %18 : vector<8x128xf32>
    %49 = arith.addf %47, %48 : vector<8x128xf32>
    %c1_i32 = arith.constant 1 : i32
    %50 = arith.index_cast %c1_i32 : i32 to index
    %c0_24 = arith.constant 0 : index
    %c0_25 = arith.constant 0 : index
    %51 = vector.load %arg8[%50, %c0_24, %c0_25] : memref<8x8x384xf32, #tpu.memory_space<vmem>>, vector<1x8x384xf32>
    %52 = vector.shape_cast %51 : vector<1x8x384xf32> to vector<8x384xf32>
    %cst_26 = arith.constant dense<0.000000e+00> : vector<8x256xf32>
    %53 = tpu.matmul %49, %13, %cst_26 {dimension_numbers = #tpu.dot_dimension_numbers<[1], [0], [0], [1], [0, 0, 1, 1], [], []>} : vector<8x128xf32>, vector<128x256xf32>, vector<8x256xf32> -> vector<8x256xf32>
    %cst_27 = arith.constant dense<0.000000e+00> : vector<8x128xf32>
    %54 = tpu.matmul %49, %14, %cst_27 {dimension_numbers = #tpu.dot_dimension_numbers<[1], [0], [0], [1], [0, 0, 1, 1], [], []>} : vector<8x128xf32>, vector<128x128xf32>, vector<8x128xf32> -> vector<8x128xf32>
    %55 = vector.extract_strided_slice %52 {offsets = [0, 0], sizes = [8, 128], strides = [1, 1]} : vector<8x384xf32> to vector<8x128xf32>
    %56 = vector.extract_strided_slice %53 {offsets = [0, 0], sizes = [8, 128], strides = [1, 1]} : vector<8x256xf32> to vector<8x128xf32>
    %57 = arith.addf %55, %56 : vector<8x128xf32>
    %58 = arith.negf %57 : vector<8x128xf32>
    %59 = math.exp %58 : vector<8x128xf32>
    %cst_28 = arith.constant 1.000000e+00 : f32
    %60 = vector.broadcast %cst_28 : f32 to vector<8x128xf32>
    %61 = arith.addf %60, %59 : vector<8x128xf32>
    %62 = arith.divf %60, %61 : vector<8x128xf32>
    %63 = vector.extract_strided_slice %52 {offsets = [0, 128], sizes = [8, 128], strides = [1, 1]} : vector<8x384xf32> to vector<8x128xf32>
    %64 = vector.extract_strided_slice %53 {offsets = [0, 128], sizes = [8, 128], strides = [1, 1]} : vector<8x256xf32> to vector<8x128xf32>
    %65 = arith.addf %63, %64 : vector<8x128xf32>
    %66 = arith.negf %65 : vector<8x128xf32>
    %67 = math.exp %66 : vector<8x128xf32>
    %cst_29 = arith.constant 1.000000e+00 : f32
    %68 = vector.broadcast %cst_29 : f32 to vector<8x128xf32>
    %69 = arith.addf %68, %67 : vector<8x128xf32>
    %70 = arith.divf %68, %69 : vector<8x128xf32>
    %71 = vector.extract_strided_slice %52 {offsets = [0, 256], sizes = [8, 128], strides = [1, 1]} : vector<8x384xf32> to vector<8x128xf32>
    %72 = arith.addf %54, %17 : vector<8x128xf32>
    %73 = arith.mulf %62, %72 : vector<8x128xf32>
    %74 = arith.addf %71, %73 : vector<8x128xf32>
    %75 = math.tanh %74 : vector<8x128xf32>
    %cst_30 = arith.constant 1.000000e+00 : f32
    %76 = vector.broadcast %cst_30 : f32 to vector<8x128xf32>
    %77 = arith.subf %76, %70 : vector<8x128xf32>
    %78 = arith.mulf %77, %75 : vector<8x128xf32>
    %79 = arith.mulf %70, %49 : vector<8x128xf32>
    %80 = arith.addf %78, %79 : vector<8x128xf32>
    %c2_i32 = arith.constant 2 : i32
    %81 = arith.index_cast %c2_i32 : i32 to index
    %c0_31 = arith.constant 0 : index
    %c0_32 = arith.constant 0 : index
    %82 = vector.load %arg8[%81, %c0_31, %c0_32] : memref<8x8x384xf32, #tpu.memory_space<vmem>>, vector<1x8x384xf32>
    %83 = vector.shape_cast %82 : vector<1x8x384xf32> to vector<8x384xf32>
    %cst_33 = arith.constant dense<0.000000e+00> : vector<8x256xf32>
    %84 = tpu.matmul %80, %13, %cst_33 {dimension_numbers = #tpu.dot_dimension_numbers<[1], [0], [0], [1], [0, 0, 1, 1], [], []>} : vector<8x128xf32>, vector<128x256xf32>, vector<8x256xf32> -> vector<8x256xf32>
    %cst_34 = arith.constant dense<0.000000e+00> : vector<8x128xf32>
    %85 = tpu.matmul %80, %14, %cst_34 {dimension_numbers = #tpu.dot_dimension_numbers<[1], [0], [0], [1], [0, 0, 1, 1], [], []>} : vector<8x128xf32>, vector<128x128xf32>, vector<8x128xf32> -> vector<8x128xf32>
    %86 = vector.extract_strided_slice %83 {offsets = [0, 0], sizes = [8, 128], strides = [1, 1]} : vector<8x384xf32> to vector<8x128xf32>
    %87 = vector.extract_strided_slice %84 {offsets = [0, 0], sizes = [8, 128], strides = [1, 1]} : vector<8x256xf32> to vector<8x128xf32>
    %88 = arith.addf %86, %87 : vector<8x128xf32>
    %89 = arith.negf %88 : vector<8x128xf32>
    %90 = math.exp %89 : vector<8x128xf32>
    %cst_35 = arith.constant 1.000000e+00 : f32
    %91 = vector.broadcast %cst_35 : f32 to vector<8x128xf32>
    %92 = arith.addf %91, %90 : vector<8x128xf32>
    %93 = arith.divf %91, %92 : vector<8x128xf32>
    %94 = vector.extract_strided_slice %83 {offsets = [0, 128], sizes = [8, 128], strides = [1, 1]} : vector<8x384xf32> to vector<8x128xf32>
    %95 = vector.extract_strided_slice %84 {offsets = [0, 128], sizes = [8, 128], strides = [1, 1]} : vector<8x256xf32> to vector<8x128xf32>
    %96 = arith.addf %94, %95 : vector<8x128xf32>
    %97 = arith.negf %96 : vector<8x128xf32>
    %98 = math.exp %97 : vector<8x128xf32>
    %cst_36 = arith.constant 1.000000e+00 : f32
    %99 = vector.broadcast %cst_36 : f32 to vector<8x128xf32>
    %100 = arith.addf %99, %98 : vector<8x128xf32>
    %101 = arith.divf %99, %100 : vector<8x128xf32>
    %102 = vector.extract_strided_slice %83 {offsets = [0, 256], sizes = [8, 128], strides = [1, 1]} : vector<8x384xf32> to vector<8x128xf32>
    %103 = arith.addf %85, %17 : vector<8x128xf32>
    %104 = arith.mulf %93, %103 : vector<8x128xf32>
    %105 = arith.addf %102, %104 : vector<8x128xf32>
    %106 = math.tanh %105 : vector<8x128xf32>
    %cst_37 = arith.constant 1.000000e+00 : f32
    %107 = vector.broadcast %cst_37 : f32 to vector<8x128xf32>
    %108 = arith.subf %107, %101 : vector<8x128xf32>
    %109 = arith.mulf %108, %106 : vector<8x128xf32>
    %110 = arith.mulf %101, %80 : vector<8x128xf32>
    %111 = arith.addf %109, %110 : vector<8x128xf32>
    %c3_i32 = arith.constant 3 : i32
    %112 = arith.index_cast %c3_i32 : i32 to index
    %c0_38 = arith.constant 0 : index
    %c0_39 = arith.constant 0 : index
    %113 = vector.load %arg8[%112, %c0_38, %c0_39] : memref<8x8x384xf32, #tpu.memory_space<vmem>>, vector<1x8x384xf32>
    %114 = vector.shape_cast %113 : vector<1x8x384xf32> to vector<8x384xf32>
    %cst_40 = arith.constant dense<0.000000e+00> : vector<8x256xf32>
    %115 = tpu.matmul %111, %13, %cst_40 {dimension_numbers = #tpu.dot_dimension_numbers<[1], [0], [0], [1], [0, 0, 1, 1], [], []>} : vector<8x128xf32>, vector<128x256xf32>, vector<8x256xf32> -> vector<8x256xf32>
    %cst_41 = arith.constant dense<0.000000e+00> : vector<8x128xf32>
    %116 = tpu.matmul %111, %14, %cst_41 {dimension_numbers = #tpu.dot_dimension_numbers<[1], [0], [0], [1], [0, 0, 1, 1], [], []>} : vector<8x128xf32>, vector<128x128xf32>, vector<8x128xf32> -> vector<8x128xf32>
    %117 = vector.extract_strided_slice %114 {offsets = [0, 0], sizes = [8, 128], strides = [1, 1]} : vector<8x384xf32> to vector<8x128xf32>
    %118 = vector.extract_strided_slice %115 {offsets = [0, 0], sizes = [8, 128], strides = [1, 1]} : vector<8x256xf32> to vector<8x128xf32>
    %119 = arith.addf %117, %118 : vector<8x128xf32>
    %120 = arith.negf %119 : vector<8x128xf32>
    %121 = math.exp %120 : vector<8x128xf32>
    %cst_42 = arith.constant 1.000000e+00 : f32
    %122 = vector.broadcast %cst_42 : f32 to vector<8x128xf32>
    %123 = arith.addf %122, %121 : vector<8x128xf32>
    %124 = arith.divf %122, %123 : vector<8x128xf32>
    %125 = vector.extract_strided_slice %114 {offsets = [0, 128], sizes = [8, 128], strides = [1, 1]} : vector<8x384xf32> to vector<8x128xf32>
    %126 = vector.extract_strided_slice %115 {offsets = [0, 128], sizes = [8, 128], strides = [1, 1]} : vector<8x256xf32> to vector<8x128xf32>
    %127 = arith.addf %125, %126 : vector<8x128xf32>
    %128 = arith.negf %127 : vector<8x128xf32>
    %129 = math.exp %128 : vector<8x128xf32>
    %cst_43 = arith.constant 1.000000e+00 : f32
    %130 = vector.broadcast %cst_43 : f32 to vector<8x128xf32>
    %131 = arith.addf %130, %129 : vector<8x128xf32>
    %132 = arith.divf %130, %131 : vector<8x128xf32>
    %133 = vector.extract_strided_slice %114 {offsets = [0, 256], sizes = [8, 128], strides = [1, 1]} : vector<8x384xf32> to vector<8x128xf32>
    %134 = arith.addf %116, %17 : vector<8x128xf32>
    %135 = arith.mulf %124, %134 : vector<8x128xf32>
    %136 = arith.addf %133, %135 : vector<8x128xf32>
    %137 = math.tanh %136 : vector<8x128xf32>
    %cst_44 = arith.constant 1.000000e+00 : f32
    %138 = vector.broadcast %cst_44 : f32 to vector<8x128xf32>
    %139 = arith.subf %138, %132 : vector<8x128xf32>
    %140 = arith.mulf %139, %137 : vector<8x128xf32>
    %141 = arith.mulf %132, %111 : vector<8x128xf32>
    %142 = arith.addf %140, %141 : vector<8x128xf32>
    %c4_i32 = arith.constant 4 : i32
    %143 = arith.index_cast %c4_i32 : i32 to index
    %c0_45 = arith.constant 0 : index
    %c0_46 = arith.constant 0 : index
    %144 = vector.load %arg8[%143, %c0_45, %c0_46] : memref<8x8x384xf32, #tpu.memory_space<vmem>>, vector<1x8x384xf32>
    %145 = vector.shape_cast %144 : vector<1x8x384xf32> to vector<8x384xf32>
    %cst_47 = arith.constant dense<0.000000e+00> : vector<8x256xf32>
    %146 = tpu.matmul %142, %13, %cst_47 {dimension_numbers = #tpu.dot_dimension_numbers<[1], [0], [0], [1], [0, 0, 1, 1], [], []>} : vector<8x128xf32>, vector<128x256xf32>, vector<8x256xf32> -> vector<8x256xf32>
    %cst_48 = arith.constant dense<0.000000e+00> : vector<8x128xf32>
    %147 = tpu.matmul %142, %14, %cst_48 {dimension_numbers = #tpu.dot_dimension_numbers<[1], [0], [0], [1], [0, 0, 1, 1], [], []>} : vector<8x128xf32>, vector<128x128xf32>, vector<8x128xf32> -> vector<8x128xf32>
    %148 = vector.extract_strided_slice %145 {offsets = [0, 0], sizes = [8, 128], strides = [1, 1]} : vector<8x384xf32> to vector<8x128xf32>
    %149 = vector.extract_strided_slice %146 {offsets = [0, 0], sizes = [8, 128], strides = [1, 1]} : vector<8x256xf32> to vector<8x128xf32>
    %150 = arith.addf %148, %149 : vector<8x128xf32>
    %151 = arith.negf %150 : vector<8x128xf32>
    %152 = math.exp %151 : vector<8x128xf32>
    %cst_49 = arith.constant 1.000000e+00 : f32
    %153 = vector.broadcast %cst_49 : f32 to vector<8x128xf32>
    %154 = arith.addf %153, %152 : vector<8x128xf32>
    %155 = arith.divf %153, %154 : vector<8x128xf32>
    %156 = vector.extract_strided_slice %145 {offsets = [0, 128], sizes = [8, 128], strides = [1, 1]} : vector<8x384xf32> to vector<8x128xf32>
    %157 = vector.extract_strided_slice %146 {offsets = [0, 128], sizes = [8, 128], strides = [1, 1]} : vector<8x256xf32> to vector<8x128xf32>
    %158 = arith.addf %156, %157 : vector<8x128xf32>
    %159 = arith.negf %158 : vector<8x128xf32>
    %160 = math.exp %159 : vector<8x128xf32>
    %cst_50 = arith.constant 1.000000e+00 : f32
    %161 = vector.broadcast %cst_50 : f32 to vector<8x128xf32>
    %162 = arith.addf %161, %160 : vector<8x128xf32>
    %163 = arith.divf %161, %162 : vector<8x128xf32>
    %164 = vector.extract_strided_slice %145 {offsets = [0, 256], sizes = [8, 128], strides = [1, 1]} : vector<8x384xf32> to vector<8x128xf32>
    %165 = arith.addf %147, %17 : vector<8x128xf32>
    %166 = arith.mulf %155, %165 : vector<8x128xf32>
    %167 = arith.addf %164, %166 : vector<8x128xf32>
    %168 = math.tanh %167 : vector<8x128xf32>
    %cst_51 = arith.constant 1.000000e+00 : f32
    %169 = vector.broadcast %cst_51 : f32 to vector<8x128xf32>
    %170 = arith.subf %169, %163 : vector<8x128xf32>
    %171 = arith.mulf %170, %168 : vector<8x128xf32>
    %172 = arith.mulf %163, %142 : vector<8x128xf32>
    %173 = arith.addf %171, %172 : vector<8x128xf32>
    %c5_i32 = arith.constant 5 : i32
    %174 = arith.index_cast %c5_i32 : i32 to index
    %c0_52 = arith.constant 0 : index
    %c0_53 = arith.constant 0 : index
    %175 = vector.load %arg8[%174, %c0_52, %c0_53] : memref<8x8x384xf32, #tpu.memory_space<vmem>>, vector<1x8x384xf32>
    %176 = vector.shape_cast %175 : vector<1x8x384xf32> to vector<8x384xf32>
    %cst_54 = arith.constant dense<0.000000e+00> : vector<8x256xf32>
    %177 = tpu.matmul %173, %13, %cst_54 {dimension_numbers = #tpu.dot_dimension_numbers<[1], [0], [0], [1], [0, 0, 1, 1], [], []>} : vector<8x128xf32>, vector<128x256xf32>, vector<8x256xf32> -> vector<8x256xf32>
    %cst_55 = arith.constant dense<0.000000e+00> : vector<8x128xf32>
    %178 = tpu.matmul %173, %14, %cst_55 {dimension_numbers = #tpu.dot_dimension_numbers<[1], [0], [0], [1], [0, 0, 1, 1], [], []>} : vector<8x128xf32>, vector<128x128xf32>, vector<8x128xf32> -> vector<8x128xf32>
    %179 = vector.extract_strided_slice %176 {offsets = [0, 0], sizes = [8, 128], strides = [1, 1]} : vector<8x384xf32> to vector<8x128xf32>
    %180 = vector.extract_strided_slice %177 {offsets = [0, 0], sizes = [8, 128], strides = [1, 1]} : vector<8x256xf32> to vector<8x128xf32>
    %181 = arith.addf %179, %180 : vector<8x128xf32>
    %182 = arith.negf %181 : vector<8x128xf32>
    %183 = math.exp %182 : vector<8x128xf32>
    %cst_56 = arith.constant 1.000000e+00 : f32
    %184 = vector.broadcast %cst_56 : f32 to vector<8x128xf32>
    %185 = arith.addf %184, %183 : vector<8x128xf32>
    %186 = arith.divf %184, %185 : vector<8x128xf32>
    %187 = vector.extract_strided_slice %176 {offsets = [0, 128], sizes = [8, 128], strides = [1, 1]} : vector<8x384xf32> to vector<8x128xf32>
    %188 = vector.extract_strided_slice %177 {offsets = [0, 128], sizes = [8, 128], strides = [1, 1]} : vector<8x256xf32> to vector<8x128xf32>
    %189 = arith.addf %187, %188 : vector<8x128xf32>
    %190 = arith.negf %189 : vector<8x128xf32>
    %191 = math.exp %190 : vector<8x128xf32>
    %cst_57 = arith.constant 1.000000e+00 : f32
    %192 = vector.broadcast %cst_57 : f32 to vector<8x128xf32>
    %193 = arith.addf %192, %191 : vector<8x128xf32>
    %194 = arith.divf %192, %193 : vector<8x128xf32>
    %195 = vector.extract_strided_slice %176 {offsets = [0, 256], sizes = [8, 128], strides = [1, 1]} : vector<8x384xf32> to vector<8x128xf32>
    %196 = arith.addf %178, %17 : vector<8x128xf32>
    %197 = arith.mulf %186, %196 : vector<8x128xf32>
    %198 = arith.addf %195, %197 : vector<8x128xf32>
    %199 = math.tanh %198 : vector<8x128xf32>
    %cst_58 = arith.constant 1.000000e+00 : f32
    %200 = vector.broadcast %cst_58 : f32 to vector<8x128xf32>
    %201 = arith.subf %200, %194 : vector<8x128xf32>
    %202 = arith.mulf %201, %199 : vector<8x128xf32>
    %203 = arith.mulf %194, %173 : vector<8x128xf32>
    %204 = arith.addf %202, %203 : vector<8x128xf32>
    %c6_i32 = arith.constant 6 : i32
    %205 = arith.index_cast %c6_i32 : i32 to index
    %c0_59 = arith.constant 0 : index
    %c0_60 = arith.constant 0 : index
    %206 = vector.load %arg8[%205, %c0_59, %c0_60] : memref<8x8x384xf32, #tpu.memory_space<vmem>>, vector<1x8x384xf32>
    %207 = vector.shape_cast %206 : vector<1x8x384xf32> to vector<8x384xf32>
    %cst_61 = arith.constant dense<0.000000e+00> : vector<8x256xf32>
    %208 = tpu.matmul %204, %13, %cst_61 {dimension_numbers = #tpu.dot_dimension_numbers<[1], [0], [0], [1], [0, 0, 1, 1], [], []>} : vector<8x128xf32>, vector<128x256xf32>, vector<8x256xf32> -> vector<8x256xf32>
    %cst_62 = arith.constant dense<0.000000e+00> : vector<8x128xf32>
    %209 = tpu.matmul %204, %14, %cst_62 {dimension_numbers = #tpu.dot_dimension_numbers<[1], [0], [0], [1], [0, 0, 1, 1], [], []>} : vector<8x128xf32>, vector<128x128xf32>, vector<8x128xf32> -> vector<8x128xf32>
    %210 = vector.extract_strided_slice %207 {offsets = [0, 0], sizes = [8, 128], strides = [1, 1]} : vector<8x384xf32> to vector<8x128xf32>
    %211 = vector.extract_strided_slice %208 {offsets = [0, 0], sizes = [8, 128], strides = [1, 1]} : vector<8x256xf32> to vector<8x128xf32>
    %212 = arith.addf %210, %211 : vector<8x128xf32>
    %213 = arith.negf %212 : vector<8x128xf32>
    %214 = math.exp %213 : vector<8x128xf32>
    %cst_63 = arith.constant 1.000000e+00 : f32
    %215 = vector.broadcast %cst_63 : f32 to vector<8x128xf32>
    %216 = arith.addf %215, %214 : vector<8x128xf32>
    %217 = arith.divf %215, %216 : vector<8x128xf32>
    %218 = vector.extract_strided_slice %207 {offsets = [0, 128], sizes = [8, 128], strides = [1, 1]} : vector<8x384xf32> to vector<8x128xf32>
    %219 = vector.extract_strided_slice %208 {offsets = [0, 128], sizes = [8, 128], strides = [1, 1]} : vector<8x256xf32> to vector<8x128xf32>
    %220 = arith.addf %218, %219 : vector<8x128xf32>
    %221 = arith.negf %220 : vector<8x128xf32>
    %222 = math.exp %221 : vector<8x128xf32>
    %cst_64 = arith.constant 1.000000e+00 : f32
    %223 = vector.broadcast %cst_64 : f32 to vector<8x128xf32>
    %224 = arith.addf %223, %222 : vector<8x128xf32>
    %225 = arith.divf %223, %224 : vector<8x128xf32>
    %226 = vector.extract_strided_slice %207 {offsets = [0, 256], sizes = [8, 128], strides = [1, 1]} : vector<8x384xf32> to vector<8x128xf32>
    %227 = arith.addf %209, %17 : vector<8x128xf32>
    %228 = arith.mulf %217, %227 : vector<8x128xf32>
    %229 = arith.addf %226, %228 : vector<8x128xf32>
    %230 = math.tanh %229 : vector<8x128xf32>
    %cst_65 = arith.constant 1.000000e+00 : f32
    %231 = vector.broadcast %cst_65 : f32 to vector<8x128xf32>
    %232 = arith.subf %231, %225 : vector<8x128xf32>
    %233 = arith.mulf %232, %230 : vector<8x128xf32>
    %234 = arith.mulf %225, %204 : vector<8x128xf32>
    %235 = arith.addf %233, %234 : vector<8x128xf32>
    %c7_i32 = arith.constant 7 : i32
    %236 = arith.index_cast %c7_i32 : i32 to index
    %c0_66 = arith.constant 0 : index
    %c0_67 = arith.constant 0 : index
    %237 = vector.load %arg8[%236, %c0_66, %c0_67] : memref<8x8x384xf32, #tpu.memory_space<vmem>>, vector<1x8x384xf32>
    %238 = vector.shape_cast %237 : vector<1x8x384xf32> to vector<8x384xf32>
    %cst_68 = arith.constant dense<0.000000e+00> : vector<8x256xf32>
    %239 = tpu.matmul %235, %13, %cst_68 {dimension_numbers = #tpu.dot_dimension_numbers<[1], [0], [0], [1], [0, 0, 1, 1], [], []>} : vector<8x128xf32>, vector<128x256xf32>, vector<8x256xf32> -> vector<8x256xf32>
    %cst_69 = arith.constant dense<0.000000e+00> : vector<8x128xf32>
    %240 = tpu.matmul %235, %14, %cst_69 {dimension_numbers = #tpu.dot_dimension_numbers<[1], [0], [0], [1], [0, 0, 1, 1], [], []>} : vector<8x128xf32>, vector<128x128xf32>, vector<8x128xf32> -> vector<8x128xf32>
    %241 = vector.extract_strided_slice %238 {offsets = [0, 0], sizes = [8, 128], strides = [1, 1]} : vector<8x384xf32> to vector<8x128xf32>
    %242 = vector.extract_strided_slice %239 {offsets = [0, 0], sizes = [8, 128], strides = [1, 1]} : vector<8x256xf32> to vector<8x128xf32>
    %243 = arith.addf %241, %242 : vector<8x128xf32>
    %244 = arith.negf %243 : vector<8x128xf32>
    %245 = math.exp %244 : vector<8x128xf32>
    %cst_70 = arith.constant 1.000000e+00 : f32
    %246 = vector.broadcast %cst_70 : f32 to vector<8x128xf32>
    %247 = arith.addf %246, %245 : vector<8x128xf32>
    %248 = arith.divf %246, %247 : vector<8x128xf32>
    %249 = vector.extract_strided_slice %238 {offsets = [0, 128], sizes = [8, 128], strides = [1, 1]} : vector<8x384xf32> to vector<8x128xf32>
    %250 = vector.extract_strided_slice %239 {offsets = [0, 128], sizes = [8, 128], strides = [1, 1]} : vector<8x256xf32> to vector<8x128xf32>
    %251 = arith.addf %249, %250 : vector<8x128xf32>
    %252 = arith.negf %251 : vector<8x128xf32>
    %253 = math.exp %252 : vector<8x128xf32>
    %cst_71 = arith.constant 1.000000e+00 : f32
    %254 = vector.broadcast %cst_71 : f32 to vector<8x128xf32>
    %255 = arith.addf %254, %253 : vector<8x128xf32>
    %256 = arith.divf %254, %255 : vector<8x128xf32>
    %257 = vector.extract_strided_slice %238 {offsets = [0, 256], sizes = [8, 128], strides = [1, 1]} : vector<8x384xf32> to vector<8x128xf32>
    %258 = arith.addf %240, %17 : vector<8x128xf32>
    %259 = arith.mulf %248, %258 : vector<8x128xf32>
    %260 = arith.addf %257, %259 : vector<8x128xf32>
    %261 = math.tanh %260 : vector<8x128xf32>
    %cst_72 = arith.constant 1.000000e+00 : f32
    %262 = vector.broadcast %cst_72 : f32 to vector<8x128xf32>
    %263 = arith.subf %262, %256 : vector<8x128xf32>
    %264 = arith.mulf %263, %261 : vector<8x128xf32>
    %265 = arith.mulf %256, %235 : vector<8x128xf32>
    %266 = arith.addf %264, %265 : vector<8x128xf32>
    %c8_i32 = arith.constant 8 : i32
    %c0_73 = arith.constant 0 : index
    %c0_74 = arith.constant 0 : index
    %267 = vector.load %arg9[%c0_73, %c0_74] : memref<8x128xf32, #tpu.memory_space<vmem>>, vector<8x128xf32>
    tpu.vector_store %arg9[%c0_73, %c0_74], %266 {strides = array<i32>} : memref<8x128xf32, #tpu.memory_space<vmem>>, vector<8x128xf32>,
    %c0_i32_75 = arith.constant 0 : i32
    %268 = arith.cmpi eq, %arg1, %c0_i32_75 : i32
    %269 = arith.extui %268 : i1 to i32
    %c0_i32_76 = arith.constant 0 : i32
    %270 = arith.cmpi ne, %269, %c0_i32_76 : i32
    scf.if %270 {
      %c0_77 = arith.constant 0 : index
      %c0_78 = arith.constant 0 : index
      %271 = vector.load %arg7[%c0_77, %c0_78] : memref<8x128xf32, #tpu.memory_space<vmem>>, vector<8x128xf32>
      tpu.vector_store %arg7[%c0_77, %c0_78], %266 {strides = array<i32>} : memref<8x128xf32, #tpu.memory_space<vmem>>, vector<8x128xf32>,
    } else {
    }
    return
  }
  func.func @transform_0(%arg0: i32, %arg1: i32) -> (i32, i32, i32) {
    %c0_i32 = arith.constant 0 : i32
    %c0_i32_0 = arith.constant 0 : i32
    return %arg1, %arg0, %c0_i32 : i32, i32, i32
  }
  func.func @transform_1(%arg0: i32, %arg1: i32) -> (i32, i32) {
    %c0_i32 = arith.constant 0 : i32
    %c0_i32_0 = arith.constant 0 : i32
    %c0_i32_1 = arith.constant 0 : i32
    return %c0_i32, %c0_i32_0 : i32, i32
  }
  func.func @transform_2(%arg0: i32, %arg1: i32) -> (i32, i32) {
    %c0_i32 = arith.constant 0 : i32
    %c0_i32_0 = arith.constant 0 : i32
    %c0_i32_1 = arith.constant 0 : i32
    return %c0_i32, %c0_i32_0 : i32, i32
  }
  func.func @transform_3(%arg0: i32, %arg1: i32) -> (i32, i32) {
    %c0_i32 = arith.constant 0 : i32
    %c0_i32_0 = arith.constant 0 : i32
    %c0_i32_1 = arith.constant 0 : i32
    return %c0_i32, %c0_i32_0 : i32, i32
  }
  func.func @transform_4(%arg0: i32, %arg1: i32) -> (i32, i32) {
    %c0_i32 = arith.constant 0 : i32
    %c0_i32_0 = arith.constant 0 : i32
    %c0_i32_1 = arith.constant 0 : i32
    return %c0_i32, %c0_i32_0 : i32, i32
  }
  func.func @transform_5(%arg0: i32, %arg1: i32) -> (i32, i32) {
    %c0_i32 = arith.constant 0 : i32
    %c0_i32_0 = arith.constant 0 : i32
    return %arg0, %c0_i32 : i32, i32
  }
}

module attributes {stable_mosaic.version = 11 : i64} {
  func.func @_gru_fused_kernel(%arg0: i32, %arg1: i32, %arg2: memref<8x8x128xf32, #tpu.memory_space<vmem>>, %arg3: memref<128x384xf32, #tpu.memory_space<vmem>>, %arg4: memref<1x384xf32, #tpu.memory_space<vmem>>, %arg5: memref<128x384xf32, #tpu.memory_space<vmem>>, %arg6: memref<1x128xf32, #tpu.memory_space<vmem>>, %arg7: memref<8x128xf32, #tpu.memory_space<vmem>>, %arg8: memref<8x8x384xf32, #tpu.memory_space<vmem>>, %arg9: memref<8x128xf32, #tpu.memory_space<vmem>>) attributes {dimension_semantics = [#tpu.dimension_semantics<parallel>, #tpu.dimension_semantics<arbitrary>], iteration_bounds = array<i64: 1, 1>, scalar_prefetch = 0 : i64, scratch_operands = 2 : i64, tpu.core_type = #tpu.core_type<tc>, window_params = [{transform_indices = @transform_0, window_bounds = array<i64: 8, 8, 128>}, {pipeline_mode = #tpu.pipeline_mode<synchronous>, transform_indices = @transform_1, window_bounds = array<i64: 128, 384>}, {pipeline_mode = #tpu.pipeline_mode<synchronous>, transform_indices = @transform_2, window_bounds = array<i64: 1, 384>}, {pipeline_mode = #tpu.pipeline_mode<synchronous>, transform_indices = @transform_3, window_bounds = array<i64: 128, 384>}, {pipeline_mode = #tpu.pipeline_mode<synchronous>, transform_indices = @transform_4, window_bounds = array<i64: 1, 128>}, {transform_indices = @transform_5, window_bounds = array<i64: 8, 128>}]} {
    %c0_i32 = arith.constant 0 : i32
    %0 = arith.cmpi eq, %arg1, %c0_i32 : i32
    %1 = arith.extui %0 : i1 to i32
    %c0_i32_0 = arith.constant 0 : i32
    %2 = arith.cmpi ne, %1, %c0_i32_0 : i32
    scf.if %2 {
      %cst_77 = arith.constant 0.000000e+00 : f32
      %271 = vector.broadcast %cst_77 : f32 to vector<8x128xf32>
      %c0_78 = arith.constant 0 : index
      %c0_79 = arith.constant 0 : index
      %272 = vector.load %arg9[%c0_78, %c0_79] : memref<8x128xf32, #tpu.memory_space<vmem>>, vector<8x128xf32>
      tpu.vector_store %arg9[%c0_78, %c0_79], %271 {strides = array<i32>} : memref<8x128xf32, #tpu.memory_space<vmem>>, vector<8x128xf32>,
    } else {
    }
    %c0 = arith.constant 0 : index
    %c0_1 = arith.constant 0 : index
    %c0_2 = arith.constant 0 : index
    %3 = vector.load %arg2[%c0, %c0_1, %c0_2] : memref<8x8x128xf32, #tpu.memory_space<vmem>>, vector<8x8x128xf32>
    %4 = vector.shape_cast %3 : vector<8x8x128xf32> to vector<64x128xf32>
    %c0_3 = arith.constant 0 : index
    %c0_4 = arith.constant 0 : index
    %5 = vector.load %arg3[%c0_3, %c0_4] : memref<128x384xf32, #tpu.memory_space<vmem>>, vector<128x384xf32>
    %cst = arith.constant dense<0.000000e+00> : vector<64x384xf32>
    %6 = tpu.matmul %4, %5, %cst {dimension_numbers = #tpu.dot_dimension_numbers<[1], [0], [0], [1], [0, 0, 1, 1], [], []>} : vector<64x128xf32>, vector<128x384xf32>, vector<64x384xf32> -> vector<64x384xf32>
    %c0_5 = arith.constant 0 : index
    %c0_6 = arith.constant 0 : index
    %7 = vector.load %arg4[%c0_5, %c0_6] : memref<1x384xf32, #tpu.memory_space<vmem>>, vector<1x384xf32>
    %8 = vector.broadcast %7 : vector<1x384xf32> to vector<64x384xf32>
    %9 = arith.addf %6, %8 : vector<64x384xf32>
    %10 = vector.shape_cast %9 : vector<64x384xf32> to vector<8x8x384xf32>
    %c0_7 = arith.constant 0 : index
    %c0_8 = arith.constant 0 : index
    %c0_9 = arith.constant 0 : index
    %11 = vector.load %arg8[%c0_7, %c0_8, %c0_9] : memref<8x8x384xf32, #tpu.memory_space<vmem>>, vector<8x8x384xf32>
    tpu.vector_store %arg8[%c0_7, %c0_8, %c0_9], %10 {strides = array<i32>} : memref<8x8x384xf32, #tpu.memory_space<vmem>>, vector<8x8x384xf32>,
    %c0_10 = arith.constant 0 : index
    %c0_11 = arith.constant 0 : index
    %12 = vector.load %arg5[%c0_10, %c0_11] : memref<128x384xf32, #tpu.memory_space<vmem>>, vector<128x384xf32>
    %13 = vector.extract_strided_slice %12 {offsets = [0, 0], sizes = [128, 256], strides = [1, 1]} : vector<128x384xf32> to vector<128x256xf32>
    %14 = vector.extract_strided_slice %12 {offsets = [0, 256], sizes = [128, 128], strides = [1, 1]} : vector<128x384xf32> to vector<128x128xf32>
    %c0_12 = arith.constant 0 : index
    %c0_13 = arith.constant 0 : index
    %15 = vector.load %arg6[%c0_12, %c0_13] : memref<1x128xf32, #tpu.memory_space<vmem>>, vector<1x128xf32>
    %16 = vector.shape_cast %15 : vector<1x128xf32> to vector<1x128xf32>
    %17 = vector.broadcast %16 : vector<1x128xf32> to vector<8x128xf32>
    %c0_14 = arith.constant 0 : index
    %c0_15 = arith.constant 0 : index
    %18 = vector.load %arg9[%c0_14, %c0_15] : memref<8x128xf32, #tpu.memory_space<vmem>>, vector<8x128xf32>
    %c0_i32_16 = arith.constant 0 : i32
    %19 = arith.index_cast %c0_i32_16 : i32 to index
    %c0_17 = arith.constant 0 : index
    %c0_18 = arith.constant 0 : index
    %20 = vector.load %arg8[%19, %c0_17, %c0_18] : memref<8x8x384xf32, #tpu.memory_space<vmem>>, vector<1x8x384xf32>
    %21 = vector.shape_cast %20 : vector<1x8x384xf32> to vector<8x384xf32>
    %cst_19 = arith.constant dense<0.000000e+00> : vector<8x256xf32>
    %22 = tpu.matmul %18, %13, %cst_19 {dimension_numbers = #tpu.dot_dimension_numbers<[1], [0], [0], [1], [0, 0, 1, 1], [], []>} : vector<8x128xf32>, vector<128x256xf32>, vector<8x256xf32> -> vector<8x256xf32>
    %cst_20 = arith.constant dense<0.000000e+00> : vector<8x128xf32>
    %23 = tpu.matmul %18, %14, %cst_20 {dimension_numbers = #tpu.dot_dimension_numbers<[1], [0], [0], [1], [0, 0, 1, 1], [], []>} : vector<8x128xf32>, vector<128x128xf32>, vector<8x128xf32> -> vector<8x128xf32>
    %24 = vector.extract_strided_slice %21 {offsets = [0, 0], sizes = [8, 128], strides = [1, 1]} : vector<8x384xf32> to vector<8x128xf32>
    %25 = vector.extract_strided_slice %22 {offsets = [0, 0], sizes = [8, 128], strides = [1, 1]} : vector<8x256xf32> to vector<8x128xf32>
    %26 = arith.addf %24, %25 : vector<8x128xf32>
    %27 = arith.negf %26 : vector<8x128xf32>
    %28 = math.exp %27 : vector<8x128xf32>
    %cst_21 = arith.constant 1.000000e+00 : f32
    %29 = vector.broadcast %cst_21 : f32 to vector<8x128xf32>
    %30 = arith.addf %29, %28 : vector<8x128xf32>
    %31 = arith.divf %29, %30 : vector<8x128xf32>
    %32 = vector.extract_strided_slice %21 {offsets = [0, 128], sizes = [8, 128], strides = [1, 1]} : vector<8x384xf32> to vector<8x128xf32>
    %33 = vector.extract_strided_slice %22 {offsets = [0, 128], sizes = [8, 128], strides = [1, 1]} : vector<8x256xf32> to vector<8x128xf32>
    %34 = arith.addf %32, %33 : vector<8x128xf32>
    %35 = arith.negf %34 : vector<8x128xf32>
    %36 = math.exp %35 : vector<8x128xf32>
    %cst_22 = arith.constant 1.000000e+00 : f32
    %37 = vector.broadcast %cst_22 : f32 to vector<8x128xf32>
    %38 = arith.addf %37, %36 : vector<8x128xf32>
    %39 = arith.divf %37, %38 : vector<8x128xf32>
    %40 = vector.extract_strided_slice %21 {offsets = [0, 256], sizes = [8, 128], strides = [1, 1]} : vector<8x384xf32> to vector<8x128xf32>
    %41 = arith.addf %23, %17 : vector<8x128xf32>
    %42 = arith.mulf %31, %41 : vector<8x128xf32>
    %43 = arith.addf %40, %42 : vector<8x128xf32>
    %44 = math.tanh %43 : vector<8x128xf32>
    %cst_23 = arith.constant 1.000000e+00 : f32
    %45 = vector.broadcast %cst_23 : f32 to vector<8x128xf32>
    %46 = arith.subf %45, %39 : vector<8x128xf32>
    %47 = arith.mulf %46, %44 : vector<8x128xf32>
    %48 = arith.mulf %39, %18 : vector<8x128xf32>
    %49 = arith.addf %47, %48 : vector<8x128xf32>
    %c1_i32 = arith.constant 1 : i32
    %50 = arith.index_cast %c1_i32 : i32 to index
    %c0_24 = arith.constant 0 : index
    %c0_25 = arith.constant 0 : index
    %51 = vector.load %arg8[%50, %c0_24, %c0_25] : memref<8x8x384xf32, #tpu.memory_space<vmem>>, vector<1x8x384xf32>
    %52 = vector.shape_cast %51 : vector<1x8x384xf32> to vector<8x384xf32>
    %cst_26 = arith.constant dense<0.000000e+00> : vector<8x256xf32>
    %53 = tpu.matmul %49, %13, %cst_26 {dimension_numbers = #tpu.dot_dimension_numbers<[1], [0], [0], [1], [0, 0, 1, 1], [], []>} : vector<8x128xf32>, vector<128x256xf32>, vector<8x256xf32> -> vector<8x256xf32>
    %cst_27 = arith.constant dense<0.000000e+00> : vector<8x128xf32>
    %54 = tpu.matmul %49, %14, %cst_27 {dimension_numbers = #tpu.dot_dimension_numbers<[1], [0], [0], [1], [0, 0, 1, 1], [], []>} : vector<8x128xf32>, vector<128x128xf32>, vector<8x128xf32> -> vector<8x128xf32>
    %55 = vector.extract_strided_slice %52 {offsets = [0, 0], sizes = [8, 128], strides = [1, 1]} : vector<8x384xf32> to vector<8x128xf32>
    %56 = vector.extract_strided_slice %53 {offsets = [0, 0], sizes = [8, 128], strides = [1, 1]} : vector<8x256xf32> to vector<8x128xf32>
    %57 = arith.addf %55, %56 : vector<8x128xf32>
    %58 = arith.negf %57 : vector<8x128xf32>
    %59 = math.exp %58 : vector<8x128xf32>
    %cst_28 = arith.constant 1.000000e+00 : f32
    %60 = vector.broadcast %cst_28 : f32 to vector<8x128xf32>
    %61 = arith.addf %60, %59 : vector<8x128xf32>
    %62 = arith.divf %60, %61 : vector<8x128xf32>
    %63 = vector.extract_strided_slice %52 {offsets = [0, 128], sizes = [8, 128], strides = [1, 1]} : vector<8x384xf32> to vector<8x128xf32>
    %64 = vector.extract_strided_slice %53 {offsets = [0, 128], sizes = [8, 128], strides = [1, 1]} : vector<8x256xf32> to vector<8x128xf32>
    %65 = arith.addf %63, %64 : vector<8x128xf32>
    %66 = arith.negf %65 : vector<8x128xf32>
    %67 = math.exp %66 : vector<8x128xf32>
    %cst_29 = arith.constant 1.000000e+00 : f32
    %68 = vector.broadcast %cst_29 : f32 to vector<8x128xf32>
    %69 = arith.addf %68, %67 : vector<8x128xf32>
    %70 = arith.divf %68, %69 : vector<8x128xf32>
    %71 = vector.extract_strided_slice %52 {offsets = [0, 256], sizes = [8, 128], strides = [1, 1]} : vector<8x384xf32> to vector<8x128xf32>
    %72 = arith.addf %54, %17 : vector<8x128xf32>
    %73 = arith.mulf %62, %72 : vector<8x128xf32>
    %74 = arith.addf %71, %73 : vector<8x128xf32>
    %75 = math.tanh %74 : vector<8x128xf32>
    %cst_30 = arith.constant 1.000000e+00 : f32
    %76 = vector.broadcast %cst_30 : f32 to vector<8x128xf32>
    %77 = arith.subf %76, %70 : vector<8x128xf32>
    %78 = arith.mulf %77, %75 : vector<8x128xf32>
    %79 = arith.mulf %70, %49 : vector<8x128xf32>
    %80 = arith.addf %78, %79 : vector<8x128xf32>
    %c2_i32 = arith.constant 2 : i32
    %81 = arith.index_cast %c2_i32 : i32 to index
    %c0_31 = arith.constant 0 : index
    %c0_32 = arith.constant 0 : index
    %82 = vector.load %arg8[%81, %c0_31, %c0_32] : memref<8x8x384xf32, #tpu.memory_space<vmem>>, vector<1x8x384xf32>
    %83 = vector.shape_cast %82 : vector<1x8x384xf32> to vector<8x384xf32>
    %cst_33 = arith.constant dense<0.000000e+00> : vector<8x256xf32>
    %84 = tpu.matmul %80, %13, %cst_33 {dimension_numbers = #tpu.dot_dimension_numbers<[1], [0], [0], [1], [0, 0, 1, 1], [], []>} : vector<8x128xf32>, vector<128x256xf32>, vector<8x256xf32> -> vector<8x256xf32>
    %cst_34 = arith.constant dense<0.000000e+00> : vector<8x128xf32>
    %85 = tpu.matmul %80, %14, %cst_34 {dimension_numbers = #tpu.dot_dimension_numbers<[1], [0], [0], [1], [0, 0, 1, 1], [], []>} : vector<8x128xf32>, vector<128x128xf32>, vector<8x128xf32> -> vector<8x128xf32>
    %86 = vector.extract_strided_slice %83 {offsets = [0, 0], sizes = [8, 128], strides = [1, 1]} : vector<8x384xf32> to vector<8x128xf32>
    %87 = vector.extract_strided_slice %84 {offsets = [0, 0], sizes = [8, 128], strides = [1, 1]} : vector<8x256xf32> to vector<8x128xf32>
    %88 = arith.addf %86, %87 : vector<8x128xf32>
    %89 = arith.negf %88 : vector<8x128xf32>
    %90 = math.exp %89 : vector<8x128xf32>
    %cst_35 = arith.constant 1.000000e+00 : f32
    %91 = vector.broadcast %cst_35 : f32 to vector<8x128xf32>
    %92 = arith.addf %91, %90 : vector<8x128xf32>
    %93 = arith.divf %91, %92 : vector<8x128xf32>
    %94 = vector.extract_strided_slice %83 {offsets = [0, 128], sizes = [8, 128], strides = [1, 1]} : vector<8x384xf32> to vector<8x128xf32>
    %95 = vector.extract_strided_slice %84 {offsets = [0, 128], sizes = [8, 128], strides = [1, 1]} : vector<8x256xf32> to vector<8x128xf32>
    %96 = arith.addf %94, %95 : vector<8x128xf32>
    %97 = arith.negf %96 : vector<8x128xf32>
    %98 = math.exp %97 : vector<8x128xf32>
    %cst_36 = arith.constant 1.000000e+00 : f32
    %99 = vector.broadcast %cst_36 : f32 to vector<8x128xf32>
    %100 = arith.addf %99, %98 : vector<8x128xf32>
    %101 = arith.divf %99, %100 : vector<8x128xf32>
    %102 = vector.extract_strided_slice %83 {offsets = [0, 256], sizes = [8, 128], strides = [1, 1]} : vector<8x384xf32> to vector<8x128xf32>
    %103 = arith.addf %85, %17 : vector<8x128xf32>
    %104 = arith.mulf %93, %103 : vector<8x128xf32>
    %105 = arith.addf %102, %104 : vector<8x128xf32>
    %106 = math.tanh %105 : vector<8x128xf32>
    %cst_37 = arith.constant 1.000000e+00 : f32
    %107 = vector.broadcast %cst_37 : f32 to vector<8x128xf32>
    %108 = arith.subf %107, %101 : vector<8x128xf32>
    %109 = arith.mulf %108, %106 : vector<8x128xf32>
    %110 = arith.mulf %101, %80 : vector<8x128xf32>
    %111 = arith.addf %109, %110 : vector<8x128xf32>
    %c3_i32 = arith.constant 3 : i32
    %112 = arith.index_cast %c3_i32 : i32 to index
    %c0_38 = arith.constant 0 : index
    %c0_39 = arith.constant 0 : index
    %113 = vector.load %arg8[%112, %c0_38, %c0_39] : memref<8x8x384xf32, #tpu.memory_space<vmem>>, vector<1x8x384xf32>
    %114 = vector.shape_cast %113 : vector<1x8x384xf32> to vector<8x384xf32>
    %cst_40 = arith.constant dense<0.000000e+00> : vector<8x256xf32>
    %115 = tpu.matmul %111, %13, %cst_40 {dimension_numbers = #tpu.dot_dimension_numbers<[1], [0], [0], [1], [0, 0, 1, 1], [], []>} : vector<8x128xf32>, vector<128x256xf32>, vector<8x256xf32> -> vector<8x256xf32>
    %cst_41 = arith.constant dense<0.000000e+00> : vector<8x128xf32>
    %116 = tpu.matmul %111, %14, %cst_41 {dimension_numbers = #tpu.dot_dimension_numbers<[1], [0], [0], [1], [0, 0, 1, 1], [], []>} : vector<8x128xf32>, vector<128x128xf32>, vector<8x128xf32> -> vector<8x128xf32>
    %117 = vector.extract_strided_slice %114 {offsets = [0, 0], sizes = [8, 128], strides = [1, 1]} : vector<8x384xf32> to vector<8x128xf32>
    %118 = vector.extract_strided_slice %115 {offsets = [0, 0], sizes = [8, 128], strides = [1, 1]} : vector<8x256xf32> to vector<8x128xf32>
    %119 = arith.addf %117, %118 : vector<8x128xf32>
    %120 = arith.negf %119 : vector<8x128xf32>
    %121 = math.exp %120 : vector<8x128xf32>
    %cst_42 = arith.constant 1.000000e+00 : f32
    %122 = vector.broadcast %cst_42 : f32 to vector<8x128xf32>
    %123 = arith.addf %122, %121 : vector<8x128xf32>
    %124 = arith.divf %122, %123 : vector<8x128xf32>
    %125 = vector.extract_strided_slice %114 {offsets = [0, 128], sizes = [8, 128], strides = [1, 1]} : vector<8x384xf32> to vector<8x128xf32>
    %126 = vector.extract_strided_slice %115 {offsets = [0, 128], sizes = [8, 128], strides = [1, 1]} : vector<8x256xf32> to vector<8x128xf32>
    %127 = arith.addf %125, %126 : vector<8x128xf32>
    %128 = arith.negf %127 : vector<8x128xf32>
    %129 = math.exp %128 : vector<8x128xf32>
    %cst_43 = arith.constant 1.000000e+00 : f32
    %130 = vector.broadcast %cst_43 : f32 to vector<8x128xf32>
    %131 = arith.addf %130, %129 : vector<8x128xf32>
    %132 = arith.divf %130, %131 : vector<8x128xf32>
    %133 = vector.extract_strided_slice %114 {offsets = [0, 256], sizes = [8, 128], strides = [1, 1]} : vector<8x384xf32> to vector<8x128xf32>
    %134 = arith.addf %116, %17 : vector<8x128xf32>
    %135 = arith.mulf %124, %134 : vector<8x128xf32>
    %136 = arith.addf %133, %135 : vector<8x128xf32>
    %137 = math.tanh %136 : vector<8x128xf32>
    %cst_44 = arith.constant 1.000000e+00 : f32
    %138 = vector.broadcast %cst_44 : f32 to vector<8x128xf32>
    %139 = arith.subf %138, %132 : vector<8x128xf32>
    %140 = arith.mulf %139, %137 : vector<8x128xf32>
    %141 = arith.mulf %132, %111 : vector<8x128xf32>
    %142 = arith.addf %140, %141 : vector<8x128xf32>
    %c4_i32 = arith.constant 4 : i32
    %143 = arith.index_cast %c4_i32 : i32 to index
    %c0_45 = arith.constant 0 : index
    %c0_46 = arith.constant 0 : index
    %144 = vector.load %arg8[%143, %c0_45, %c0_46] : memref<8x8x384xf32, #tpu.memory_space<vmem>>, vector<1x8x384xf32>
    %145 = vector.shape_cast %144 : vector<1x8x384xf32> to vector<8x384xf32>
    %cst_47 = arith.constant dense<0.000000e+00> : vector<8x256xf32>
    %146 = tpu.matmul %142, %13, %cst_47 {dimension_numbers = #tpu.dot_dimension_numbers<[1], [0], [0], [1], [0, 0, 1, 1], [], []>} : vector<8x128xf32>, vector<128x256xf32>, vector<8x256xf32> -> vector<8x256xf32>
    %cst_48 = arith.constant dense<0.000000e+00> : vector<8x128xf32>
    %147 = tpu.matmul %142, %14, %cst_48 {dimension_numbers = #tpu.dot_dimension_numbers<[1], [0], [0], [1], [0, 0, 1, 1], [], []>} : vector<8x128xf32>, vector<128x128xf32>, vector<8x128xf32> -> vector<8x128xf32>
    %148 = vector.extract_strided_slice %145 {offsets = [0, 0], sizes = [8, 128], strides = [1, 1]} : vector<8x384xf32> to vector<8x128xf32>
    %149 = vector.extract_strided_slice %146 {offsets = [0, 0], sizes = [8, 128], strides = [1, 1]} : vector<8x256xf32> to vector<8x128xf32>
    %150 = arith.addf %148, %149 : vector<8x128xf32>
    %151 = arith.negf %150 : vector<8x128xf32>
    %152 = math.exp %151 : vector<8x128xf32>
    %cst_49 = arith.constant 1.000000e+00 : f32
    %153 = vector.broadcast %cst_49 : f32 to vector<8x128xf32>
    %154 = arith.addf %153, %152 : vector<8x128xf32>
    %155 = arith.divf %153, %154 : vector<8x128xf32>
    %156 = vector.extract_strided_slice %145 {offsets = [0, 128], sizes = [8, 128], strides = [1, 1]} : vector<8x384xf32> to vector<8x128xf32>
    %157 = vector.extract_strided_slice %146 {offsets = [0, 128], sizes = [8, 128], strides = [1, 1]} : vector<8x256xf32> to vector<8x128xf32>
    %158 = arith.addf %156, %157 : vector<8x128xf32>
    %159 = arith.negf %158 : vector<8x128xf32>
    %160 = math.exp %159 : vector<8x128xf32>
    %cst_50 = arith.constant 1.000000e+00 : f32
    %161 = vector.broadcast %cst_50 : f32 to vector<8x128xf32>
    %162 = arith.addf %161, %160 : vector<8x128xf32>
    %163 = arith.divf %161, %162 : vector<8x128xf32>
    %164 = vector.extract_strided_slice %145 {offsets = [0, 256], sizes = [8, 128], strides = [1, 1]} : vector<8x384xf32> to vector<8x128xf32>
    %165 = arith.addf %147, %17 : vector<8x128xf32>
    %166 = arith.mulf %155, %165 : vector<8x128xf32>
    %167 = arith.addf %164, %166 : vector<8x128xf32>
    %168 = math.tanh %167 : vector<8x128xf32>
    %cst_51 = arith.constant 1.000000e+00 : f32
    %169 = vector.broadcast %cst_51 : f32 to vector<8x128xf32>
    %170 = arith.subf %169, %163 : vector<8x128xf32>
    %171 = arith.mulf %170, %168 : vector<8x128xf32>
    %172 = arith.mulf %163, %142 : vector<8x128xf32>
    %173 = arith.addf %171, %172 : vector<8x128xf32>
    %c5_i32 = arith.constant 5 : i32
    %174 = arith.index_cast %c5_i32 : i32 to index
    %c0_52 = arith.constant 0 : index
    %c0_53 = arith.constant 0 : index
    %175 = vector.load %arg8[%174, %c0_52, %c0_53] : memref<8x8x384xf32, #tpu.memory_space<vmem>>, vector<1x8x384xf32>
    %176 = vector.shape_cast %175 : vector<1x8x384xf32> to vector<8x384xf32>
    %cst_54 = arith.constant dense<0.000000e+00> : vector<8x256xf32>
    %177 = tpu.matmul %173, %13, %cst_54 {dimension_numbers = #tpu.dot_dimension_numbers<[1], [0], [0], [1], [0, 0, 1, 1], [], []>} : vector<8x128xf32>, vector<128x256xf32>, vector<8x256xf32> -> vector<8x256xf32>
    %cst_55 = arith.constant dense<0.000000e+00> : vector<8x128xf32>
    %178 = tpu.matmul %173, %14, %cst_55 {dimension_numbers = #tpu.dot_dimension_numbers<[1], [0], [0], [1], [0, 0, 1, 1], [], []>} : vector<8x128xf32>, vector<128x128xf32>, vector<8x128xf32> -> vector<8x128xf32>
    %179 = vector.extract_strided_slice %176 {offsets = [0, 0], sizes = [8, 128], strides = [1, 1]} : vector<8x384xf32> to vector<8x128xf32>
    %180 = vector.extract_strided_slice %177 {offsets = [0, 0], sizes = [8, 128], strides = [1, 1]} : vector<8x256xf32> to vector<8x128xf32>
    %181 = arith.addf %179, %180 : vector<8x128xf32>
    %182 = arith.negf %181 : vector<8x128xf32>
    %183 = math.exp %182 : vector<8x128xf32>
    %cst_56 = arith.constant 1.000000e+00 : f32
    %184 = vector.broadcast %cst_56 : f32 to vector<8x128xf32>
    %185 = arith.addf %184, %183 : vector<8x128xf32>
    %186 = arith.divf %184, %185 : vector<8x128xf32>
    %187 = vector.extract_strided_slice %176 {offsets = [0, 128], sizes = [8, 128], strides = [1, 1]} : vector<8x384xf32> to vector<8x128xf32>
    %188 = vector.extract_strided_slice %177 {offsets = [0, 128], sizes = [8, 128], strides = [1, 1]} : vector<8x256xf32> to vector<8x128xf32>
    %189 = arith.addf %187, %188 : vector<8x128xf32>
    %190 = arith.negf %189 : vector<8x128xf32>
    %191 = math.exp %190 : vector<8x128xf32>
    %cst_57 = arith.constant 1.000000e+00 : f32
    %192 = vector.broadcast %cst_57 : f32 to vector<8x128xf32>
    %193 = arith.addf %192, %191 : vector<8x128xf32>
    %194 = arith.divf %192, %193 : vector<8x128xf32>
    %195 = vector.extract_strided_slice %176 {offsets = [0, 256], sizes = [8, 128], strides = [1, 1]} : vector<8x384xf32> to vector<8x128xf32>
    %196 = arith.addf %178, %17 : vector<8x128xf32>
    %197 = arith.mulf %186, %196 : vector<8x128xf32>
    %198 = arith.addf %195, %197 : vector<8x128xf32>
    %199 = math.tanh %198 : vector<8x128xf32>
    %cst_58 = arith.constant 1.000000e+00 : f32
    %200 = vector.broadcast %cst_58 : f32 to vector<8x128xf32>
    %201 = arith.subf %200, %194 : vector<8x128xf32>
    %202 = arith.mulf %201, %199 : vector<8x128xf32>
    %203 = arith.mulf %194, %173 : vector<8x128xf32>
    %204 = arith.addf %202, %203 : vector<8x128xf32>
    %c6_i32 = arith.constant 6 : i32
    %205 = arith.index_cast %c6_i32 : i32 to index
    %c0_59 = arith.constant 0 : index
    %c0_60 = arith.constant 0 : index
    %206 = vector.load %arg8[%205, %c0_59, %c0_60] : memref<8x8x384xf32, #tpu.memory_space<vmem>>, vector<1x8x384xf32>
    %207 = vector.shape_cast %206 : vector<1x8x384xf32> to vector<8x384xf32>
    %cst_61 = arith.constant dense<0.000000e+00> : vector<8x256xf32>
    %208 = tpu.matmul %204, %13, %cst_61 {dimension_numbers = #tpu.dot_dimension_numbers<[1], [0], [0], [1], [0, 0, 1, 1], [], []>} : vector<8x128xf32>, vector<128x256xf32>, vector<8x256xf32> -> vector<8x256xf32>
    %cst_62 = arith.constant dense<0.000000e+00> : vector<8x128xf32>
    %209 = tpu.matmul %204, %14, %cst_62 {dimension_numbers = #tpu.dot_dimension_numbers<[1], [0], [0], [1], [0, 0, 1, 1], [], []>} : vector<8x128xf32>, vector<128x128xf32>, vector<8x128xf32> -> vector<8x128xf32>
    %210 = vector.extract_strided_slice %207 {offsets = [0, 0], sizes = [8, 128], strides = [1, 1]} : vector<8x384xf32> to vector<8x128xf32>
    %211 = vector.extract_strided_slice %208 {offsets = [0, 0], sizes = [8, 128], strides = [1, 1]} : vector<8x256xf32> to vector<8x128xf32>
    %212 = arith.addf %210, %211 : vector<8x128xf32>
    %213 = arith.negf %212 : vector<8x128xf32>
    %214 = math.exp %213 : vector<8x128xf32>
    %cst_63 = arith.constant 1.000000e+00 : f32
    %215 = vector.broadcast %cst_63 : f32 to vector<8x128xf32>
    %216 = arith.addf %215, %214 : vector<8x128xf32>
    %217 = arith.divf %215, %216 : vector<8x128xf32>
    %218 = vector.extract_strided_slice %207 {offsets = [0, 128], sizes = [8, 128], strides = [1, 1]} : vector<8x384xf32> to vector<8x128xf32>
    %219 = vector.extract_strided_slice %208 {offsets = [0, 128], sizes = [8, 128], strides = [1, 1]} : vector<8x256xf32> to vector<8x128xf32>
    %220 = arith.addf %218, %219 : vector<8x128xf32>
    %221 = arith.negf %220 : vector<8x128xf32>
    %222 = math.exp %221 : vector<8x128xf32>
    %cst_64 = arith.constant 1.000000e+00 : f32
    %223 = vector.broadcast %cst_64 : f32 to vector<8x128xf32>
    %224 = arith.addf %223, %222 : vector<8x128xf32>
    %225 = arith.divf %223, %224 : vector<8x128xf32>
    %226 = vector.extract_strided_slice %207 {offsets = [0, 256], sizes = [8, 128], strides = [1, 1]} : vector<8x384xf32> to vector<8x128xf32>
    %227 = arith.addf %209, %17 : vector<8x128xf32>
    %228 = arith.mulf %217, %227 : vector<8x128xf32>
    %229 = arith.addf %226, %228 : vector<8x128xf32>
    %230 = math.tanh %229 : vector<8x128xf32>
    %cst_65 = arith.constant 1.000000e+00 : f32
    %231 = vector.broadcast %cst_65 : f32 to vector<8x128xf32>
    %232 = arith.subf %231, %225 : vector<8x128xf32>
    %233 = arith.mulf %232, %230 : vector<8x128xf32>
    %234 = arith.mulf %225, %204 : vector<8x128xf32>
    %235 = arith.addf %233, %234 : vector<8x128xf32>
    %c7_i32 = arith.constant 7 : i32
    %236 = arith.index_cast %c7_i32 : i32 to index
    %c0_66 = arith.constant 0 : index
    %c0_67 = arith.constant 0 : index
    %237 = vector.load %arg8[%236, %c0_66, %c0_67] : memref<8x8x384xf32, #tpu.memory_space<vmem>>, vector<1x8x384xf32>
    %238 = vector.shape_cast %237 : vector<1x8x384xf32> to vector<8x384xf32>
    %cst_68 = arith.constant dense<0.000000e+00> : vector<8x256xf32>
    %239 = tpu.matmul %235, %13, %cst_68 {dimension_numbers = #tpu.dot_dimension_numbers<[1], [0], [0], [1], [0, 0, 1, 1], [], []>} : vector<8x128xf32>, vector<128x256xf32>, vector<8x256xf32> -> vector<8x256xf32>
    %cst_69 = arith.constant dense<0.000000e+00> : vector<8x128xf32>
    %240 = tpu.matmul %235, %14, %cst_69 {dimension_numbers = #tpu.dot_dimension_numbers<[1], [0], [0], [1], [0, 0, 1, 1], [], []>} : vector<8x128xf32>, vector<128x128xf32>, vector<8x128xf32> -> vector<8x128xf32>
    %241 = vector.extract_strided_slice %238 {offsets = [0, 0], sizes = [8, 128], strides = [1, 1]} : vector<8x384xf32> to vector<8x128xf32>
    %242 = vector.extract_strided_slice %239 {offsets = [0, 0], sizes = [8, 128], strides = [1, 1]} : vector<8x256xf32> to vector<8x128xf32>
    %243 = arith.addf %241, %242 : vector<8x128xf32>
    %244 = arith.negf %243 : vector<8x128xf32>
    %245 = math.exp %244 : vector<8x128xf32>
    %cst_70 = arith.constant 1.000000e+00 : f32
    %246 = vector.broadcast %cst_70 : f32 to vector<8x128xf32>
    %247 = arith.addf %246, %245 : vector<8x128xf32>
    %248 = arith.divf %246, %247 : vector<8x128xf32>
    %249 = vector.extract_strided_slice %238 {offsets = [0, 128], sizes = [8, 128], strides = [1, 1]} : vector<8x384xf32> to vector<8x128xf32>
    %250 = vector.extract_strided_slice %239 {offsets = [0, 128], sizes = [8, 128], strides = [1, 1]} : vector<8x256xf32> to vector<8x128xf32>
    %251 = arith.addf %249, %250 : vector<8x128xf32>
    %252 = arith.negf %251 : vector<8x128xf32>
    %253 = math.exp %252 : vector<8x128xf32>
    %cst_71 = arith.constant 1.000000e+00 : f32
    %254 = vector.broadcast %cst_71 : f32 to vector<8x128xf32>
    %255 = arith.addf %254, %253 : vector<8x128xf32>
    %256 = arith.divf %254, %255 : vector<8x128xf32>
    %257 = vector.extract_strided_slice %238 {offsets = [0, 256], sizes = [8, 128], strides = [1, 1]} : vector<8x384xf32> to vector<8x128xf32>
    %258 = arith.addf %240, %17 : vector<8x128xf32>
    %259 = arith.mulf %248, %258 : vector<8x128xf32>
    %260 = arith.addf %257, %259 : vector<8x128xf32>
    %261 = math.tanh %260 : vector<8x128xf32>
    %cst_72 = arith.constant 1.000000e+00 : f32
    %262 = vector.broadcast %cst_72 : f32 to vector<8x128xf32>
    %263 = arith.subf %262, %256 : vector<8x128xf32>
    %264 = arith.mulf %263, %261 : vector<8x128xf32>
    %265 = arith.mulf %256, %235 : vector<8x128xf32>
    %266 = arith.addf %264, %265 : vector<8x128xf32>
    %c8_i32 = arith.constant 8 : i32
    %c0_73 = arith.constant 0 : index
    %c0_74 = arith.constant 0 : index
    %267 = vector.load %arg9[%c0_73, %c0_74] : memref<8x128xf32, #tpu.memory_space<vmem>>, vector<8x128xf32>
    tpu.vector_store %arg9[%c0_73, %c0_74], %266 {strides = array<i32>} : memref<8x128xf32, #tpu.memory_space<vmem>>, vector<8x128xf32>,
    %c0_i32_75 = arith.constant 0 : i32
    %268 = arith.cmpi eq, %arg1, %c0_i32_75 : i32
    %269 = arith.extui %268 : i1 to i32
    %c0_i32_76 = arith.constant 0 : i32
    %270 = arith.cmpi ne, %269, %c0_i32_76 : i32
    scf.if %270 {
      %c0_77 = arith.constant 0 : index
      %c0_78 = arith.constant 0 : index
      %271 = vector.load %arg7[%c0_77, %c0_78] : memref<8x128xf32, #tpu.memory_space<vmem>>, vector<8x128xf32>
      tpu.vector_store %arg7[%c0_77, %c0_78], %266 {strides = array<i32>} : memref<8x128xf32, #tpu.memory_space<vmem>>, vector<8x128xf32>,
    } else {
    }
    return
  }
  func.func @transform_0(%arg0: i32, %arg1: i32) -> (i32, i32, i32) {
    %c0_i32 = arith.constant 0 : i32
    %c0_i32_0 = arith.constant 0 : i32
    return %arg1, %arg0, %c0_i32 : i32, i32, i32
  }
  func.func @transform_1(%arg0: i32, %arg1: i32) -> (i32, i32) {
    %c0_i32 = arith.constant 0 : i32
    %c0_i32_0 = arith.constant 0 : i32
    %c0_i32_1 = arith.constant 0 : i32
    return %c0_i32, %c0_i32_0 : i32, i32
  }
  func.func @transform_2(%arg0: i32, %arg1: i32) -> (i32, i32) {
    %c0_i32 = arith.constant 0 : i32
    %c0_i32_0 = arith.constant 0 : i32
    %c0_i32_1 = arith.constant 0 : i32
    return %c0_i32, %c0_i32_0 : i32, i32
  }
  func.func @transform_3(%arg0: i32, %arg1: i32) -> (i32, i32) {
    %c0_i32 = arith.constant 0 : i32
    %c0_i32_0 = arith.constant 0 : i32
    %c0_i32_1 = arith.constant 0 : i32
    return %c0_i32, %c0_i32_0 : i32, i32
  }
  func.func @transform_4(%arg0: i32, %arg1: i32) -> (i32, i32) {
    %c0_i32 = arith.constant 0 : i32
    %c0_i32_0 = arith.constant 0 : i32
    %c0_i32_1 = arith.constant 0 : i32
    return %c0_i32, %c0_i32_0 : i32, i32
  }
  func.func @transform_5(%arg0: i32, %arg1: i32) -> (i32, i32) {
    %c0_i32 = arith.constant 0 : i32
    %c0_i32_0 = arith.constant 0 : i32
    return %arg0, %c0_i32 : i32, i32
  }
}

</mosaic_0001>

<llo_original>
// kernel: tpu_custom_call.1
$region0: #{tpu_custom_call.1}
  #allocation0 [shape = 'u32[]', space=smem, size = 0x4, offset = 0x4, fixed_abs, tag = 'smem constant byte address 0x4 - core index']
  #allocation1 [shape = 'u32[144,128]{1,0:T(1,128)}', space=vmem, size = 0x12000, scoped, tag = 'internal scratch']
  #allocation2 [shape = 'f32[8,8,384]{2,1,0:T(8,128)}', space=vmem, size = 0x18000, scoped, tag = 'scratch operand']
  #allocation3 [shape = 'f32[8,128]{1,0:T(8,128)}', space=vmem, size = 0x1000, scoped, tag = 'scratch operand']
  %s0 = inlined_call_operand.hbm [shape: f32[8,8,128], index: 0, kind: input, shape index: {}]
  %s1 = inlined_call_operand.hbm [shape: f32[128,384], index: 1, kind: input, shape index: {}]
  %s2 = inlined_call_operand.vmem [shape: f32[1,384], index: 2, kind: input, shape index: {}]
  %s3 = inlined_call_operand.hbm [shape: f32[128,384], index: 3, kind: input, shape index: {}]
  %s4 = inlined_call_operand.vmem [shape: f32[1,128], index: 4, kind: input, shape index: {}]
  %s5 = inlined_call_operand.hbm [shape: f32[8,128], index: 5, kind: output, shape index: {}]
  %s6 = sld [smem:[#allocation0]]
  $region50: #{tpu_custom_call.1} parent=0
    _
  %s8 = ssub.s32 1, %s6
  %s9 = scalar_select 0, %s8, %s6
  $region1: #{tpu_custom_call.1} parent=0
    #allocation4 [shape = 'u8[32768]{0}', space=vmem, size = 0x8000, scoped, tag = 'input window, operand 0, single buffered']
    #allocation5 [shape = 's32[1]{0}', space=sflag, size = 0x4, scoped, tag = 'scoped memory for tpu_custom_call.1']
    #allocation6 [shape = 's32[1]{0}', space=sflag, size = 0x4, scoped, tag = 'scoped memory for tpu_custom_call.1']
    #allocation7 [shape = 'u8[196608]{0}', space=vmem, size = 0x30000, scoped, tag = 'input window, operand 1, single buffered']
    #allocation8 [shape = 's32[1]{0}', space=sflag, size = 0x4, scoped, tag = 'scoped memory for tpu_custom_call.1']
    #allocation9 [shape = 'u8[196608]{0}', space=vmem, size = 0x30000, scoped, tag = 'input window, operand 3, single buffered']
    #allocation10 [shape = 'u8[4096]{0}', space=vmem, size = 0x1000, scoped, tag = 'output window, operand 0, single buffered']
    %10 = vsyncpa [#allocation5], 0
    %11 = vsyncpa [#allocation8], 0
    %12 = vsyncpa [#allocation6], 0
    // Predicated region
    $region2: #{tpu_custom_call.1} parent=1 // pred_check
      _
    $region3: #{tpu_custom_call.1} parent=1 // pred_check_branch
      %14 = sbr.rel (0) target = $region5
    $region4: #{tpu_custom_call.1} parent=1 // pred_region
      %s16 = ssub.s32 1024, 1024
      %17 = vsyncadd [#allocation5], %s16
      %s18 = sshll.u32 [#allocation4], 4
      %s19 = int_to_ptr.vmem [resolvable:$true] %s18
      %24 = dma.hbm_to_vmem [thread:$0]  %s0, 1024, %s19, [#allocation5], 128, 128, 8
    $region5: #{tpu_custom_call.1} parent=1 // pred_fallthru
      _
    // Predicated region
    $region6: #{tpu_custom_call.1} parent=1 // pred_check
      _
    $region7: #{tpu_custom_call.1} parent=1 // pred_check_branch
      %26 = sbr.rel (0) target = $region9
    $region8: #{tpu_custom_call.1} parent=1 // pred_region
      %s28 = ssub.s32 6144, 6144
      %29 = vsyncadd [#allocation8], %s28
      %s30 = sshll.u32 [#allocation7], 4
      %s31 = int_to_ptr.vmem [resolvable:$true] %s30
      %36 = dma.hbm_to_vmem [thread:$0]  %s1, 6144, %s31, [#allocation8], 384, 384, 24
    $region9: #{tpu_custom_call.1} parent=1 // pred_fallthru
      _
    // Predicated region
    $region10: #{tpu_custom_call.1} parent=1 // pred_check
      _
    $region11: #{tpu_custom_call.1} parent=1 // pred_check_branch
      %38 = sbr.rel (0) target = $region13
    $region12: #{tpu_custom_call.1} parent=1 // pred_region
      _
    $region13: #{tpu_custom_call.1} parent=1 // pred_fallthru
      _
    // Predicated region
    $region14: #{tpu_custom_call.1} parent=1 // pred_check
      _
    $region15: #{tpu_custom_call.1} parent=1 // pred_check_branch
      %40 = sbr.rel (0) target = $region17
    $region16: #{tpu_custom_call.1} parent=1 // pred_region
      %s42 = ssub.s32 6144, 6144
      %43 = vsyncadd [#allocation8], %s42
      %s44 = sshll.u32 [#allocation9], 4
      %s45 = int_to_ptr.vmem [resolvable:$true] %s44
      %50 = dma.hbm_to_vmem [thread:$0]  %s3, 6144, %s45, [#allocation8], 384, 384, 24
    $region17: #{tpu_custom_call.1} parent=1 // pred_fallthru
      _
    // Predicated region
    $region18: #{tpu_custom_call.1} parent=1 // pred_check
      _
    $region19: #{tpu_custom_call.1} parent=1 // pred_check_branch
      %52 = sbr.rel (0) target = $region21
    $region20: #{tpu_custom_call.1} parent=1 // pred_region
      _
    $region21: #{tpu_custom_call.1} parent=1 // pred_fallthru
      _
    // Predicated region
    $region22: #{tpu_custom_call.1} parent=1 // pred_check
      _
    $region23: #{tpu_custom_call.1} parent=1 // pred_check_branch
      %54 = sbr.rel (0) target = $region25
    $region24: #{tpu_custom_call.1} parent=1 // pred_region
      %55 = dma.done [#allocation5], 1024
    $region25: #{tpu_custom_call.1} parent=1 // pred_fallthru
      _
    // Predicated region
    $region26: #{tpu_custom_call.1} parent=1 // pred_check
      _
    $region27: #{tpu_custom_call.1} parent=1 // pred_check_branch
      %57 = sbr.rel (0) target = $region29
    $region28: #{tpu_custom_call.1} parent=1 // pred_region
      %58 = dma.done [#allocation8], 6144
    $region29: #{tpu_custom_call.1} parent=1 // pred_fallthru
      _
    // Predicated region
    $region30: #{tpu_custom_call.1} parent=1 // pred_check
      _
    $region31: #{tpu_custom_call.1} parent=1 // pred_check_branch
      %60 = sbr.rel (0) target = $region33
    $region32: #{tpu_custom_call.1} parent=1 // pred_region
      %61 = dma.done [#allocation8], 6144
    $region33: #{tpu_custom_call.1} parent=1 // pred_fallthru
      _
    %p62 = scmp.eq.s32.totalorder 0, 0
    // Predicated region
    $region34: #{tpu_custom_call.1} parent=1 // pred_check
      %p63 = pneg %p62
    $region35: #{tpu_custom_call.1} parent=1 // pred_check_branch
      %65 = sbr.rel (%p63) target = $region37
    $region36: #{tpu_custom_call.1} parent=1 // pred_region
      %66 = vst [vmem:[#allocation3] sm:$0xff] 0.0
    $region37: #{tpu_custom_call.1} parent=1 // pred_fallthru
      _
    %v67 = vld [vmem:[#allocation4] sm:$0xff]
    %v68 = vld [vmem:[#allocation4 + $0x8] sm:$0xff]
    %v69 = vld [vmem:[#allocation4 + $0x10] sm:$0xff]
    %v70 = vld [vmem:[#allocation4 + $0x18] sm:$0xff]
    %v71 = vld [vmem:[#allocation4 + $0x20] sm:$0xff]
    %v72 = vld [vmem:[#allocation4 + $0x28] sm:$0xff]
    %v73 = vld [vmem:[#allocation4 + $0x30] sm:$0xff]
    %v74 = vld [vmem:[#allocation4 + $0x38] sm:$0xff]
    %v75 = vld [vmem:[#allocation7] sm:$0xff]
    %v76 = vld [vmem:[#allocation7 + $0x8] sm:$0xff]
    %v77 = vld [vmem:[#allocation7 + $0x10] sm:$0xff]
    %v78 = vld [vmem:[#allocation7 + $0x18] sm:$0xff]
    %v79 = vld [vmem:[#allocation7 + $0x20] sm:$0xff]
    %v80 = vld [vmem:[#allocation7 + $0x28] sm:$0xff]
    %v81 = vld [vmem:[#allocation7 + $0x30] sm:$0xff]
    %v82 = vld [vmem:[#allocation7 + $0x38] sm:$0xff]
    %v83 = vld [vmem:[#allocation7 + $0x40] sm:$0xff]
    %v84 = vld [vmem:[#allocation7 + $0x48] sm:$0xff]
    %v85 = vld [vmem:[#allocation7 + $0x50] sm:$0xff]
    %v86 = vld [vmem:[#allocation7 + $0x58] sm:$0xff]
    %v87 = vld [vmem:[#allocation7 + $0x60] sm:$0xff]
    %v88 = vld [vmem:[#allocation7 + $0x68] sm:$0xff]
    %v89 = vld [vmem:[#allocation7 + $0x70] sm:$0xff]
    %v90 = vld [vmem:[#allocation7 + $0x78] sm:$0xff]
    %v91 = vld [vmem:[#allocation7 + $0x80] sm:$0xff]
    %v92 = vld [vmem:[#allocation7 + $0x88] sm:$0xff]
    %v93 = vld [vmem:[#allocation7 + $0x90] sm:$0xff]
    %v94 = vld [vmem:[#allocation7 + $0x98] sm:$0xff]
    %v95 = vld [vmem:[#allocation7 + $0xa0] sm:$0xff]
    %v96 = vld [vmem:[#allocation7 + $0xa8] sm:$0xff]
    %v97 = vld [vmem:[#allocation7 + $0xb0] sm:$0xff]
    %v98 = vld [vmem:[#allocation7 + $0xb8] sm:$0xff]
    %v99 = vld [vmem:[#allocation7 + $0xc0] sm:$0xff]
    %v100 = vld [vmem:[#allocation7 + $0xc8] sm:$0xff]
    %v101 = vld [vmem:[#allocation7 + $0xd0] sm:$0xff]
    %v102 = vld [vmem:[#allocation7 + $0xd8] sm:$0xff]
    %v103 = vld [vmem:[#allocation7 + $0xe0] sm:$0xff]
    %v104 = vld [vmem:[#allocation7 + $0xe8] sm:$0xff]
    %v105 = vld [vmem:[#allocation7 + $0xf0] sm:$0xff]
    %v106 = vld [vmem:[#allocation7 + $0xf8] sm:$0xff]
    %v107 = vld [vmem:[#allocation7 + $0x100] sm:$0xff]
    %v108 = vld [vmem:[#allocation7 + $0x108] sm:$0xff]
    %v109 = vld [vmem:[#allocation7 + $0x110] sm:$0xff]
    %v110 = vld [vmem:[#allocation7 + $0x118] sm:$0xff]
    %v111 = vld [vmem:[#allocation7 + $0x120] sm:$0xff]
    %v112 = vld [vmem:[#allocation7 + $0x128] sm:$0xff]
    %v113 = vld [vmem:[#allocation7 + $0x130] sm:$0xff]
    %v114 = vld [vmem:[#allocation7 + $0x138] sm:$0xff]
    %v115 = vld [vmem:[#allocation7 + $0x140] sm:$0xff]
    %v116 = vld [vmem:[#allocation7 + $0x148] sm:$0xff]
    %v117 = vld [vmem:[#allocation7 + $0x150] sm:$0xff]
    %v118 = vld [vmem:[#allocation7 + $0x158] sm:$0xff]
    %v119 = vld [vmem:[#allocation7 + $0x160] sm:$0xff]
    %v120 = vld [vmem:[#allocation7 + $0x168] sm:$0xff]
    %v121 = vld [vmem:[#allocation7 + $0x170] sm:$0xff]
    %v122 = vld [vmem:[#allocation7 + $0x178] sm:$0xff]
    %v123 = vld [vmem:[%s2] sm:$0x7]
    %v125 = vlaneseq
    %v126 = vshrl.u32 %v125, 7
    %v127 = vsub.s32 0, %v126
    %v128 = vrot.slane %v123, %v127
    %v129 = vlaneseq
    %v130 = vshrl.u32 %v129, 7
    %v131 = vsub.s32 1, %v130
    %v132 = vrot.slane %v123, %v131
    %v133 = vlaneseq
    %v134 = vshrl.u32 %v133, 7
    %v135 = vsub.s32 2, %v134
    %v136 = vrot.slane %v123, %v135
    %140 = vmatprep.subr.mxu0 %v76
    %141 = vmatpush1.msra.mxu0 %v75
    %142 = vmatprep.subr.mxu0 %v79
    %143 = vmatpush1.msra.mxu0 %v78
    %144 = vmatprep.subr.mxu0 %v82
    %145 = vmatpush1.msra.mxu0 %v81
    %146 = vmatprep.subr.mxu0 %v85
    %147 = vmatpush1.msra.mxu0 %v84
    %148 = vmatprep.subr.mxu0 %v88
    %149 = vmatpush1.msra.mxu0 %v87
    %150 = vmatprep.subr.mxu0 %v91
    %151 = vmatpush1.msra.mxu0 %v90
    %152 = vmatprep.subr.mxu0 %v94
    %153 = vmatpush1.msra.mxu0 %v93
    %154 = vmatprep.subr.mxu0 %v97
    %155 = vmatpush1.msra.mxu0 %v96
    %156 = vmatprep.subr.mxu0 %v100
    %157 = vmatpush1.msra.mxu0 %v99
    %158 = vmatprep.subr.mxu0 %v103
    %159 = vmatpush1.msra.mxu0 %v102
    %160 = vmatprep.subr.mxu0 %v106
    %161 = vmatpush1.msra.mxu0 %v105
    %162 = vmatprep.subr.mxu0 %v109
    %163 = vmatpush1.msra.mxu0 %v108
    %164 = vmatprep.subr.mxu0 %v112
    %165 = vmatpush1.msra.mxu0 %v111
    %166 = vmatprep.subr.mxu0 %v115
    %167 = vmatpush1.msra.mxu0 %v114
    %168 = vmatprep.subr.mxu0 %v118
    %169 = vmatpush1.msra.mxu0 %v117
    %170 = vmatprep.subr.mxu0 %v121
    %171 = vmatpush1.msra.mxu0 %v120
    %172 = vmatprep.subr.mxu0 0.0
    %173 = vmatpush1.msra.mxu0 0.0
    %174 = vmatprep.subr.mxu0 0.0
    %175 = vmatpush1.msra.mxu0 0.0
    %176 = vmatprep.subr.mxu0 0.0
    %177 = vmatpush1.msra.mxu0 0.0
    %178 = vmatprep.subr.mxu0 0.0
    %179 = vmatpush1.msra.mxu0 0.0
    %180 = vmatprep.subr.mxu0 0.0
    %181 = vmatpush1.msra.mxu0 0.0
    %182 = vmatprep.subr.mxu0 0.0
    %183 = vmatpush1.msra.mxu0 0.0
    %184 = vmatprep.subr.mxu0 0.0
    %185 = vmatpush1.msra.mxu0 0.0
    %186 = vmatprep.subr.mxu0 0.0
    %187 = vmatpush1.msra.mxu0 0.0
    %188 = vmatprep.subr.mxu0 0.0
    %189 = vmatpush1.msra.mxu0 0.0
    %190 = vmatprep.subr.mxu0 0.0
    %191 = vmatpush1.msra.mxu0 0.0
    %192 = vmatprep.subr.mxu0 0.0
    %193 = vmatpush1.msra.mxu0 0.0
    %194 = vmatprep.subr.mxu0 0.0
    %195 = vmatpush1.msra.mxu0 0.0
    %196 = vmatprep.subr.mxu0 0.0
    %197 = vmatpush1.msra.mxu0 0.0
    %198 = vmatprep.subr.mxu0 0.0
    %199 = vmatpush1.msra.mxu0 0.0
    %200 = vmatprep.subr.mxu0 0.0
    %201 = vmatpush1.msra.mxu0 0.0
    %202 = vmatprep.subr.mxu0 0.0
    %203 = vmatpush1.msra.mxu0 0.0
    %204 = vmatprep.mubr.f32.mxu0 0.0
    %205 = vmatmul.mubr.f32.gmra.mrb[0].mxu0 %v67
    %v206 = vpop.f32.mrb[0].mxu0
    %v207 = vadd.f32 %v128, %v206
    %v208 = vpop.f32.mrb[0].mxu0
    %v209 = vadd.f32 %v132, %v208
    %210 = vmatprep.mubr.f32.mxu0 0.0
    %211 = vmatmul.mubr.f32.gmra.mrb[0].mxu0 %v68
    %v212 = vpop.f32.mrb[0].mxu0
    %v213 = vadd.f32 %v128, %v212
    %v214 = vpop.f32.mrb[0].mxu0
    %v215 = vadd.f32 %v132, %v214
    %216 = vmatprep.mubr.f32.mxu0 0.0
    %217 = vmatmul.mubr.f32.gmra.mrb[0].mxu0 %v69
    %v218 = vpop.f32.mrb[0].mxu0
    %v219 = vadd.f32 %v128, %v218
    %v220 = vpop.f32.mrb[0].mxu0
    %v221 = vadd.f32 %v132, %v220
    %222 = vmatprep.mubr.f32.mxu0 0.0
    %223 = vmatmul.mubr.f32.gmra.mrb[0].mxu0 %v70
    %v224 = vpop.f32.mrb[0].mxu0
    %v225 = vadd.f32 %v128, %v224
    %v226 = vpop.f32.mrb[0].mxu0
    %v227 = vadd.f32 %v132, %v226
    %228 = vmatprep.mubr.f32.mxu0 0.0
    %229 = vmatmul.mubr.f32.gmra.mrb[0].mxu0 %v71
    %v230 = vpop.f32.mrb[0].mxu0
    %v231 = vadd.f32 %v128, %v230
    %v232 = vpop.f32.mrb[0].mxu0
    %v233 = vadd.f32 %v132, %v232
    %234 = vmatprep.mubr.f32.mxu0 0.0
    %235 = vmatmul.mubr.f32.gmra.mrb[0].mxu0 %v72
    %v236 = vpop.f32.mrb[0].mxu0
    %v237 = vadd.f32 %v128, %v236
    %v238 = vpop.f32.mrb[0].mxu0
    %v239 = vadd.f32 %v132, %v238
    %240 = vmatprep.mubr.f32.mxu0 0.0
    %241 = vmatmul.mubr.f32.gmra.mrb[0].mxu0 %v73
    %v242 = vpop.f32.mrb[0].mxu0
    %v243 = vadd.f32 %v128, %v242
    %v244 = vpop.f32.mrb[0].mxu0
    %v245 = vadd.f32 %v132, %v244
    %246 = vmatprep.mubr.f32.mxu0 0.0
    %247 = vmatmul.mubr.f32.gmra.mrb[0].mxu0 %v74
    %v248 = vpop.f32.mrb[0].mxu0
    %v249 = vadd.f32 %v128, %v248
    %v250 = vpop.f32.mrb[0].mxu0
    %v251 = vadd.f32 %v132, %v250
    %252 = vdwg.mxu0
    %253 = vmatprep.subr.mxu0 0.0
    %254 = vmatpush1.msra.mxu0 %v77
    %255 = vmatprep.subr.mxu0 0.0
    %256 = vmatpush1.msra.mxu0 %v80
    %257 = vmatprep.subr.mxu0 0.0
    %258 = vmatpush1.msra.mxu0 %v83
    %259 = vmatprep.subr.mxu0 0.0
    %260 = vmatpush1.msra.mxu0 %v86
    %261 = vmatprep.subr.mxu0 0.0
    %262 = vmatpush1.msra.mxu0 %v89
    %263 = vmatprep.subr.mxu0 0.0
    %264 = vmatpush1.msra.mxu0 %v92
    %265 = vmatprep.subr.mxu0 0.0
    %266 = vmatpush1.msra.mxu0 %v95
    %267 = vmatprep.subr.mxu0 0.0
    %268 = vmatpush1.msra.mxu0 %v98
    %269 = vmatprep.subr.mxu0 0.0
    %270 = vmatpush1.msra.mxu0 %v101
    %271 = vmatprep.subr.mxu0 0.0
    %272 = vmatpush1.msra.mxu0 %v104
    %273 = vmatprep.subr.mxu0 0.0
    %274 = vmatpush1.msra.mxu0 %v107
    %275 = vmatprep.subr.mxu0 0.0
    %276 = vmatpush1.msra.mxu0 %v110
    %277 = vmatprep.subr.mxu0 0.0
    %278 = vmatpush1.msra.mxu0 %v113
    %279 = vmatprep.subr.mxu0 0.0
    %280 = vmatpush1.msra.mxu0 %v116
    %281 = vmatprep.subr.mxu0 0.0
    %282 = vmatpush1.msra.mxu0 %v119
    %283 = vmatprep.subr.mxu0 0.0
    %284 = vmatpush1.msra.mxu0 %v122
    %285 = vmatprep.subr.mxu0 0.0
    %286 = vmatpush1.msra.mxu0 0.0
    %287 = vmatprep.subr.mxu0 0.0
    %288 = vmatpush1.msra.mxu0 0.0
    %289 = vmatprep.subr.mxu0 0.0
    %290 = vmatpush1.msra.mxu0 0.0
    %291 = vmatprep.subr.mxu0 0.0
    %292 = vmatpush1.msra.mxu0 0.0
    %293 = vmatprep.subr.mxu0 0.0
    %294 = vmatpush1.msra.mxu0 0.0
    %295 = vmatprep.subr.mxu0 0.0
    %296 = vmatpush1.msra.mxu0 0.0
    %297 = vmatprep.subr.mxu0 0.0
    %298 = vmatpush1.msra.mxu0 0.0
    %299 = vmatprep.subr.mxu0 0.0
    %300 = vmatpush1.msra.mxu0 0.0
    %301 = vmatprep.subr.mxu0 0.0
    %302 = vmatpush1.msra.mxu0 0.0
    %303 = vmatprep.subr.mxu0 0.0
    %304 = vmatpush1.msra.mxu0 0.0
    %305 = vmatprep.subr.mxu0 0.0
    %306 = vmatpush1.msra.mxu0 0.0
    %307 = vmatprep.subr.mxu0 0.0
    %308 = vmatpush1.msra.mxu0 0.0
    %309 = vmatprep.subr.mxu0 0.0
    %310 = vmatpush1.msra.mxu0 0.0
    %311 = vmatprep.subr.mxu0 0.0
    %312 = vmatpush1.msra.mxu0 0.0
    %313 = vmatprep.subr.mxu0 0.0
    %314 = vmatpush1.msra.mxu0 0.0
    %315 = vmatprep.subr.mxu0 0.0
    %316 = vmatpush1.msra.mxu0 0.0
    %317 = vmatprep.mubr.f32.mxu0 0.0
    %318 = vmatmul.mubr.f32.gmra.mrb[0].mxu0 %v67
    %v319 = vpop.f32.mrb[0].mxu0
    %v320 = vadd.f32 %v136, %v319
    %v321 = vpop.f32.mrb[0].mxu0
    %322 = vmatprep.mubr.f32.mxu0 0.0
    %323 = vmatmul.mubr.f32.gmra.mrb[0].mxu0 %v68
    %v324 = vpop.f32.mrb[0].mxu0
    %v325 = vadd.f32 %v136, %v324
    %v326 = vpop.f32.mrb[0].mxu0
    %327 = vmatprep.mubr.f32.mxu0 0.0
    %328 = vmatmul.mubr.f32.gmra.mrb[0].mxu0 %v69
    %v329 = vpop.f32.mrb[0].mxu0
    %v330 = vadd.f32 %v136, %v329
    %v331 = vpop.f32.mrb[0].mxu0
    %332 = vmatprep.mubr.f32.mxu0 0.0
    %333 = vmatmul.mubr.f32.gmra.mrb[0].mxu0 %v70
    %v334 = vpop.f32.mrb[0].mxu0
    %v335 = vadd.f32 %v136, %v334
    %v336 = vpop.f32.mrb[0].mxu0
    %337 = vmatprep.mubr.f32.mxu0 0.0
    %338 = vmatmul.mubr.f32.gmra.mrb[0].mxu0 %v71
    %v339 = vpop.f32.mrb[0].mxu0
    %v340 = vadd.f32 %v136, %v339
    %v341 = vpop.f32.mrb[0].mxu0
    %342 = vmatprep.mubr.f32.mxu0 0.0
    %343 = vmatmul.mubr.f32.gmra.mrb[0].mxu0 %v72
    %v344 = vpop.f32.mrb[0].mxu0
    %v345 = vadd.f32 %v136, %v344
    %v346 = vpop.f32.mrb[0].mxu0
    %347 = vmatprep.mubr.f32.mxu0 0.0
    %348 = vmatmul.mubr.f32.gmra.mrb[0].mxu0 %v73
    %v349 = vpop.f32.mrb[0].mxu0
    %v350 = vadd.f32 %v136, %v349
    %v351 = vpop.f32.mrb[0].mxu0
    %352 = vmatprep.mubr.f32.mxu0 0.0
    %353 = vmatmul.mubr.f32.gmra.mrb[0].mxu0 %v74
    %v354 = vpop.f32.mrb[0].mxu0
    %v355 = vadd.f32 %v136, %v354
    %v356 = vpop.f32.mrb[0].mxu0
    %357 = vdwg.mxu0
    %358 = vst [vmem:[#allocation2] sm:$0xff] %v207
    %359 = vst [vmem:[#allocation2 + $0x8] sm:$0xff] %v209
    %360 = vst [vmem:[#allocation2 + $0x10] sm:$0xff] %v320
    %361 = vst [vmem:[#allocation2 + $0x18] sm:$0xff] %v213
    %362 = vst [vmem:[#allocation2 + $0x20] sm:$0xff] %v215
    %363 = vst [vmem:[#allocation2 + $0x28] sm:$0xff] %v325
    %364 = vst [vmem:[#allocation2 + $0x30] sm:$0xff] %v219
    %365 = vst [vmem:[#allocation2 + $0x38] sm:$0xff] %v221
    %366 = vst [vmem:[#allocation2 + $0x40] sm:$0xff] %v330
    %367 = vst [vmem:[#allocation2 + $0x48] sm:$0xff] %v225
    %368 = vst [vmem:[#allocation2 + $0x50] sm:$0xff] %v227
    %369 = vst [vmem:[#allocation2 + $0x58] sm:$0xff] %v335
    %370 = vst [vmem:[#allocation2 + $0x60] sm:$0xff] %v231
    %371 = vst [vmem:[#allocation2 + $0x68] sm:$0xff] %v233
    %372 = vst [vmem:[#allocation2 + $0x70] sm:$0xff] %v340
    %373 = vst [vmem:[#allocation2 + $0x78] sm:$0xff] %v237
    %374 = vst [vmem:[#allocation2 + $0x80] sm:$0xff] %v239
    %375 = vst [vmem:[#allocation2 + $0x88] sm:$0xff] %v345
    %376 = vst [vmem:[#allocation2 + $0x90] sm:$0xff] %v243
    %377 = vst [vmem:[#allocation2 + $0x98] sm:$0xff] %v245
    %378 = vst [vmem:[#allocation2 + $0xa0] sm:$0xff] %v350
    %379 = vst [vmem:[#allocation2 + $0xa8] sm:$0xff] %v249
    %380 = vst [vmem:[#allocation2 + $0xb0] sm:$0xff] %v251
    %381 = vst [vmem:[#allocation2 + $0xb8] sm:$0xff] %v355
    %v382 = vld [vmem:[#allocation9] sm:$0xff]
    %v383 = vld [vmem:[#allocation9 + $0x8] sm:$0xff]
    %v384 = vld [vmem:[#allocation9 + $0x10] sm:$0xff]
    %v385 = vld [vmem:[#allocation9 + $0x18] sm:$0xff]
    %v386 = vld [vmem:[#allocation9 + $0x20] sm:$0xff]
    %v387 = vld [vmem:[#allocation9 + $0x28] sm:$0xff]
    %v388 = vld [vmem:[#allocation9 + $0x30] sm:$0xff]
    %v389 = vld [vmem:[#allocation9 + $0x38] sm:$0xff]
    %v390 = vld [vmem:[#allocation9 + $0x40] sm:$0xff]
    %v391 = vld [vmem:[#allocation9 + $0x48] sm:$0xff]
    %v392 = vld [vmem:[#allocation9 + $0x50] sm:$0xff]
    %v393 = vld [vmem:[#allocation9 + $0x58] sm:$0xff]
    %v394 = vld [vmem:[#allocation9 + $0x60] sm:$0xff]
    %v395 = vld [vmem:[#allocation9 + $0x68] sm:$0xff]
    %v396 = vld [vmem:[#allocation9 + $0x70] sm:$0xff]
    %v397 = vld [vmem:[#allocation9 + $0x78] sm:$0xff]
    %v398 = vld [vmem:[#allocation9 + $0x80] sm:$0xff]
    %v399 = vld [vmem:[#allocation9 + $0x88] sm:$0xff]
    %v400 = vld [vmem:[#allocation9 + $0x90] sm:$0xff]
    %v401 = vld [vmem:[#allocation9 + $0x98] sm:$0xff]
    %v402 = vld [vmem:[#allocation9 + $0xa0] sm:$0xff]
    %v403 = vld [vmem:[#allocation9 + $0xa8] sm:$0xff]
    %v404 = vld [vmem:[#allocation9 + $0xb0] sm:$0xff]
    %v405 = vld [vmem:[#allocation9 + $0xb8] sm:$0xff]
    %v406 = vld [vmem:[#allocation9 + $0xc0] sm:$0xff]
    %v407 = vld [vmem:[#allocation9 + $0xc8] sm:$0xff]
    %v408 = vld [vmem:[#allocation9 + $0xd0] sm:$0xff]
    %v409 = vld [vmem:[#allocation9 + $0xd8] sm:$0xff]
    %v410 = vld [vmem:[#allocation9 + $0xe0] sm:$0xff]
    %v411 = vld [vmem:[#allocation9 + $0xe8] sm:$0xff]
    %v412 = vld [vmem:[#allocation9 + $0xf0] sm:$0xff]
    %v413 = vld [vmem:[#allocation9 + $0xf8] sm:$0xff]
    %v414 = vld [vmem:[#allocation9 + $0x100] sm:$0xff]
    %v415 = vld [vmem:[#allocation9 + $0x108] sm:$0xff]
    %v416 = vld [vmem:[#allocation9 + $0x110] sm:$0xff]
    %v417 = vld [vmem:[#allocation9 + $0x118] sm:$0xff]
    %v418 = vld [vmem:[#allocation9 + $0x120] sm:$0xff]
    %v419 = vld [vmem:[#allocation9 + $0x128] sm:$0xff]
    %v420 = vld [vmem:[#allocation9 + $0x130] sm:$0xff]
    %v421 = vld [vmem:[#allocation9 + $0x138] sm:$0xff]
    %v422 = vld [vmem:[#allocation9 + $0x140] sm:$0xff]
    %v423 = vld [vmem:[#allocation9 + $0x148] sm:$0xff]
    %v424 = vld [vmem:[#allocation9 + $0x150] sm:$0xff]
    %v425 = vld [vmem:[#allocation9 + $0x158] sm:$0xff]
    %v426 = vld [vmem:[#allocation9 + $0x160] sm:$0xff]
    %v427 = vld [vmem:[#allocation9 + $0x168] sm:$0xff]
    %v428 = vld [vmem:[#allocation9 + $0x170] sm:$0xff]
    %v429 = vld [vmem:[#allocation9 + $0x178] sm:$0xff]
    %v430 = vld [vmem:[%s4] sm:$0x1]
    %v432 = vlaneseq
    %v433 = vshrl.u32 %v432, 7
    %v434 = vsub.s32 0, %v433
    %v435 = vrot.slane %v430, %v434
    %v437 = vld [vmem:[#allocation3] sm:$0xff]
    %v438 = vld [vmem:[#allocation2] sm:$0xff]
    %v439 = vld [vmem:[#allocation2 + $0x8] sm:$0xff]
    %v440 = vld [vmem:[#allocation2 + $0x10] sm:$0xff]
    %441 = vmatprep.subr.mxu0 %v383
    %442 = vmatpush1.msra.mxu0 %v382
    %443 = vmatprep.subr.mxu0 %v386
    %444 = vmatpush1.msra.mxu0 %v385
    %445 = vmatprep.subr.mxu0 %v389
    %446 = vmatpush1.msra.mxu0 %v388
    %447 = vmatprep.subr.mxu0 %v392
    %448 = vmatpush1.msra.mxu0 %v391
    %449 = vmatprep.subr.mxu0 %v395
    %450 = vmatpush1.msra.mxu0 %v394
    %451 = vmatprep.subr.mxu0 %v398
    %452 = vmatpush1.msra.mxu0 %v397
    %453 = vmatprep.subr.mxu0 %v401
    %454 = vmatpush1.msra.mxu0 %v400
    %455 = vmatprep.subr.mxu0 %v404
    %456 = vmatpush1.msra.mxu0 %v403
    %457 = vmatprep.subr.mxu0 %v407
    %458 = vmatpush1.msra.mxu0 %v406
    %459 = vmatprep.subr.mxu0 %v410
    %460 = vmatpush1.msra.mxu0 %v409
    %461 = vmatprep.subr.mxu0 %v413
    %462 = vmatpush1.msra.mxu0 %v412
    %463 = vmatprep.subr.mxu0 %v416
    %464 = vmatpush1.msra.mxu0 %v415
    %465 = vmatprep.subr.mxu0 %v419
    %466 = vmatpush1.msra.mxu0 %v418
    %467 = vmatprep.subr.mxu0 %v422
    %468 = vmatpush1.msra.mxu0 %v421
    %469 = vmatprep.subr.mxu0 %v425
    %470 = vmatpush1.msra.mxu0 %v424
    %471 = vmatprep.subr.mxu0 %v428
    %472 = vmatpush1.msra.mxu0 %v427
    %473 = vmatprep.subr.mxu0 0.0
    %474 = vmatpush1.msra.mxu0 0.0
    %475 = vmatprep.subr.mxu0 0.0
    %476 = vmatpush1.msra.mxu0 0.0
    %477 = vmatprep.subr.mxu0 0.0
    %478 = vmatpush1.msra.mxu0 0.0
    %479 = vmatprep.subr.mxu0 0.0
    %480 = vmatpush1.msra.mxu0 0.0
    %481 = vmatprep.subr.mxu0 0.0
    %482 = vmatpush1.msra.mxu0 0.0
    %483 = vmatprep.subr.mxu0 0.0
    %484 = vmatpush1.msra.mxu0 0.0
    %485 = vmatprep.subr.mxu0 0.0
    %486 = vmatpush1.msra.mxu0 0.0
    %487 = vmatprep.subr.mxu0 0.0
    %488 = vmatpush1.msra.mxu0 0.0
    %489 = vmatprep.subr.mxu0 0.0
    %490 = vmatpush1.msra.mxu0 0.0
    %491 = vmatprep.subr.mxu0 0.0
    %492 = vmatpush1.msra.mxu0 0.0
    %493 = vmatprep.subr.mxu0 0.0
    %494 = vmatpush1.msra.mxu0 0.0
    %495 = vmatprep.subr.mxu0 0.0
    %496 = vmatpush1.msra.mxu0 0.0
    %497 = vmatprep.subr.mxu0 0.0
    %498 = vmatpush1.msra.mxu0 0.0
    %499 = vmatprep.subr.mxu0 0.0
    %500 = vmatpush1.msra.mxu0 0.0
    %501 = vmatprep.subr.mxu0 0.0
    %502 = vmatpush1.msra.mxu0 0.0
    %503 = vmatprep.subr.mxu0 0.0
    %504 = vmatpush1.msra.mxu0 0.0
    %505 = vmatprep.mubr.f32.mxu0 0.0
    %506 = vmatmul.mubr.f32.gmra.mrb[0].mxu0 %v437
    %v507 = vpop.f32.mrb[0].mxu0
    %v508 = vadd.f32 0.0, %v507
    %v509 = vpop.f32.mrb[0].mxu0
    %v510 = vadd.f32 0.0, %v509
    %511 = vdwg.mxu0
    %v512 = vadd.f32 %v438, %v508
    %v513 = vxor.u32 %v512, 2147483648
    %v514 = vmul.f32 %v513, 1.442695
    %v515 = vpow.pop %v514
    %v516 = vadd.f32 %v515, 1.0
    %v517 = vrcp.pop %v516
    %v518 = vmul.f32 1.0, %v517
    %v519 = vadd.f32 %v439, %v510
    %v520 = vxor.u32 %v519, 2147483648
    %v521 = vmul.f32 %v520, 1.442695
    %v522 = vpow.pop %v521
    %v523 = vadd.f32 %v522, 1.0
    %v524 = vrcp.pop %v523
    %v525 = vmul.f32 1.0, %v524
    %526 = vmatprep.subr.mxu0 0.0
    %527 = vmatpush1.msra.mxu0 %v384
    %528 = vmatprep.subr.mxu0 0.0
    %529 = vmatpush1.msra.mxu0 %v387
    %530 = vmatprep.subr.mxu0 0.0
    %531 = vmatpush1.msra.mxu0 %v390
    %532 = vmatprep.subr.mxu0 0.0
    %533 = vmatpush1.msra.mxu0 %v393
    %534 = vmatprep.subr.mxu0 0.0
    %535 = vmatpush1.msra.mxu0 %v396
    %536 = vmatprep.subr.mxu0 0.0
    %537 = vmatpush1.msra.mxu0 %v399
    %538 = vmatprep.subr.mxu0 0.0
    %539 = vmatpush1.msra.mxu0 %v402
    %540 = vmatprep.subr.mxu0 0.0
    %541 = vmatpush1.msra.mxu0 %v405
    %542 = vmatprep.subr.mxu0 0.0
    %543 = vmatpush1.msra.mxu0 %v408
    %544 = vmatprep.subr.mxu0 0.0
    %545 = vmatpush1.msra.mxu0 %v411
    %546 = vmatprep.subr.mxu0 0.0
    %547 = vmatpush1.msra.mxu0 %v414
    %548 = vmatprep.subr.mxu0 0.0
    %549 = vmatpush1.msra.mxu0 %v417
    %550 = vmatprep.subr.mxu0 0.0
    %551 = vmatpush1.msra.mxu0 %v420
    %552 = vmatprep.subr.mxu0 0.0
    %553 = vmatpush1.msra.mxu0 %v423
    %554 = vmatprep.subr.mxu0 0.0
    %555 = vmatpush1.msra.mxu0 %v426
    %556 = vmatprep.subr.mxu0 0.0
    %557 = vmatpush1.msra.mxu0 %v429
    %558 = vmatprep.subr.mxu0 0.0
    %559 = vmatpush1.msra.mxu0 0.0
    %560 = vmatprep.subr.mxu0 0.0
    %561 = vmatpush1.msra.mxu0 0.0
    %562 = vmatprep.subr.mxu0 0.0
    %563 = vmatpush1.msra.mxu0 0.0
    %564 = vmatprep.subr.mxu0 0.0
    %565 = vmatpush1.msra.mxu0 0.0
    %566 = vmatprep.subr.mxu0 0.0
    %567 = vmatpush1.msra.mxu0 0.0
    %568 = vmatprep.subr.mxu0 0.0
    %569 = vmatpush1.msra.mxu0 0.0
    %570 = vmatprep.subr.mxu0 0.0
    %571 = vmatpush1.msra.mxu0 0.0
    %572 = vmatprep.subr.mxu0 0.0
    %573 = vmatpush1.msra.mxu0 0.0
    %574 = vmatprep.subr.mxu0 0.0
    %575 = vmatpush1.msra.mxu0 0.0
    %576 = vmatprep.subr.mxu0 0.0
    %577 = vmatpush1.msra.mxu0 0.0
    %578 = vmatprep.subr.mxu0 0.0
    %579 = vmatpush1.msra.mxu0 0.0
    %580 = vmatprep.subr.mxu0 0.0
    %581 = vmatpush1.msra.mxu0 0.0
    %582 = vmatprep.subr.mxu0 0.0
    %583 = vmatpush1.msra.mxu0 0.0
    %584 = vmatprep.subr.mxu0 0.0
    %585 = vmatpush1.msra.mxu0 0.0
    %586 = vmatprep.subr.mxu0 0.0
    %587 = vmatpush1.msra.mxu0 0.0
    %588 = vmatprep.subr.mxu0 0.0
    %589 = vmatpush1.msra.mxu0 0.0
    %590 = vmatprep.mubr.f32.mxu0 0.0
    %591 = vmatmul.mubr.f32.gmra.mrb[0].mxu0 %v437
    %v592 = vpop.f32.mrb[0].mxu0
    %v593 = vadd.f32 %v435, %v592
    %v594 = vpop.f32.mrb[0].mxu0
    %595 = vdwg.mxu0
    %v596 = vmul.f32 %v518, %v593
    %v597 = vadd.f32 %v440, %v596
    %v598 = vtanh.pop %v597
    %v599 = vsub.f32 1.0, %v525
    %v600 = vmul.f32 %v599, %v598
    %v601 = vmul.f32 %v525, %v437
    %v602 = vadd.f32 %v600, %v601
    %s603 = scalar_lea.vmem [#allocation2], 24
    %v604 = vld [vmem:[%s603] sm:$0xff]
    %v605 = vld [vmem:[%s603 + $0x8] sm:$0xff]
    %v606 = vld [vmem:[%s603 + $0x10] sm:$0xff]
    %607 = vmatprep.subr.mxu0 %v383
    %608 = vmatpush1.msra.mxu0 %v382
    %609 = vmatprep.subr.mxu0 %v386
    %610 = vmatpush1.msra.mxu0 %v385
    %611 = vmatprep.subr.mxu0 %v389
    %612 = vmatpush1.msra.mxu0 %v388
    %613 = vmatprep.subr.mxu0 %v392
    %614 = vmatpush1.msra.mxu0 %v391
    %615 = vmatprep.subr.mxu0 %v395
    %616 = vmatpush1.msra.mxu0 %v394
    %617 = vmatprep.subr.mxu0 %v398
    %618 = vmatpush1.msra.mxu0 %v397
    %619 = vmatprep.subr.mxu0 %v401
    %620 = vmatpush1.msra.mxu0 %v400
    %621 = vmatprep.subr.mxu0 %v404
    %622 = vmatpush1.msra.mxu0 %v403
    %623 = vmatprep.subr.mxu0 %v407
    %624 = vmatpush1.msra.mxu0 %v406
    %625 = vmatprep.subr.mxu0 %v410
    %626 = vmatpush1.msra.mxu0 %v409
    %627 = vmatprep.subr.mxu0 %v413
    %628 = vmatpush1.msra.mxu0 %v412
    %629 = vmatprep.subr.mxu0 %v416
    %630 = vmatpush1.msra.mxu0 %v415
    %631 = vmatprep.subr.mxu0 %v419
    %632 = vmatpush1.msra.mxu0 %v418
    %633 = vmatprep.subr.mxu0 %v422
    %634 = vmatpush1.msra.mxu0 %v421
    %635 = vmatprep.subr.mxu0 %v425
    %636 = vmatpush1.msra.mxu0 %v424
    %637 = vmatprep.subr.mxu0 %v428
    %638 = vmatpush1.msra.mxu0 %v427
    %639 = vmatprep.subr.mxu0 0.0
    %640 = vmatpush1.msra.mxu0 0.0
    %641 = vmatprep.subr.mxu0 0.0
    %642 = vmatpush1.msra.mxu0 0.0
    %643 = vmatprep.subr.mxu0 0.0
    %644 = vmatpush1.msra.mxu0 0.0
    %645 = vmatprep.subr.mxu0 0.0
    %646 = vmatpush1.msra.mxu0 0.0
    %647 = vmatprep.subr.mxu0 0.0
    %648 = vmatpush1.msra.mxu0 0.0
    %649 = vmatprep.subr.mxu0 0.0
    %650 = vmatpush1.msra.mxu0 0.0
    %651 = vmatprep.subr.mxu0 0.0
    %652 = vmatpush1.msra.mxu0 0.0
    %653 = vmatprep.subr.mxu0 0.0
    %654 = vmatpush1.msra.mxu0 0.0
    %655 = vmatprep.subr.mxu0 0.0
    %656 = vmatpush1.msra.mxu0 0.0
    %657 = vmatprep.subr.mxu0 0.0
    %658 = vmatpush1.msra.mxu0 0.0
    %659 = vmatprep.subr.mxu0 0.0
    %660 = vmatpush1.msra.mxu0 0.0
    %661 = vmatprep.subr.mxu0 0.0
    %662 = vmatpush1.msra.mxu0 0.0
    %663 = vmatprep.subr.mxu0 0.0
    %664 = vmatpush1.msra.mxu0 0.0
    %665 = vmatprep.subr.mxu0 0.0
    %666 = vmatpush1.msra.mxu0 0.0
    %667 = vmatprep.subr.mxu0 0.0
    %668 = vmatpush1.msra.mxu0 0.0
    %669 = vmatprep.subr.mxu0 0.0
    %670 = vmatpush1.msra.mxu0 0.0
    %671 = vmatprep.mubr.f32.mxu0 0.0
    %672 = vmatmul.mubr.f32.gmra.mrb[0].mxu0 %v602
    %v673 = vpop.f32.mrb[0].mxu0
    %v674 = vadd.f32 0.0, %v673
    %v675 = vpop.f32.mrb[0].mxu0
    %v676 = vadd.f32 0.0, %v675
    %677 = vdwg.mxu0
    %v678 = vadd.f32 %v604, %v674
    %v679 = vxor.u32 %v678, 2147483648
    %v680 = vmul.f32 %v679, 1.442695
    %v681 = vpow.pop %v680
    %v682 = vadd.f32 %v681, 1.0
    %v683 = vrcp.pop %v682
    %v684 = vmul.f32 1.0, %v683
    %v685 = vadd.f32 %v605, %v676
    %v686 = vxor.u32 %v685, 2147483648
    %v687 = vmul.f32 %v686, 1.442695
    %v688 = vpow.pop %v687
    %v689 = vadd.f32 %v688, 1.0
    %v690 = vrcp.pop %v689
    %v691 = vmul.f32 1.0, %v690
    %692 = vmatprep.subr.mxu0 0.0
    %693 = vmatpush1.msra.mxu0 %v384
    %694 = vmatprep.subr.mxu0 0.0
    %695 = vmatpush1.msra.mxu0 %v387
    %696 = vmatprep.subr.mxu0 0.0
    %697 = vmatpush1.msra.mxu0 %v390
    %698 = vmatprep.subr.mxu0 0.0
    %699 = vmatpush1.msra.mxu0 %v393
    %700 = vmatprep.subr.mxu0 0.0
    %701 = vmatpush1.msra.mxu0 %v396
    %702 = vmatprep.subr.mxu0 0.0
    %703 = vmatpush1.msra.mxu0 %v399
    %704 = vmatprep.subr.mxu0 0.0
    %705 = vmatpush1.msra.mxu0 %v402
    %706 = vmatprep.subr.mxu0 0.0
    %707 = vmatpush1.msra.mxu0 %v405
    %708 = vmatprep.subr.mxu0 0.0
    %709 = vmatpush1.msra.mxu0 %v408
    %710 = vmatprep.subr.mxu0 0.0
    %711 = vmatpush1.msra.mxu0 %v411
    %712 = vmatprep.subr.mxu0 0.0
    %713 = vmatpush1.msra.mxu0 %v414
    %714 = vmatprep.subr.mxu0 0.0
    %715 = vmatpush1.msra.mxu0 %v417
    %716 = vmatprep.subr.mxu0 0.0
    %717 = vmatpush1.msra.mxu0 %v420
    %718 = vmatprep.subr.mxu0 0.0
    %719 = vmatpush1.msra.mxu0 %v423
    %720 = vmatprep.subr.mxu0 0.0
    %721 = vmatpush1.msra.mxu0 %v426
    %722 = vmatprep.subr.mxu0 0.0
    %723 = vmatpush1.msra.mxu0 %v429
    %724 = vmatprep.subr.mxu0 0.0
    %725 = vmatpush1.msra.mxu0 0.0
    %726 = vmatprep.subr.mxu0 0.0
    %727 = vmatpush1.msra.mxu0 0.0
    %728 = vmatprep.subr.mxu0 0.0
    %729 = vmatpush1.msra.mxu0 0.0
    %730 = vmatprep.subr.mxu0 0.0
    %731 = vmatpush1.msra.mxu0 0.0
    %732 = vmatprep.subr.mxu0 0.0
    %733 = vmatpush1.msra.mxu0 0.0
    %734 = vmatprep.subr.mxu0 0.0
    %735 = vmatpush1.msra.mxu0 0.0
    %736 = vmatprep.subr.mxu0 0.0
    %737 = vmatpush1.msra.mxu0 0.0
    %738 = vmatprep.subr.mxu0 0.0
    %739 = vmatpush1.msra.mxu0 0.0
    %740 = vmatprep.subr.mxu0 0.0
    %741 = vmatpush1.msra.mxu0 0.0
    %742 = vmatprep.subr.mxu0 0.0
    %743 = vmatpush1.msra.mxu0 0.0
    %744 = vmatprep.subr.mxu0 0.0
    %745 = vmatpush1.msra.mxu0 0.0
    %746 = vmatprep.subr.mxu0 0.0
    %747 = vmatpush1.msra.mxu0 0.0
    %748 = vmatprep.subr.mxu0 0.0
    %749 = vmatpush1.msra.mxu0 0.0
    %750 = vmatprep.subr.mxu0 0.0
    %751 = vmatpush1.msra.mxu0 0.0
    %752 = vmatprep.subr.mxu0 0.0
    %753 = vmatpush1.msra.mxu0 0.0
    %754 = vmatprep.subr.mxu0 0.0
    %755 = vmatpush1.msra.mxu0 0.0
    %756 = vmatprep.mubr.f32.mxu0 0.0
    %757 = vmatmul.mubr.f32.gmra.mrb[0].mxu0 %v602
    %v758 = vpop.f32.mrb[0].mxu0
    %v759 = vadd.f32 %v435, %v758
    %v760 = vpop.f32.mrb[0].mxu0
    %761 = vdwg.mxu0
    %v762 = vmul.f32 %v684, %v759
    %v763 = vadd.f32 %v606, %v762
    %v764 = vtanh.pop %v763
    %v765 = vsub.f32 1.0, %v691
    %v766 = vmul.f32 %v765, %v764
    %v767 = vmul.f32 %v691, %v602
    %v768 = vadd.f32 %v766, %v767
    %s769 = scalar_lea.vmem [#allocation2], 48
    %v770 = vld [vmem:[%s769] sm:$0xff]
    %v771 = vld [vmem:[%s769 + $0x8] sm:$0xff]
    %v772 = vld [vmem:[%s769 + $0x10] sm:$0xff]
    %773 = vmatprep.subr.mxu0 %v383
    %774 = vmatpush1.msra.mxu0 %v382
    %775 = vmatprep.subr.mxu0 %v386
    %776 = vmatpush1.msra.mxu0 %v385
    %777 = vmatprep.subr.mxu0 %v389
    %778 = vmatpush1.msra.mxu0 %v388
    %779 = vmatprep.subr.mxu0 %v392
    %780 = vmatpush1.msra.mxu0 %v391
    %781 = vmatprep.subr.mxu0 %v395
    %782 = vmatpush1.msra.mxu0 %v394
    %783 = vmatprep.subr.mxu0 %v398
    %784 = vmatpush1.msra.mxu0 %v397
    %785 = vmatprep.subr.mxu0 %v401
    %786 = vmatpush1.msra.mxu0 %v400
    %787 = vmatprep.subr.mxu0 %v404
    %788 = vmatpush1.msra.mxu0 %v403
    %789 = vmatprep.subr.mxu0 %v407
    %790 = vmatpush1.msra.mxu0 %v406
    %791 = vmatprep.subr.mxu0 %v410
    %792 = vmatpush1.msra.mxu0 %v409
    %793 = vmatprep.subr.mxu0 %v413
    %794 = vmatpush1.msra.mxu0 %v412
    %795 = vmatprep.subr.mxu0 %v416
    %796 = vmatpush1.msra.mxu0 %v415
    %797 = vmatprep.subr.mxu0 %v419
    %798 = vmatpush1.msra.mxu0 %v418
    %799 = vmatprep.subr.mxu0 %v422
    %800 = vmatpush1.msra.mxu0 %v421
    %801 = vmatprep.subr.mxu0 %v425
    %802 = vmatpush1.msra.mxu0 %v424
    %803 = vmatprep.subr.mxu0 %v428
    %804 = vmatpush1.msra.mxu0 %v427
    %805 = vmatprep.subr.mxu0 0.0
    %806 = vmatpush1.msra.mxu0 0.0
    %807 = vmatprep.subr.mxu0 0.0
    %808 = vmatpush1.msra.mxu0 0.0
    %809 = vmatprep.subr.mxu0 0.0
    %810 = vmatpush1.msra.mxu0 0.0
    %811 = vmatprep.subr.mxu0 0.0
    %812 = vmatpush1.msra.mxu0 0.0
    %813 = vmatprep.subr.mxu0 0.0
    %814 = vmatpush1.msra.mxu0 0.0
    %815 = vmatprep.subr.mxu0 0.0
    %816 = vmatpush1.msra.mxu0 0.0
    %817 = vmatprep.subr.mxu0 0.0
    %818 = vmatpush1.msra.mxu0 0.0
    %819 = vmatprep.subr.mxu0 0.0
    %820 = vmatpush1.msra.mxu0 0.0
    %821 = vmatprep.subr.mxu0 0.0
    %822 = vmatpush1.msra.mxu0 0.0
    %823 = vmatprep.subr.mxu0 0.0
    %824 = vmatpush1.msra.mxu0 0.0
    %825 = vmatprep.subr.mxu0 0.0
    %826 = vmatpush1.msra.mxu0 0.0
    %827 = vmatprep.subr.mxu0 0.0
    %828 = vmatpush1.msra.mxu0 0.0
    %829 = vmatprep.subr.mxu0 0.0
    %830 = vmatpush1.msra.mxu0 0.0
    %831 = vmatprep.subr.mxu0 0.0
    %832 = vmatpush1.msra.mxu0 0.0
    %833 = vmatprep.subr.mxu0 0.0
    %834 = vmatpush1.msra.mxu0 0.0
    %835 = vmatprep.subr.mxu0 0.0
    %836 = vmatpush1.msra.mxu0 0.0
    %837 = vmatprep.mubr.f32.mxu0 0.0
    %838 = vmatmul.mubr.f32.gmra.mrb[0].mxu0 %v768
    %v839 = vpop.f32.mrb[0].mxu0
    %v840 = vadd.f32 0.0, %v839
    %v841 = vpop.f32.mrb[0].mxu0
    %v842 = vadd.f32 0.0, %v841
    %843 = vdwg.mxu0
    %v844 = vadd.f32 %v770, %v840
    %v845 = vxor.u32 %v844, 2147483648
    %v846 = vmul.f32 %v845, 1.442695
    %v847 = vpow.pop %v846
    %v848 = vadd.f32 %v847, 1.0
    %v849 = vrcp.pop %v848
    %v850 = vmul.f32 1.0, %v849
    %v851 = vadd.f32 %v771, %v842
    %v852 = vxor.u32 %v851, 2147483648
    %v853 = vmul.f32 %v852, 1.442695
    %v854 = vpow.pop %v853
    %v855 = vadd.f32 %v854, 1.0
    %v856 = vrcp.pop %v855
    %v857 = vmul.f32 1.0, %v856
    %858 = vmatprep.subr.mxu0 0.0
    %859 = vmatpush1.msra.mxu0 %v384
    %860 = vmatprep.subr.mxu0 0.0
    %861 = vmatpush1.msra.mxu0 %v387
    %862 = vmatprep.subr.mxu0 0.0
    %863 = vmatpush1.msra.mxu0 %v390
    %864 = vmatprep.subr.mxu0 0.0
    %865 = vmatpush1.msra.mxu0 %v393
    %866 = vmatprep.subr.mxu0 0.0
    %867 = vmatpush1.msra.mxu0 %v396
    %868 = vmatprep.subr.mxu0 0.0
    %869 = vmatpush1.msra.mxu0 %v399
    %870 = vmatprep.subr.mxu0 0.0
    %871 = vmatpush1.msra.mxu0 %v402
    %872 = vmatprep.subr.mxu0 0.0
    %873 = vmatpush1.msra.mxu0 %v405
    %874 = vmatprep.subr.mxu0 0.0
    %875 = vmatpush1.msra.mxu0 %v408
    %876 = vmatprep.subr.mxu0 0.0
    %877 = vmatpush1.msra.mxu0 %v411
    %878 = vmatprep.subr.mxu0 0.0
    %879 = vmatpush1.msra.mxu0 %v414
    %880 = vmatprep.subr.mxu0 0.0
    %881 = vmatpush1.msra.mxu0 %v417
    %882 = vmatprep.subr.mxu0 0.0
    %883 = vmatpush1.msra.mxu0 %v420
    %884 = vmatprep.subr.mxu0 0.0
    %885 = vmatpush1.msra.mxu0 %v423
    %886 = vmatprep.subr.mxu0 0.0
    %887 = vmatpush1.msra.mxu0 %v426
    %888 = vmatprep.subr.mxu0 0.0
    %889 = vmatpush1.msra.mxu0 %v429
    %890 = vmatprep.subr.mxu0 0.0
    %891 = vmatpush1.msra.mxu0 0.0
    %892 = vmatprep.subr.mxu0 0.0
    %893 = vmatpush1.msra.mxu0 0.0
    %894 = vmatprep.subr.mxu0 0.0
    %895 = vmatpush1.msra.mxu0 0.0
    %896 = vmatprep.subr.mxu0 0.0
    %897 = vmatpush1.msra.mxu0 0.0
    %898 = vmatprep.subr.mxu0 0.0
    %899 = vmatpush1.msra.mxu0 0.0
    %900 = vmatprep.subr.mxu0 0.0
    %901 = vmatpush1.msra.mxu0 0.0
    %902 = vmatprep.subr.mxu0 0.0
    %903 = vmatpush1.msra.mxu0 0.0
    %904 = vmatprep.subr.mxu0 0.0
    %905 = vmatpush1.msra.mxu0 0.0
    %906 = vmatprep.subr.mxu0 0.0
    %907 = vmatpush1.msra.mxu0 0.0
    %908 = vmatprep.subr.mxu0 0.0
    %909 = vmatpush1.msra.mxu0 0.0
    %910 = vmatprep.subr.mxu0 0.0
    %911 = vmatpush1.msra.mxu0 0.0
    %912 = vmatprep.subr.mxu0 0.0
    %913 = vmatpush1.msra.mxu0 0.0
    %914 = vmatprep.subr.mxu0 0.0
    %915 = vmatpush1.msra.mxu0 0.0
    %916 = vmatprep.subr.mxu0 0.0
    %917 = vmatpush1.msra.mxu0 0.0
    %918 = vmatprep.subr.mxu0 0.0
    %919 = vmatpush1.msra.mxu0 0.0
    %920 = vmatprep.subr.mxu0 0.0
    %921 = vmatpush1.msra.mxu0 0.0
    %922 = vmatprep.mubr.f32.mxu0 0.0
    %923 = vmatmul.mubr.f32.gmra.mrb[0].mxu0 %v768
    %v924 = vpop.f32.mrb[0].mxu0
    %v925 = vadd.f32 %v435, %v924
    %v926 = vpop.f32.mrb[0].mxu0
    %927 = vdwg.mxu0
    %v928 = vmul.f32 %v850, %v925
    %v929 = vadd.f32 %v772, %v928
    %v930 = vtanh.pop %v929
    %v931 = vsub.f32 1.0, %v857
    %v932 = vmul.f32 %v931, %v930
    %v933 = vmul.f32 %v857, %v768
    %v934 = vadd.f32 %v932, %v933
    %s935 = scalar_lea.vmem [#allocation2], 72
    %v936 = vld [vmem:[%s935] sm:$0xff]
    %v937 = vld [vmem:[%s935 + $0x8] sm:$0xff]
    %v938 = vld [vmem:[%s935 + $0x10] sm:$0xff]
    %939 = vmatprep.subr.mxu0 %v383
    %940 = vmatpush1.msra.mxu0 %v382
    %941 = vmatprep.subr.mxu0 %v386
    %942 = vmatpush1.msra.mxu0 %v385
    %943 = vmatprep.subr.mxu0 %v389
    %944 = vmatpush1.msra.mxu0 %v388
    %945 = vmatprep.subr.mxu0 %v392
    %946 = vmatpush1.msra.mxu0 %v391
    %947 = vmatprep.subr.mxu0 %v395
    %948 = vmatpush1.msra.mxu0 %v394
    %949 = vmatprep.subr.mxu0 %v398
    %950 = vmatpush1.msra.mxu0 %v397
    %951 = vmatprep.subr.mxu0 %v401
    %952 = vmatpush1.msra.mxu0 %v400
    %953 = vmatprep.subr.mxu0 %v404
    %954 = vmatpush1.msra.mxu0 %v403
    %955 = vmatprep.subr.mxu0 %v407
    %956 = vmatpush1.msra.mxu0 %v406
    %957 = vmatprep.subr.mxu0 %v410
    %958 = vmatpush1.msra.mxu0 %v409
    %959 = vmatprep.subr.mxu0 %v413
    %960 = vmatpush1.msra.mxu0 %v412
    %961 = vmatprep.subr.mxu0 %v416
    %962 = vmatpush1.msra.mxu0 %v415
    %963 = vmatprep.subr.mxu0 %v419
    %964 = vmatpush1.msra.mxu0 %v418
    %965 = vmatprep.subr.mxu0 %v422
    %966 = vmatpush1.msra.mxu0 %v421
    %967 = vmatprep.subr.mxu0 %v425
    %968 = vmatpush1.msra.mxu0 %v424
    %969 = vmatprep.subr.mxu0 %v428
    %970 = vmatpush1.msra.mxu0 %v427
    %971 = vmatprep.subr.mxu0 0.0
    %972 = vmatpush1.msra.mxu0 0.0
    %973 = vmatprep.subr.mxu0 0.0
    %974 = vmatpush1.msra.mxu0 0.0
    %975 = vmatprep.subr.mxu0 0.0
    %976 = vmatpush1.msra.mxu0 0.0
    %977 = vmatprep.subr.mxu0 0.0
    %978 = vmatpush1.msra.mxu0 0.0
    %979 = vmatprep.subr.mxu0 0.0
    %980 = vmatpush1.msra.mxu0 0.0
    %981 = vmatprep.subr.mxu0 0.0
    %982 = vmatpush1.msra.mxu0 0.0
    %983 = vmatprep.subr.mxu0 0.0
    %984 = vmatpush1.msra.mxu0 0.0
    %985 = vmatprep.subr.mxu0 0.0
    %986 = vmatpush1.msra.mxu0 0.0
    %987 = vmatprep.subr.mxu0 0.0
    %988 = vmatpush1.msra.mxu0 0.0
    %989 = vmatprep.subr.mxu0 0.0
    %990 = vmatpush1.msra.mxu0 0.0
    %991 = vmatprep.subr.mxu0 0.0
    %992 = vmatpush1.msra.mxu0 0.0
    %993 = vmatprep.subr.mxu0 0.0
    %994 = vmatpush1.msra.mxu0 0.0
    %995 = vmatprep.subr.mxu0 0.0
    %996 = vmatpush1.msra.mxu0 0.0
    %997 = vmatprep.subr.mxu0 0.0
    %998 = vmatpush1.msra.mxu0 0.0
    %999 = vmatprep.subr.mxu0 0.0
    %1000 = vmatpush1.msra.mxu0 0.0
    %1001 = vmatprep.subr.mxu0 0.0
    %1002 = vmatpush1.msra.mxu0 0.0
    %1003 = vmatprep.mubr.f32.mxu0 0.0
    %1004 = vmatmul.mubr.f32.gmra.mrb[0].mxu0 %v934
    %v1005 = vpop.f32.mrb[0].mxu0
    %v1006 = vadd.f32 0.0, %v1005
    %v1007 = vpop.f32.mrb[0].mxu0
    %v1008 = vadd.f32 0.0, %v1007
    %1009 = vdwg.mxu0
    %v1010 = vadd.f32 %v936, %v1006
    %v1011 = vxor.u32 %v1010, 2147483648
    %v1012 = vmul.f32 %v1011, 1.442695
    %v1013 = vpow.pop %v1012
    %v1014 = vadd.f32 %v1013, 1.0
    %v1015 = vrcp.pop %v1014
    %v1016 = vmul.f32 1.0, %v1015
    %v1017 = vadd.f32 %v937, %v1008
    %v1018 = vxor.u32 %v1017, 2147483648
    %v1019 = vmul.f32 %v1018, 1.442695
    %v1020 = vpow.pop %v1019
    %v1021 = vadd.f32 %v1020, 1.0
    %v1022 = vrcp.pop %v1021
    %v1023 = vmul.f32 1.0, %v1022
    %1024 = vmatprep.subr.mxu0 0.0
    %1025 = vmatpush1.msra.mxu0 %v384
    %1026 = vmatprep.subr.mxu0 0.0
    %1027 = vmatpush1.msra.mxu0 %v387
    %1028 = vmatprep.subr.mxu0 0.0
    %1029 = vmatpush1.msra.mxu0 %v390
    %1030 = vmatprep.subr.mxu0 0.0
    %1031 = vmatpush1.msra.mxu0 %v393
    %1032 = vmatprep.subr.mxu0 0.0
    %1033 = vmatpush1.msra.mxu0 %v396
    %1034 = vmatprep.subr.mxu0 0.0
    %1035 = vmatpush1.msra.mxu0 %v399
    %1036 = vmatprep.subr.mxu0 0.0
    %1037 = vmatpush1.msra.mxu0 %v402
    %1038 = vmatprep.subr.mxu0 0.0
    %1039 = vmatpush1.msra.mxu0 %v405
    %1040 = vmatprep.subr.mxu0 0.0
    %1041 = vmatpush1.msra.mxu0 %v408
    %1042 = vmatprep.subr.mxu0 0.0
    %1043 = vmatpush1.msra.mxu0 %v411
    %1044 = vmatprep.subr.mxu0 0.0
    %1045 = vmatpush1.msra.mxu0 %v414
    %1046 = vmatprep.subr.mxu0 0.0
    %1047 = vmatpush1.msra.mxu0 %v417
    %1048 = vmatprep.subr.mxu0 0.0
    %1049 = vmatpush1.msra.mxu0 %v420
    %1050 = vmatprep.subr.mxu0 0.0
    %1051 = vmatpush1.msra.mxu0 %v423
    %1052 = vmatprep.subr.mxu0 0.0
    %1053 = vmatpush1.msra.mxu0 %v426
    %1054 = vmatprep.subr.mxu0 0.0
    %1055 = vmatpush1.msra.mxu0 %v429
    %1056 = vmatprep.subr.mxu0 0.0
    %1057 = vmatpush1.msra.mxu0 0.0
    %1058 = vmatprep.subr.mxu0 0.0
    %1059 = vmatpush1.msra.mxu0 0.0
    %1060 = vmatprep.subr.mxu0 0.0
    %1061 = vmatpush1.msra.mxu0 0.0
    %1062 = vmatprep.subr.mxu0 0.0
    %1063 = vmatpush1.msra.mxu0 0.0
    %1064 = vmatprep.subr.mxu0 0.0
    %1065 = vmatpush1.msra.mxu0 0.0
    %1066 = vmatprep.subr.mxu0 0.0
    %1067 = vmatpush1.msra.mxu0 0.0
    %1068 = vmatprep.subr.mxu0 0.0
    %1069 = vmatpush1.msra.mxu0 0.0
    %1070 = vmatprep.subr.mxu0 0.0
    %1071 = vmatpush1.msra.mxu0 0.0
    %1072 = vmatprep.subr.mxu0 0.0
    %1073 = vmatpush1.msra.mxu0 0.0
    %1074 = vmatprep.subr.mxu0 0.0
    %1075 = vmatpush1.msra.mxu0 0.0
    %1076 = vmatprep.subr.mxu0 0.0
    %1077 = vmatpush1.msra.mxu0 0.0
    %1078 = vmatprep.subr.mxu0 0.0
    %1079 = vmatpush1.msra.mxu0 0.0
    %1080 = vmatprep.subr.mxu0 0.0
    %1081 = vmatpush1.msra.mxu0 0.0
    %1082 = vmatprep.subr.mxu0 0.0
    %1083 = vmatpush1.msra.mxu0 0.0
    %1084 = vmatprep.subr.mxu0 0.0
    %1085 = vmatpush1.msra.mxu0 0.0
    %1086 = vmatprep.subr.mxu0 0.0
    %1087 = vmatpush1.msra.mxu0 0.0
    %1088 = vmatprep.mubr.f32.mxu0 0.0
    %1089 = vmatmul.mubr.f32.gmra.mrb[0].mxu0 %v934
    %v1090 = vpop.f32.mrb[0].mxu0
    %v1091 = vadd.f32 %v435, %v1090
    %v1092 = vpop.f32.mrb[0].mxu0
    %1093 = vdwg.mxu0
    %v1094 = vmul.f32 %v1016, %v1091
    %v1095 = vadd.f32 %v938, %v1094
    %v1096 = vtanh.pop %v1095
    %v1097 = vsub.f32 1.0, %v1023
    %v1098 = vmul.f32 %v1097, %v1096
    %v1099 = vmul.f32 %v1023, %v934
    %v1100 = vadd.f32 %v1098, %v1099
    %s1101 = scalar_lea.vmem [#allocation2], 96
    %v1102 = vld [vmem:[%s1101] sm:$0xff]
    %v1103 = vld [vmem:[%s1101 + $0x8] sm:$0xff]
    %v1104 = vld [vmem:[%s1101 + $0x10] sm:$0xff]
    %1105 = vmatprep.subr.mxu0 %v383
    %1106 = vmatpush1.msra.mxu0 %v382
    %1107 = vmatprep.subr.mxu0 %v386
    %1108 = vmatpush1.msra.mxu0 %v385
    %1109 = vmatprep.subr.mxu0 %v389
    %1110 = vmatpush1.msra.mxu0 %v388
    %1111 = vmatprep.subr.mxu0 %v392
    %1112 = vmatpush1.msra.mxu0 %v391
    %1113 = vmatprep.subr.mxu0 %v395
    %1114 = vmatpush1.msra.mxu0 %v394
    %1115 = vmatprep.subr.mxu0 %v398
    %1116 = vmatpush1.msra.mxu0 %v397
    %1117 = vmatprep.subr.mxu0 %v401
    %1118 = vmatpush1.msra.mxu0 %v400
    %1119 = vmatprep.subr.mxu0 %v404
    %1120 = vmatpush1.msra.mxu0 %v403
    %1121 = vmatprep.subr.mxu0 %v407
    %1122 = vmatpush1.msra.mxu0 %v406
    %1123 = vmatprep.subr.mxu0 %v410
    %1124 = vmatpush1.msra.mxu0 %v409
    %1125 = vmatprep.subr.mxu0 %v413
    %1126 = vmatpush1.msra.mxu0 %v412
    %1127 = vmatprep.subr.mxu0 %v416
    %1128 = vmatpush1.msra.mxu0 %v415
    %1129 = vmatprep.subr.mxu0 %v419
    %1130 = vmatpush1.msra.mxu0 %v418
    %1131 = vmatprep.subr.mxu0 %v422
    %1132 = vmatpush1.msra.mxu0 %v421
    %1133 = vmatprep.subr.mxu0 %v425
    %1134 = vmatpush1.msra.mxu0 %v424
    %1135 = vmatprep.subr.mxu0 %v428
    %1136 = vmatpush1.msra.mxu0 %v427
    %1137 = vmatprep.subr.mxu0 0.0
    %1138 = vmatpush1.msra.mxu0 0.0
    %1139 = vmatprep.subr.mxu0 0.0
    %1140 = vmatpush1.msra.mxu0 0.0
    %1141 = vmatprep.subr.mxu0 0.0
    %1142 = vmatpush1.msra.mxu0 0.0
    %1143 = vmatprep.subr.mxu0 0.0
    %1144 = vmatpush1.msra.mxu0 0.0
    %1145 = vmatprep.subr.mxu0 0.0
    %1146 = vmatpush1.msra.mxu0 0.0
    %1147 = vmatprep.subr.mxu0 0.0
    %1148 = vmatpush1.msra.mxu0 0.0
    %1149 = vmatprep.subr.mxu0 0.0
    %1150 = vmatpush1.msra.mxu0 0.0
    %1151 = vmatprep.subr.mxu0 0.0
    %1152 = vmatpush1.msra.mxu0 0.0
    %1153 = vmatprep.subr.mxu0 0.0
    %1154 = vmatpush1.msra.mxu0 0.0
    %1155 = vmatprep.subr.mxu0 0.0
    %1156 = vmatpush1.msra.mxu0 0.0
    %1157 = vmatprep.subr.mxu0 0.0
    %1158 = vmatpush1.msra.mxu0 0.0
    %1159 = vmatprep.subr.mxu0 0.0
    %1160 = vmatpush1.msra.mxu0 0.0
    %1161 = vmatprep.subr.mxu0 0.0
    %1162 = vmatpush1.msra.mxu0 0.0
    %1163 = vmatprep.subr.mxu0 0.0
    %1164 = vmatpush1.msra.mxu0 0.0
    %1165 = vmatprep.subr.mxu0 0.0
    %1166 = vmatpush1.msra.mxu0 0.0
    %1167 = vmatprep.subr.mxu0 0.0
    %1168 = vmatpush1.msra.mxu0 0.0
    %1169 = vmatprep.mubr.f32.mxu0 0.0
    %1170 = vmatmul.mubr.f32.gmra.mrb[0].mxu0 %v1100
    %v1171 = vpop.f32.mrb[0].mxu0
    %v1172 = vadd.f32 0.0, %v1171
    %v1173 = vpop.f32.mrb[0].mxu0
    %v1174 = vadd.f32 0.0, %v1173
    %1175 = vdwg.mxu0
    %v1176 = vadd.f32 %v1102, %v1172
    %v1177 = vxor.u32 %v1176, 2147483648
    %v1178 = vmul.f32 %v1177, 1.442695
    %v1179 = vpow.pop %v1178
    %v1180 = vadd.f32 %v1179, 1.0
    %v1181 = vrcp.pop %v1180
    %v1182 = vmul.f32 1.0, %v1181
    %v1183 = vadd.f32 %v1103, %v1174
    %v1184 = vxor.u32 %v1183, 2147483648
    %v1185 = vmul.f32 %v1184, 1.442695
    %v1186 = vpow.pop %v1185
    %v1187 = vadd.f32 %v1186, 1.0
    %v1188 = vrcp.pop %v1187
    %v1189 = vmul.f32 1.0, %v1188
    %1190 = vmatprep.subr.mxu0 0.0
    %1191 = vmatpush1.msra.mxu0 %v384
    %1192 = vmatprep.subr.mxu0 0.0
    %1193 = vmatpush1.msra.mxu0 %v387
    %1194 = vmatprep.subr.mxu0 0.0
    %1195 = vmatpush1.msra.mxu0 %v390
    %1196 = vmatprep.subr.mxu0 0.0
    %1197 = vmatpush1.msra.mxu0 %v393
    %1198 = vmatprep.subr.mxu0 0.0
    %1199 = vmatpush1.msra.mxu0 %v396
    %1200 = vmatprep.subr.mxu0 0.0
    %1201 = vmatpush1.msra.mxu0 %v399
    %1202 = vmatprep.subr.mxu0 0.0
    %1203 = vmatpush1.msra.mxu0 %v402
    %1204 = vmatprep.subr.mxu0 0.0
    %1205 = vmatpush1.msra.mxu0 %v405
    %1206 = vmatprep.subr.mxu0 0.0
    %1207 = vmatpush1.msra.mxu0 %v408
    %1208 = vmatprep.subr.mxu0 0.0
    %1209 = vmatpush1.msra.mxu0 %v411
    %1210 = vmatprep.subr.mxu0 0.0
    %1211 = vmatpush1.msra.mxu0 %v414
    %1212 = vmatprep.subr.mxu0 0.0
    %1213 = vmatpush1.msra.mxu0 %v417
    %1214 = vmatprep.subr.mxu0 0.0
    %1215 = vmatpush1.msra.mxu0 %v420
    %1216 = vmatprep.subr.mxu0 0.0
    %1217 = vmatpush1.msra.mxu0 %v423
    %1218 = vmatprep.subr.mxu0 0.0
    %1219 = vmatpush1.msra.mxu0 %v426
    %1220 = vmatprep.subr.mxu0 0.0
    %1221 = vmatpush1.msra.mxu0 %v429
    %1222 = vmatprep.subr.mxu0 0.0
    %1223 = vmatpush1.msra.mxu0 0.0
    %1224 = vmatprep.subr.mxu0 0.0
    %1225 = vmatpush1.msra.mxu0 0.0
    %1226 = vmatprep.subr.mxu0 0.0
    %1227 = vmatpush1.msra.mxu0 0.0
    %1228 = vmatprep.subr.mxu0 0.0
    %1229 = vmatpush1.msra.mxu0 0.0
    %1230 = vmatprep.subr.mxu0 0.0
    %1231 = vmatpush1.msra.mxu0 0.0
    %1232 = vmatprep.subr.mxu0 0.0
    %1233 = vmatpush1.msra.mxu0 0.0
    %1234 = vmatprep.subr.mxu0 0.0
    %1235 = vmatpush1.msra.mxu0 0.0
    %1236 = vmatprep.subr.mxu0 0.0
    %1237 = vmatpush1.msra.mxu0 0.0
    %1238 = vmatprep.subr.mxu0 0.0
    %1239 = vmatpush1.msra.mxu0 0.0
    %1240 = vmatprep.subr.mxu0 0.0
    %1241 = vmatpush1.msra.mxu0 0.0
    %1242 = vmatprep.subr.mxu0 0.0
    %1243 = vmatpush1.msra.mxu0 0.0
    %1244 = vmatprep.subr.mxu0 0.0
    %1245 = vmatpush1.msra.mxu0 0.0
    %1246 = vmatprep.subr.mxu0 0.0
    %1247 = vmatpush1.msra.mxu0 0.0
    %1248 = vmatprep.subr.mxu0 0.0
    %1249 = vmatpush1.msra.mxu0 0.0
    %1250 = vmatprep.subr.mxu0 0.0
    %1251 = vmatpush1.msra.mxu0 0.0
    %1252 = vmatprep.subr.mxu0 0.0
    %1253 = vmatpush1.msra.mxu0 0.0
    %1254 = vmatprep.mubr.f32.mxu0 0.0
    %1255 = vmatmul.mubr.f32.gmra.mrb[0].mxu0 %v1100
    %v1256 = vpop.f32.mrb[0].mxu0
    %v1257 = vadd.f32 %v435, %v1256
    %v1258 = vpop.f32.mrb[0].mxu0
    %1259 = vdwg.mxu0
    %v1260 = vmul.f32 %v1182, %v1257
    %v1261 = vadd.f32 %v1104, %v1260
    %v1262 = vtanh.pop %v1261
    %v1263 = vsub.f32 1.0, %v1189
    %v1264 = vmul.f32 %v1263, %v1262
    %v1265 = vmul.f32 %v1189, %v1100
    %v1266 = vadd.f32 %v1264, %v1265
    %s1267 = scalar_lea.vmem [#allocation2], 120
    %v1268 = vld [vmem:[%s1267] sm:$0xff]
    %v1269 = vld [vmem:[%s1267 + $0x8] sm:$0xff]
    %v1270 = vld [vmem:[%s1267 + $0x10] sm:$0xff]
    %1271 = vmatprep.subr.mxu0 %v383
    %1272 = vmatpush1.msra.mxu0 %v382
    %1273 = vmatprep.subr.mxu0 %v386
    %1274 = vmatpush1.msra.mxu0 %v385
    %1275 = vmatprep.subr.mxu0 %v389
    %1276 = vmatpush1.msra.mxu0 %v388
    %1277 = vmatprep.subr.mxu0 %v392
    %1278 = vmatpush1.msra.mxu0 %v391
    %1279 = vmatprep.subr.mxu0 %v395
    %1280 = vmatpush1.msra.mxu0 %v394
    %1281 = vmatprep.subr.mxu0 %v398
    %1282 = vmatpush1.msra.mxu0 %v397
    %1283 = vmatprep.subr.mxu0 %v401
    %1284 = vmatpush1.msra.mxu0 %v400
    %1285 = vmatprep.subr.mxu0 %v404
    %1286 = vmatpush1.msra.mxu0 %v403
    %1287 = vmatprep.subr.mxu0 %v407
    %1288 = vmatpush1.msra.mxu0 %v406
    %1289 = vmatprep.subr.mxu0 %v410
    %1290 = vmatpush1.msra.mxu0 %v409
    %1291 = vmatprep.subr.mxu0 %v413
    %1292 = vmatpush1.msra.mxu0 %v412
    %1293 = vmatprep.subr.mxu0 %v416
    %1294 = vmatpush1.msra.mxu0 %v415
    %1295 = vmatprep.subr.mxu0 %v419
    %1296 = vmatpush1.msra.mxu0 %v418
    %1297 = vmatprep.subr.mxu0 %v422
    %1298 = vmatpush1.msra.mxu0 %v421
    %1299 = vmatprep.subr.mxu0 %v425
    %1300 = vmatpush1.msra.mxu0 %v424
    %1301 = vmatprep.subr.mxu0 %v428
    %1302 = vmatpush1.msra.mxu0 %v427
    %1303 = vmatprep.subr.mxu0 0.0
    %1304 = vmatpush1.msra.mxu0 0.0
    %1305 = vmatprep.subr.mxu0 0.0
    %1306 = vmatpush1.msra.mxu0 0.0
    %1307 = vmatprep.subr.mxu0 0.0
    %1308 = vmatpush1.msra.mxu0 0.0
    %1309 = vmatprep.subr.mxu0 0.0
    %1310 = vmatpush1.msra.mxu0 0.0
    %1311 = vmatprep.subr.mxu0 0.0
    %1312 = vmatpush1.msra.mxu0 0.0
    %1313 = vmatprep.subr.mxu0 0.0
    %1314 = vmatpush1.msra.mxu0 0.0
    %1315 = vmatprep.subr.mxu0 0.0
    %1316 = vmatpush1.msra.mxu0 0.0
    %1317 = vmatprep.subr.mxu0 0.0
    %1318 = vmatpush1.msra.mxu0 0.0
    %1319 = vmatprep.subr.mxu0 0.0
    %1320 = vmatpush1.msra.mxu0 0.0
    %1321 = vmatprep.subr.mxu0 0.0
    %1322 = vmatpush1.msra.mxu0 0.0
    %1323 = vmatprep.subr.mxu0 0.0
    %1324 = vmatpush1.msra.mxu0 0.0
    %1325 = vmatprep.subr.mxu0 0.0
    %1326 = vmatpush1.msra.mxu0 0.0
    %1327 = vmatprep.subr.mxu0 0.0
    %1328 = vmatpush1.msra.mxu0 0.0
    %1329 = vmatprep.subr.mxu0 0.0
    %1330 = vmatpush1.msra.mxu0 0.0
    %1331 = vmatprep.subr.mxu0 0.0
    %1332 = vmatpush1.msra.mxu0 0.0
    %1333 = vmatprep.subr.mxu0 0.0
    %1334 = vmatpush1.msra.mxu0 0.0
    %1335 = vmatprep.mubr.f32.mxu0 0.0
    %1336 = vmatmul.mubr.f32.gmra.mrb[0].mxu0 %v1266
    %v1337 = vpop.f32.mrb[0].mxu0
    %v1338 = vadd.f32 0.0, %v1337
    %v1339 = vpop.f32.mrb[0].mxu0
    %v1340 = vadd.f32 0.0, %v1339
    %1341 = vdwg.mxu0
    %v1342 = vadd.f32 %v1268, %v1338
    %v1343 = vxor.u32 %v1342, 2147483648
    %v1344 = vmul.f32 %v1343, 1.442695
    %v1345 = vpow.pop %v1344
    %v1346 = vadd.f32 %v1345, 1.0
    %v1347 = vrcp.pop %v1346
    %v1348 = vmul.f32 1.0, %v1347
    %v1349 = vadd.f32 %v1269, %v1340
    %v1350 = vxor.u32 %v1349, 2147483648
    %v1351 = vmul.f32 %v1350, 1.442695
    %v1352 = vpow.pop %v1351
    %v1353 = vadd.f32 %v1352, 1.0
    %v1354 = vrcp.pop %v1353
    %v1355 = vmul.f32 1.0, %v1354
    %1356 = vmatprep.subr.mxu0 0.0
    %1357 = vmatpush1.msra.mxu0 %v384
    %1358 = vmatprep.subr.mxu0 0.0
    %1359 = vmatpush1.msra.mxu0 %v387
    %1360 = vmatprep.subr.mxu0 0.0
    %1361 = vmatpush1.msra.mxu0 %v390
    %1362 = vmatprep.subr.mxu0 0.0
    %1363 = vmatpush1.msra.mxu0 %v393
    %1364 = vmatprep.subr.mxu0 0.0
    %1365 = vmatpush1.msra.mxu0 %v396
    %1366 = vmatprep.subr.mxu0 0.0
    %1367 = vmatpush1.msra.mxu0 %v399
    %1368 = vmatprep.subr.mxu0 0.0
    %1369 = vmatpush1.msra.mxu0 %v402
    %1370 = vmatprep.subr.mxu0 0.0
    %1371 = vmatpush1.msra.mxu0 %v405
    %1372 = vmatprep.subr.mxu0 0.0
    %1373 = vmatpush1.msra.mxu0 %v408
    %1374 = vmatprep.subr.mxu0 0.0
    %1375 = vmatpush1.msra.mxu0 %v411
    %1376 = vmatprep.subr.mxu0 0.0
    %1377 = vmatpush1.msra.mxu0 %v414
    %1378 = vmatprep.subr.mxu0 0.0
    %1379 = vmatpush1.msra.mxu0 %v417
    %1380 = vmatprep.subr.mxu0 0.0
    %1381 = vmatpush1.msra.mxu0 %v420
    %1382 = vmatprep.subr.mxu0 0.0
    %1383 = vmatpush1.msra.mxu0 %v423
    %1384 = vmatprep.subr.mxu0 0.0
    %1385 = vmatpush1.msra.mxu0 %v426
    %1386 = vmatprep.subr.mxu0 0.0
    %1387 = vmatpush1.msra.mxu0 %v429
    %1388 = vmatprep.subr.mxu0 0.0
    %1389 = vmatpush1.msra.mxu0 0.0
    %1390 = vmatprep.subr.mxu0 0.0
    %1391 = vmatpush1.msra.mxu0 0.0
    %1392 = vmatprep.subr.mxu0 0.0
    %1393 = vmatpush1.msra.mxu0 0.0
    %1394 = vmatprep.subr.mxu0 0.0
    %1395 = vmatpush1.msra.mxu0 0.0
    %1396 = vmatprep.subr.mxu0 0.0
    %1397 = vmatpush1.msra.mxu0 0.0
    %1398 = vmatprep.subr.mxu0 0.0
    %1399 = vmatpush1.msra.mxu0 0.0
    %1400 = vmatprep.subr.mxu0 0.0
    %1401 = vmatpush1.msra.mxu0 0.0
    %1402 = vmatprep.subr.mxu0 0.0
    %1403 = vmatpush1.msra.mxu0 0.0
    %1404 = vmatprep.subr.mxu0 0.0
    %1405 = vmatpush1.msra.mxu0 0.0
    %1406 = vmatprep.subr.mxu0 0.0
    %1407 = vmatpush1.msra.mxu0 0.0
    %1408 = vmatprep.subr.mxu0 0.0
    %1409 = vmatpush1.msra.mxu0 0.0
    %1410 = vmatprep.subr.mxu0 0.0
    %1411 = vmatpush1.msra.mxu0 0.0
    %1412 = vmatprep.subr.mxu0 0.0
    %1413 = vmatpush1.msra.mxu0 0.0
    %1414 = vmatprep.subr.mxu0 0.0
    %1415 = vmatpush1.msra.mxu0 0.0
    %1416 = vmatprep.subr.mxu0 0.0
    %1417 = vmatpush1.msra.mxu0 0.0
    %1418 = vmatprep.subr.mxu0 0.0
    %1419 = vmatpush1.msra.mxu0 0.0
    %1420 = vmatprep.mubr.f32.mxu0 0.0
    %1421 = vmatmul.mubr.f32.gmra.mrb[0].mxu0 %v1266
    %v1422 = vpop.f32.mrb[0].mxu0
    %v1423 = vadd.f32 %v435, %v1422
    %v1424 = vpop.f32.mrb[0].mxu0
    %1425 = vdwg.mxu0
    %v1426 = vmul.f32 %v1348, %v1423
    %v1427 = vadd.f32 %v1270, %v1426
    %v1428 = vtanh.pop %v1427
    %v1429 = vsub.f32 1.0, %v1355
    %v1430 = vmul.f32 %v1429, %v1428
    %v1431 = vmul.f32 %v1355, %v1266
    %v1432 = vadd.f32 %v1430, %v1431
    %s1433 = scalar_lea.vmem [#allocation2], 144
    %v1434 = vld [vmem:[%s1433] sm:$0xff]
    %v1435 = vld [vmem:[%s1433 + $0x8] sm:$0xff]
    %v1436 = vld [vmem:[%s1433 + $0x10] sm:$0xff]
    %1437 = vmatprep.subr.mxu0 %v383
    %1438 = vmatpush1.msra.mxu0 %v382
    %1439 = vmatprep.subr.mxu0 %v386
    %1440 = vmatpush1.msra.mxu0 %v385
    %1441 = vmatprep.subr.mxu0 %v389
    %1442 = vmatpush1.msra.mxu0 %v388
    %1443 = vmatprep.subr.mxu0 %v392
    %1444 = vmatpush1.msra.mxu0 %v391
    %1445 = vmatprep.subr.mxu0 %v395
    %1446 = vmatpush1.msra.mxu0 %v394
    %1447 = vmatprep.subr.mxu0 %v398
    %1448 = vmatpush1.msra.mxu0 %v397
    %1449 = vmatprep.subr.mxu0 %v401
    %1450 = vmatpush1.msra.mxu0 %v400
    %1451 = vmatprep.subr.mxu0 %v404
    %1452 = vmatpush1.msra.mxu0 %v403
    %1453 = vmatprep.subr.mxu0 %v407
    %1454 = vmatpush1.msra.mxu0 %v406
    %1455 = vmatprep.subr.mxu0 %v410
    %1456 = vmatpush1.msra.mxu0 %v409
    %1457 = vmatprep.subr.mxu0 %v413
    %1458 = vmatpush1.msra.mxu0 %v412
    %1459 = vmatprep.subr.mxu0 %v416
    %1460 = vmatpush1.msra.mxu0 %v415
    %1461 = vmatprep.subr.mxu0 %v419
    %1462 = vmatpush1.msra.mxu0 %v418
    %1463 = vmatprep.subr.mxu0 %v422
    %1464 = vmatpush1.msra.mxu0 %v421
    %1465 = vmatprep.subr.mxu0 %v425
    %1466 = vmatpush1.msra.mxu0 %v424
    %1467 = vmatprep.subr.mxu0 %v428
    %1468 = vmatpush1.msra.mxu0 %v427
    %1469 = vmatprep.subr.mxu0 0.0
    %1470 = vmatpush1.msra.mxu0 0.0
    %1471 = vmatprep.subr.mxu0 0.0
    %1472 = vmatpush1.msra.mxu0 0.0
    %1473 = vmatprep.subr.mxu0 0.0
    %1474 = vmatpush1.msra.mxu0 0.0
    %1475 = vmatprep.subr.mxu0 0.0
    %1476 = vmatpush1.msra.mxu0 0.0
    %1477 = vmatprep.subr.mxu0 0.0
    %1478 = vmatpush1.msra.mxu0 0.0
    %1479 = vmatprep.subr.mxu0 0.0
    %1480 = vmatpush1.msra.mxu0 0.0
    %1481 = vmatprep.subr.mxu0 0.0
    %1482 = vmatpush1.msra.mxu0 0.0
    %1483 = vmatprep.subr.mxu0 0.0
    %1484 = vmatpush1.msra.mxu0 0.0
    %1485 = vmatprep.subr.mxu0 0.0
    %1486 = vmatpush1.msra.mxu0 0.0
    %1487 = vmatprep.subr.mxu0 0.0
    %1488 = vmatpush1.msra.mxu0 0.0
    %1489 = vmatprep.subr.mxu0 0.0
    %1490 = vmatpush1.msra.mxu0 0.0
    %1491 = vmatprep.subr.mxu0 0.0
    %1492 = vmatpush1.msra.mxu0 0.0
    %1493 = vmatprep.subr.mxu0 0.0
    %1494 = vmatpush1.msra.mxu0 0.0
    %1495 = vmatprep.subr.mxu0 0.0
    %1496 = vmatpush1.msra.mxu0 0.0
    %1497 = vmatprep.subr.mxu0 0.0
    %1498 = vmatpush1.msra.mxu0 0.0
    %1499 = vmatprep.subr.mxu0 0.0
    %1500 = vmatpush1.msra.mxu0 0.0
    %1501 = vmatprep.mubr.f32.mxu0 0.0
    %1502 = vmatmul.mubr.f32.gmra.mrb[0].mxu0 %v1432
    %v1503 = vpop.f32.mrb[0].mxu0
    %v1504 = vadd.f32 0.0, %v1503
    %v1505 = vpop.f32.mrb[0].mxu0
    %v1506 = vadd.f32 0.0, %v1505
    %1507 = vdwg.mxu0
    %v1508 = vadd.f32 %v1434, %v1504
    %v1509 = vxor.u32 %v1508, 2147483648
    %v1510 = vmul.f32 %v1509, 1.442695
    %v1511 = vpow.pop %v1510
    %v1512 = vadd.f32 %v1511, 1.0
    %v1513 = vrcp.pop %v1512
    %v1514 = vmul.f32 1.0, %v1513
    %v1515 = vadd.f32 %v1435, %v1506
    %v1516 = vxor.u32 %v1515, 2147483648
    %v1517 = vmul.f32 %v1516, 1.442695
    %v1518 = vpow.pop %v1517
    %v1519 = vadd.f32 %v1518, 1.0
    %v1520 = vrcp.pop %v1519
    %v1521 = vmul.f32 1.0, %v1520
    %1522 = vmatprep.subr.mxu0 0.0
    %1523 = vmatpush1.msra.mxu0 %v384
    %1524 = vmatprep.subr.mxu0 0.0
    %1525 = vmatpush1.msra.mxu0 %v387
    %1526 = vmatprep.subr.mxu0 0.0
    %1527 = vmatpush1.msra.mxu0 %v390
    %1528 = vmatprep.subr.mxu0 0.0
    %1529 = vmatpush1.msra.mxu0 %v393
    %1530 = vmatprep.subr.mxu0 0.0
    %1531 = vmatpush1.msra.mxu0 %v396
    %1532 = vmatprep.subr.mxu0 0.0
    %1533 = vmatpush1.msra.mxu0 %v399
    %1534 = vmatprep.subr.mxu0 0.0
    %1535 = vmatpush1.msra.mxu0 %v402
    %1536 = vmatprep.subr.mxu0 0.0
    %1537 = vmatpush1.msra.mxu0 %v405
    %1538 = vmatprep.subr.mxu0 0.0
    %1539 = vmatpush1.msra.mxu0 %v408
    %1540 = vmatprep.subr.mxu0 0.0
    %1541 = vmatpush1.msra.mxu0 %v411
    %1542 = vmatprep.subr.mxu0 0.0
    %1543 = vmatpush1.msra.mxu0 %v414
    %1544 = vmatprep.subr.mxu0 0.0
    %1545 = vmatpush1.msra.mxu0 %v417
    %1546 = vmatprep.subr.mxu0 0.0
    %1547 = vmatpush1.msra.mxu0 %v420
    %1548 = vmatprep.subr.mxu0 0.0
    %1549 = vmatpush1.msra.mxu0 %v423
    %1550 = vmatprep.subr.mxu0 0.0
    %1551 = vmatpush1.msra.mxu0 %v426
    %1552 = vmatprep.subr.mxu0 0.0
    %1553 = vmatpush1.msra.mxu0 %v429
    %1554 = vmatprep.subr.mxu0 0.0
    %1555 = vmatpush1.msra.mxu0 0.0
    %1556 = vmatprep.subr.mxu0 0.0
    %1557 = vmatpush1.msra.mxu0 0.0
    %1558 = vmatprep.subr.mxu0 0.0
    %1559 = vmatpush1.msra.mxu0 0.0
    %1560 = vmatprep.subr.mxu0 0.0
    %1561 = vmatpush1.msra.mxu0 0.0
    %1562 = vmatprep.subr.mxu0 0.0
    %1563 = vmatpush1.msra.mxu0 0.0
    %1564 = vmatprep.subr.mxu0 0.0
    %1565 = vmatpush1.msra.mxu0 0.0
    %1566 = vmatprep.subr.mxu0 0.0
    %1567 = vmatpush1.msra.mxu0 0.0
    %1568 = vmatprep.subr.mxu0 0.0
    %1569 = vmatpush1.msra.mxu0 0.0
    %1570 = vmatprep.subr.mxu0 0.0
    %1571 = vmatpush1.msra.mxu0 0.0
    %1572 = vmatprep.subr.mxu0 0.0
    %1573 = vmatpush1.msra.mxu0 0.0
    %1574 = vmatprep.subr.mxu0 0.0
    %1575 = vmatpush1.msra.mxu0 0.0
    %1576 = vmatprep.subr.mxu0 0.0
    %1577 = vmatpush1.msra.mxu0 0.0
    %1578 = vmatprep.subr.mxu0 0.0
    %1579 = vmatpush1.msra.mxu0 0.0
    %1580 = vmatprep.subr.mxu0 0.0
    %1581 = vmatpush1.msra.mxu0 0.0
    %1582 = vmatprep.subr.mxu0 0.0
    %1583 = vmatpush1.msra.mxu0 0.0
    %1584 = vmatprep.subr.mxu0 0.0
    %1585 = vmatpush1.msra.mxu0 0.0
    %1586 = vmatprep.mubr.f32.mxu0 0.0
    %1587 = vmatmul.mubr.f32.gmra.mrb[0].mxu0 %v1432
    %v1588 = vpop.f32.mrb[0].mxu0
    %v1589 = vadd.f32 %v435, %v1588
    %v1590 = vpop.f32.mrb[0].mxu0
    %1591 = vdwg.mxu0
    %v1592 = vmul.f32 %v1514, %v1589
    %v1593 = vadd.f32 %v1436, %v1592
    %v1594 = vtanh.pop %v1593
    %v1595 = vsub.f32 1.0, %v1521
    %v1596 = vmul.f32 %v1595, %v1594
    %v1597 = vmul.f32 %v1521, %v1432
    %v1598 = vadd.f32 %v1596, %v1597
    %s1599 = scalar_lea.vmem [#allocation2], 168
    %v1600 = vld [vmem:[%s1599] sm:$0xff]
    %v1601 = vld [vmem:[%s1599 + $0x8] sm:$0xff]
    %v1602 = vld [vmem:[%s1599 + $0x10] sm:$0xff]
    %1603 = vmatprep.subr.mxu0 %v383
    %1604 = vmatpush1.msra.mxu0 %v382
    %1605 = vmatprep.subr.mxu0 %v386
    %1606 = vmatpush1.msra.mxu0 %v385
    %1607 = vmatprep.subr.mxu0 %v389
    %1608 = vmatpush1.msra.mxu0 %v388
    %1609 = vmatprep.subr.mxu0 %v392
    %1610 = vmatpush1.msra.mxu0 %v391
    %1611 = vmatprep.subr.mxu0 %v395
    %1612 = vmatpush1.msra.mxu0 %v394
    %1613 = vmatprep.subr.mxu0 %v398
    %1614 = vmatpush1.msra.mxu0 %v397
    %1615 = vmatprep.subr.mxu0 %v401
    %1616 = vmatpush1.msra.mxu0 %v400
    %1617 = vmatprep.subr.mxu0 %v404
    %1618 = vmatpush1.msra.mxu0 %v403
    %1619 = vmatprep.subr.mxu0 %v407
    %1620 = vmatpush1.msra.mxu0 %v406
    %1621 = vmatprep.subr.mxu0 %v410
    %1622 = vmatpush1.msra.mxu0 %v409
    %1623 = vmatprep.subr.mxu0 %v413
    %1624 = vmatpush1.msra.mxu0 %v412
    %1625 = vmatprep.subr.mxu0 %v416
    %1626 = vmatpush1.msra.mxu0 %v415
    %1627 = vmatprep.subr.mxu0 %v419
    %1628 = vmatpush1.msra.mxu0 %v418
    %1629 = vmatprep.subr.mxu0 %v422
    %1630 = vmatpush1.msra.mxu0 %v421
    %1631 = vmatprep.subr.mxu0 %v425
    %1632 = vmatpush1.msra.mxu0 %v424
    %1633 = vmatprep.subr.mxu0 %v428
    %1634 = vmatpush1.msra.mxu0 %v427
    %1635 = vmatprep.subr.mxu0 0.0
    %1636 = vmatpush1.msra.mxu0 0.0
    %1637 = vmatprep.subr.mxu0 0.0
    %1638 = vmatpush1.msra.mxu0 0.0
    %1639 = vmatprep.subr.mxu0 0.0
    %1640 = vmatpush1.msra.mxu0 0.0
    %1641 = vmatprep.subr.mxu0 0.0
    %1642 = vmatpush1.msra.mxu0 0.0
    %1643 = vmatprep.subr.mxu0 0.0
    %1644 = vmatpush1.msra.mxu0 0.0
    %1645 = vmatprep.subr.mxu0 0.0
    %1646 = vmatpush1.msra.mxu0 0.0
    %1647 = vmatprep.subr.mxu0 0.0
    %1648 = vmatpush1.msra.mxu0 0.0
    %1649 = vmatprep.subr.mxu0 0.0
    %1650 = vmatpush1.msra.mxu0 0.0
    %1651 = vmatprep.subr.mxu0 0.0
    %1652 = vmatpush1.msra.mxu0 0.0
    %1653 = vmatprep.subr.mxu0 0.0
    %1654 = vmatpush1.msra.mxu0 0.0
    %1655 = vmatprep.subr.mxu0 0.0
    %1656 = vmatpush1.msra.mxu0 0.0
    %1657 = vmatprep.subr.mxu0 0.0
    %1658 = vmatpush1.msra.mxu0 0.0
    %1659 = vmatprep.subr.mxu0 0.0
    %1660 = vmatpush1.msra.mxu0 0.0
    %1661 = vmatprep.subr.mxu0 0.0
    %1662 = vmatpush1.msra.mxu0 0.0
    %1663 = vmatprep.subr.mxu0 0.0
    %1664 = vmatpush1.msra.mxu0 0.0
    %1665 = vmatprep.subr.mxu0 0.0
    %1666 = vmatpush1.msra.mxu0 0.0
    %1667 = vmatprep.mubr.f32.mxu0 0.0
    %1668 = vmatmul.mubr.f32.gmra.mrb[0].mxu0 %v1598
    %v1669 = vpop.f32.mrb[0].mxu0
    %v1670 = vadd.f32 0.0, %v1669
    %v1671 = vpop.f32.mrb[0].mxu0
    %v1672 = vadd.f32 0.0, %v1671
    %1673 = vdwg.mxu0
    %v1674 = vadd.f32 %v1600, %v1670
    %v1675 = vxor.u32 %v1674, 2147483648
    %v1676 = vmul.f32 %v1675, 1.442695
    %v1677 = vpow.pop %v1676
    %v1678 = vadd.f32 %v1677, 1.0
    %v1679 = vrcp.pop %v1678
    %v1680 = vmul.f32 1.0, %v1679
    %v1681 = vadd.f32 %v1601, %v1672
    %v1682 = vxor.u32 %v1681, 2147483648
    %v1683 = vmul.f32 %v1682, 1.442695
    %v1684 = vpow.pop %v1683
    %v1685 = vadd.f32 %v1684, 1.0
    %v1686 = vrcp.pop %v1685
    %v1687 = vmul.f32 1.0, %v1686
    %1688 = vmatprep.subr.mxu0 0.0
    %1689 = vmatpush1.msra.mxu0 %v384
    %1690 = vmatprep.subr.mxu0 0.0
    %1691 = vmatpush1.msra.mxu0 %v387
    %1692 = vmatprep.subr.mxu0 0.0
    %1693 = vmatpush1.msra.mxu0 %v390
    %1694 = vmatprep.subr.mxu0 0.0
    %1695 = vmatpush1.msra.mxu0 %v393
    %1696 = vmatprep.subr.mxu0 0.0
    %1697 = vmatpush1.msra.mxu0 %v396
    %1698 = vmatprep.subr.mxu0 0.0
    %1699 = vmatpush1.msra.mxu0 %v399
    %1700 = vmatprep.subr.mxu0 0.0
    %1701 = vmatpush1.msra.mxu0 %v402
    %1702 = vmatprep.subr.mxu0 0.0
    %1703 = vmatpush1.msra.mxu0 %v405
    %1704 = vmatprep.subr.mxu0 0.0
    %1705 = vmatpush1.msra.mxu0 %v408
    %1706 = vmatprep.subr.mxu0 0.0
    %1707 = vmatpush1.msra.mxu0 %v411
    %1708 = vmatprep.subr.mxu0 0.0
    %1709 = vmatpush1.msra.mxu0 %v414
    %1710 = vmatprep.subr.mxu0 0.0
    %1711 = vmatpush1.msra.mxu0 %v417
    %1712 = vmatprep.subr.mxu0 0.0
    %1713 = vmatpush1.msra.mxu0 %v420
    %1714 = vmatprep.subr.mxu0 0.0
    %1715 = vmatpush1.msra.mxu0 %v423
    %1716 = vmatprep.subr.mxu0 0.0
    %1717 = vmatpush1.msra.mxu0 %v426
    %1718 = vmatprep.subr.mxu0 0.0
    %1719 = vmatpush1.msra.mxu0 %v429
    %1720 = vmatprep.subr.mxu0 0.0
    %1721 = vmatpush1.msra.mxu0 0.0
    %1722 = vmatprep.subr.mxu0 0.0
    %1723 = vmatpush1.msra.mxu0 0.0
    %1724 = vmatprep.subr.mxu0 0.0
    %1725 = vmatpush1.msra.mxu0 0.0
    %1726 = vmatprep.subr.mxu0 0.0
    %1727 = vmatpush1.msra.mxu0 0.0
    %1728 = vmatprep.subr.mxu0 0.0
    %1729 = vmatpush1.msra.mxu0 0.0
    %1730 = vmatprep.subr.mxu0 0.0
    %1731 = vmatpush1.msra.mxu0 0.0
    %1732 = vmatprep.subr.mxu0 0.0
    %1733 = vmatpush1.msra.mxu0 0.0
    %1734 = vmatprep.subr.mxu0 0.0
    %1735 = vmatpush1.msra.mxu0 0.0
    %1736 = vmatprep.subr.mxu0 0.0
    %1737 = vmatpush1.msra.mxu0 0.0
    %1738 = vmatprep.subr.mxu0 0.0
    %1739 = vmatpush1.msra.mxu0 0.0
    %1740 = vmatprep.subr.mxu0 0.0
    %1741 = vmatpush1.msra.mxu0 0.0
    %1742 = vmatprep.subr.mxu0 0.0
    %1743 = vmatpush1.msra.mxu0 0.0
    %1744 = vmatprep.subr.mxu0 0.0
    %1745 = vmatpush1.msra.mxu0 0.0
    %1746 = vmatprep.subr.mxu0 0.0
    %1747 = vmatpush1.msra.mxu0 0.0
    %1748 = vmatprep.subr.mxu0 0.0
    %1749 = vmatpush1.msra.mxu0 0.0
    %1750 = vmatprep.subr.mxu0 0.0
    %1751 = vmatpush1.msra.mxu0 0.0
    %1752 = vmatprep.mubr.f32.mxu0 0.0
    %1753 = vmatmul.mubr.f32.gmra.mrb[0].mxu0 %v1598
    %v1754 = vpop.f32.mrb[0].mxu0
    %v1755 = vadd.f32 %v435, %v1754
    %v1756 = vpop.f32.mrb[0].mxu0
    %1757 = vdwg.mxu0
    %v1758 = vmul.f32 %v1680, %v1755
    %v1759 = vadd.f32 %v1602, %v1758
    %v1760 = vtanh.pop %v1759
    %v1761 = vsub.f32 1.0, %v1687
    %v1762 = vmul.f32 %v1761, %v1760
    %v1763 = vmul.f32 %v1687, %v1598
    %v1764 = vadd.f32 %v1762, %v1763
    %1765 = vst [vmem:[#allocation3] sm:$0xff] %v1764
    // Predicated region
    $region38: #{tpu_custom_call.1} parent=1 // pred_check
      %p1766 = pneg %p62
    $region39: #{tpu_custom_call.1} parent=1 // pred_check_branch
      %1768 = sbr.rel (%p1766) target = $region41
    $region40: #{tpu_custom_call.1} parent=1 // pred_region
      %1769 = vst [vmem:[#allocation10] sm:$0xff] %v1764
    $region41: #{tpu_custom_call.1} parent=1 // pred_fallthru
      _
    // Predicated region
    $region42: #{tpu_custom_call.1} parent=1 // pred_check
      _
    $region43: #{tpu_custom_call.1} parent=1 // pred_check_branch
      %1771 = sbr.rel (0) target = $region45
    $region44: #{tpu_custom_call.1} parent=1 // pred_region
      %s1773 = ssub.s32 128, 128
      %1774 = vsyncadd [#allocation6], %s1773
      %s1776 = sshll.u32 [#allocation10], 4
      %s1777 = int_to_ptr.vmem [resolvable:$true] %s1776
      %1779 = dma.vmem_to_hbm [thread:$0]  %s1777, 128, %s5, [#allocation6]
    $region45: #{tpu_custom_call.1} parent=1 // pred_fallthru
      _
    // Predicated region
    $region46: #{tpu_custom_call.1} parent=1 // pred_check
      _
    $region47: #{tpu_custom_call.1} parent=1 // pred_check_branch
      %1781 = sbr.rel (0) target = $region49
    $region48: #{tpu_custom_call.1} parent=1 // pred_region
      %1782 = dma.done [#allocation6], 128
    $region49: #{tpu_custom_call.1} parent=1 // pred_fallthru
      _
    %1783 = vsyncpa [#allocation5], 1
    %1784 = vsyncpa [#allocation8], 1
    %1785 = vsyncpa [#allocation6], 1

// kernel: tpu_custom_call.1
$region0: #{tpu_custom_call.1}
  #allocation0 [shape = 'u32[]', space=smem, size = 0x4, offset = 0x4, fixed_abs, tag = 'smem constant byte address 0x4 - core index']
  #allocation1 [shape = 'u32[144,128]{1,0:T(1,128)}', space=vmem, size = 0x12000, scoped, tag = 'internal scratch']
  #allocation2 [shape = 'f32[8,8,384]{2,1,0:T(8,128)}', space=vmem, size = 0x18000, scoped, tag = 'scratch operand']
  #allocation3 [shape = 'f32[8,128]{1,0:T(8,128)}', space=vmem, size = 0x1000, scoped, tag = 'scratch operand']
  %s0 = inlined_call_operand.hbm [shape: f32[8,8,128], index: 0, kind: input, shape index: {}]
  %s1 = inlined_call_operand.hbm [shape: f32[128,384], index: 1, kind: input, shape index: {}]
  %s2 = inlined_call_operand.vmem [shape: f32[1,384], index: 2, kind: input, shape index: {}]
  %s3 = inlined_call_operand.hbm [shape: f32[128,384], index: 3, kind: input, shape index: {}]
  %s4 = inlined_call_operand.vmem [shape: f32[1,128], index: 4, kind: input, shape index: {}]
  %s5 = inlined_call_operand.hbm [shape: f32[8,128], index: 5, kind: output, shape index: {}]
  %s6 = sld [smem:[#allocation0]]
  $region50: #{tpu_custom_call.1} parent=0
    _
  %s8 = ssub.s32 1, %s6
  %s9 = scalar_select 0, %s8, %s6
  $region1: #{tpu_custom_call.1} parent=0
    #allocation4 [shape = 'u8[32768]{0}', space=vmem, size = 0x8000, scoped, tag = 'input window, operand 0, single buffered']
    #allocation5 [shape = 's32[1]{0}', space=sflag, size = 0x4, scoped, tag = 'scoped memory for tpu_custom_call.1']
    #allocation6 [shape = 's32[1]{0}', space=sflag, size = 0x4, scoped, tag = 'scoped memory for tpu_custom_call.1']
    #allocation7 [shape = 'u8[196608]{0}', space=vmem, size = 0x30000, scoped, tag = 'input window, operand 1, single buffered']
    #allocation8 [shape = 's32[1]{0}', space=sflag, size = 0x4, scoped, tag = 'scoped memory for tpu_custom_call.1']
    #allocation9 [shape = 'u8[196608]{0}', space=vmem, size = 0x30000, scoped, tag = 'input window, operand 3, single buffered']
    #allocation10 [shape = 'u8[4096]{0}', space=vmem, size = 0x1000, scoped, tag = 'output window, operand 0, single buffered']
    %10 = vsyncpa [#allocation5], 0
    %11 = vsyncpa [#allocation8], 0
    %12 = vsyncpa [#allocation6], 0
    // Predicated region
    $region2: #{tpu_custom_call.1} parent=1 // pred_check
      _
    $region3: #{tpu_custom_call.1} parent=1 // pred_check_branch
      %14 = sbr.rel (0) target = $region5
    $region4: #{tpu_custom_call.1} parent=1 // pred_region
      %s16 = ssub.s32 1024, 1024
      %17 = vsyncadd [#allocation5], %s16
      %s18 = sshll.u32 [#allocation4], 4
      %s19 = int_to_ptr.vmem [resolvable:$true] %s18
      %24 = dma.hbm_to_vmem [thread:$0]  %s0, 1024, %s19, [#allocation5], 128, 128, 8
    $region5: #{tpu_custom_call.1} parent=1 // pred_fallthru
      _
    // Predicated region
    $region6: #{tpu_custom_call.1} parent=1 // pred_check
      _
    $region7: #{tpu_custom_call.1} parent=1 // pred_check_branch
      %26 = sbr.rel (0) target = $region9
    $region8: #{tpu_custom_call.1} parent=1 // pred_region
      %s28 = ssub.s32 6144, 6144
      %29 = vsyncadd [#allocation8], %s28
      %s30 = sshll.u32 [#allocation7], 4
      %s31 = int_to_ptr.vmem [resolvable:$true] %s30
      %36 = dma.hbm_to_vmem [thread:$0]  %s1, 6144, %s31, [#allocation8], 384, 384, 24
    $region9: #{tpu_custom_call.1} parent=1 // pred_fallthru
      _
    // Predicated region
    $region10: #{tpu_custom_call.1} parent=1 // pred_check
      _
    $region11: #{tpu_custom_call.1} parent=1 // pred_check_branch
      %38 = sbr.rel (0) target = $region13
    $region12: #{tpu_custom_call.1} parent=1 // pred_region
      _
    $region13: #{tpu_custom_call.1} parent=1 // pred_fallthru
      _
    // Predicated region
    $region14: #{tpu_custom_call.1} parent=1 // pred_check
      _
    $region15: #{tpu_custom_call.1} parent=1 // pred_check_branch
      %40 = sbr.rel (0) target = $region17
    $region16: #{tpu_custom_call.1} parent=1 // pred_region
      %s42 = ssub.s32 6144, 6144
      %43 = vsyncadd [#allocation8], %s42
      %s44 = sshll.u32 [#allocation9], 4
      %s45 = int_to_ptr.vmem [resolvable:$true] %s44
      %50 = dma.hbm_to_vmem [thread:$0]  %s3, 6144, %s45, [#allocation8], 384, 384, 24
    $region17: #{tpu_custom_call.1} parent=1 // pred_fallthru
      _
    // Predicated region
    $region18: #{tpu_custom_call.1} parent=1 // pred_check
      _
    $region19: #{tpu_custom_call.1} parent=1 // pred_check_branch
      %52 = sbr.rel (0) target = $region21
    $region20: #{tpu_custom_call.1} parent=1 // pred_region
      _
    $region21: #{tpu_custom_call.1} parent=1 // pred_fallthru
      _
    // Predicated region
    $region22: #{tpu_custom_call.1} parent=1 // pred_check
      _
    $region23: #{tpu_custom_call.1} parent=1 // pred_check_branch
      %54 = sbr.rel (0) target = $region25
    $region24: #{tpu_custom_call.1} parent=1 // pred_region
      %55 = dma.done [#allocation5], 1024
    $region25: #{tpu_custom_call.1} parent=1 // pred_fallthru
      _
    // Predicated region
    $region26: #{tpu_custom_call.1} parent=1 // pred_check
      _
    $region27: #{tpu_custom_call.1} parent=1 // pred_check_branch
      %57 = sbr.rel (0) target = $region29
    $region28: #{tpu_custom_call.1} parent=1 // pred_region
      %58 = dma.done [#allocation8], 6144
    $region29: #{tpu_custom_call.1} parent=1 // pred_fallthru
      _
    // Predicated region
    $region30: #{tpu_custom_call.1} parent=1 // pred_check
      _
    $region31: #{tpu_custom_call.1} parent=1 // pred_check_branch
      %60 = sbr.rel (0) target = $region33
    $region32: #{tpu_custom_call.1} parent=1 // pred_region
      %61 = dma.done [#allocation8], 6144
    $region33: #{tpu_custom_call.1} parent=1 // pred_fallthru
      _
    %p62 = scmp.eq.s32.totalorder 0, 0
    // Predicated region
    $region34: #{tpu_custom_call.1} parent=1 // pred_check
      %p63 = pneg %p62
    $region35: #{tpu_custom_call.1} parent=1 // pred_check_branch
      %65 = sbr.rel (%p63) target = $region37
    $region36: #{tpu_custom_call.1} parent=1 // pred_region
      %66 = vst [vmem:[#allocation3] sm:$0xff] 0.0
    $region37: #{tpu_custom_call.1} parent=1 // pred_fallthru
      _
    %v67 = vld [vmem:[#allocation4] sm:$0xff]
    %v68 = vld [vmem:[#allocation4 + $0x8] sm:$0xff]
    %v69 = vld [vmem:[#allocation4 + $0x10] sm:$0xff]
    %v70 = vld [vmem:[#allocation4 + $0x18] sm:$0xff]
    %v71 = vld [vmem:[#allocation4 + $0x20] sm:$0xff]
    %v72 = vld [vmem:[#allocation4 + $0x28] sm:$0xff]
    %v73 = vld [vmem:[#allocation4 + $0x30] sm:$0xff]
    %v74 = vld [vmem:[#allocation4 + $0x38] sm:$0xff]
    %v75 = vld [vmem:[#allocation7] sm:$0xff]
    %v76 = vld [vmem:[#allocation7 + $0x8] sm:$0xff]
    %v77 = vld [vmem:[#allocation7 + $0x10] sm:$0xff]
    %v78 = vld [vmem:[#allocation7 + $0x18] sm:$0xff]
    %v79 = vld [vmem:[#allocation7 + $0x20] sm:$0xff]
    %v80 = vld [vmem:[#allocation7 + $0x28] sm:$0xff]
    %v81 = vld [vmem:[#allocation7 + $0x30] sm:$0xff]
    %v82 = vld [vmem:[#allocation7 + $0x38] sm:$0xff]
    %v83 = vld [vmem:[#allocation7 + $0x40] sm:$0xff]
    %v84 = vld [vmem:[#allocation7 + $0x48] sm:$0xff]
    %v85 = vld [vmem:[#allocation7 + $0x50] sm:$0xff]
    %v86 = vld [vmem:[#allocation7 + $0x58] sm:$0xff]
    %v87 = vld [vmem:[#allocation7 + $0x60] sm:$0xff]
    %v88 = vld [vmem:[#allocation7 + $0x68] sm:$0xff]
    %v89 = vld [vmem:[#allocation7 + $0x70] sm:$0xff]
    %v90 = vld [vmem:[#allocation7 + $0x78] sm:$0xff]
    %v91 = vld [vmem:[#allocation7 + $0x80] sm:$0xff]
    %v92 = vld [vmem:[#allocation7 + $0x88] sm:$0xff]
    %v93 = vld [vmem:[#allocation7 + $0x90] sm:$0xff]
    %v94 = vld [vmem:[#allocation7 + $0x98] sm:$0xff]
    %v95 = vld [vmem:[#allocation7 + $0xa0] sm:$0xff]
    %v96 = vld [vmem:[#allocation7 + $0xa8] sm:$0xff]
    %v97 = vld [vmem:[#allocation7 + $0xb0] sm:$0xff]
    %v98 = vld [vmem:[#allocation7 + $0xb8] sm:$0xff]
    %v99 = vld [vmem:[#allocation7 + $0xc0] sm:$0xff]
    %v100 = vld [vmem:[#allocation7 + $0xc8] sm:$0xff]
    %v101 = vld [vmem:[#allocation7 + $0xd0] sm:$0xff]
    %v102 = vld [vmem:[#allocation7 + $0xd8] sm:$0xff]
    %v103 = vld [vmem:[#allocation7 + $0xe0] sm:$0xff]
    %v104 = vld [vmem:[#allocation7 + $0xe8] sm:$0xff]
    %v105 = vld [vmem:[#allocation7 + $0xf0] sm:$0xff]
    %v106 = vld [vmem:[#allocation7 + $0xf8] sm:$0xff]
    %v107 = vld [vmem:[#allocation7 + $0x100] sm:$0xff]
    %v108 = vld [vmem:[#allocation7 + $0x108] sm:$0xff]
    %v109 = vld [vmem:[#allocation7 + $0x110] sm:$0xff]
    %v110 = vld [vmem:[#allocation7 + $0x118] sm:$0xff]
    %v111 = vld [vmem:[#allocation7 + $0x120] sm:$0xff]
    %v112 = vld [vmem:[#allocation7 + $0x128] sm:$0xff]
    %v113 = vld [vmem:[#allocation7 + $0x130] sm:$0xff]
    %v114 = vld [vmem:[#allocation7 + $0x138] sm:$0xff]
    %v115 = vld [vmem:[#allocation7 + $0x140] sm:$0xff]
    %v116 = vld [vmem:[#allocation7 + $0x148] sm:$0xff]
    %v117 = vld [vmem:[#allocation7 + $0x150] sm:$0xff]
    %v118 = vld [vmem:[#allocation7 + $0x158] sm:$0xff]
    %v119 = vld [vmem:[#allocation7 + $0x160] sm:$0xff]
    %v120 = vld [vmem:[#allocation7 + $0x168] sm:$0xff]
    %v121 = vld [vmem:[#allocation7 + $0x170] sm:$0xff]
    %v122 = vld [vmem:[#allocation7 + $0x178] sm:$0xff]
    %v123 = vld [vmem:[%s2] sm:$0x7]
    %v125 = vlaneseq
    %v126 = vshrl.u32 %v125, 7
    %v127 = vsub.s32 0, %v126
    %v128 = vrot.slane %v123, %v127
    %v129 = vlaneseq
    %v130 = vshrl.u32 %v129, 7
    %v131 = vsub.s32 1, %v130
    %v132 = vrot.slane %v123, %v131
    %v133 = vlaneseq
    %v134 = vshrl.u32 %v133, 7
    %v135 = vsub.s32 2, %v134
    %v136 = vrot.slane %v123, %v135
    %140 = vmatprep.subr.mxu0 %v76
    %141 = vmatpush1.msra.mxu0 %v75
    %142 = vmatprep.subr.mxu0 %v79
    %143 = vmatpush1.msra.mxu0 %v78
    %144 = vmatprep.subr.mxu0 %v82
    %145 = vmatpush1.msra.mxu0 %v81
    %146 = vmatprep.subr.mxu0 %v85
    %147 = vmatpush1.msra.mxu0 %v84
    %148 = vmatprep.subr.mxu0 %v88
    %149 = vmatpush1.msra.mxu0 %v87
    %150 = vmatprep.subr.mxu0 %v91
    %151 = vmatpush1.msra.mxu0 %v90
    %152 = vmatprep.subr.mxu0 %v94
    %153 = vmatpush1.msra.mxu0 %v93
    %154 = vmatprep.subr.mxu0 %v97
    %155 = vmatpush1.msra.mxu0 %v96
    %156 = vmatprep.subr.mxu0 %v100
    %157 = vmatpush1.msra.mxu0 %v99
    %158 = vmatprep.subr.mxu0 %v103
    %159 = vmatpush1.msra.mxu0 %v102
    %160 = vmatprep.subr.mxu0 %v106
    %161 = vmatpush1.msra.mxu0 %v105
    %162 = vmatprep.subr.mxu0 %v109
    %163 = vmatpush1.msra.mxu0 %v108
    %164 = vmatprep.subr.mxu0 %v112
    %165 = vmatpush1.msra.mxu0 %v111
    %166 = vmatprep.subr.mxu0 %v115
    %167 = vmatpush1.msra.mxu0 %v114
    %168 = vmatprep.subr.mxu0 %v118
    %169 = vmatpush1.msra.mxu0 %v117
    %170 = vmatprep.subr.mxu0 %v121
    %171 = vmatpush1.msra.mxu0 %v120
    %172 = vmatprep.subr.mxu0 0.0
    %173 = vmatpush1.msra.mxu0 0.0
    %174 = vmatprep.subr.mxu0 0.0
    %175 = vmatpush1.msra.mxu0 0.0
    %176 = vmatprep.subr.mxu0 0.0
    %177 = vmatpush1.msra.mxu0 0.0
    %178 = vmatprep.subr.mxu0 0.0
    %179 = vmatpush1.msra.mxu0 0.0
    %180 = vmatprep.subr.mxu0 0.0
    %181 = vmatpush1.msra.mxu0 0.0
    %182 = vmatprep.subr.mxu0 0.0
    %183 = vmatpush1.msra.mxu0 0.0
    %184 = vmatprep.subr.mxu0 0.0
    %185 = vmatpush1.msra.mxu0 0.0
    %186 = vmatprep.subr.mxu0 0.0
    %187 = vmatpush1.msra.mxu0 0.0
    %188 = vmatprep.subr.mxu0 0.0
    %189 = vmatpush1.msra.mxu0 0.0
    %190 = vmatprep.subr.mxu0 0.0
    %191 = vmatpush1.msra.mxu0 0.0
    %192 = vmatprep.subr.mxu0 0.0
    %193 = vmatpush1.msra.mxu0 0.0
    %194 = vmatprep.subr.mxu0 0.0
    %195 = vmatpush1.msra.mxu0 0.0
    %196 = vmatprep.subr.mxu0 0.0
    %197 = vmatpush1.msra.mxu0 0.0
    %198 = vmatprep.subr.mxu0 0.0
    %199 = vmatpush1.msra.mxu0 0.0
    %200 = vmatprep.subr.mxu0 0.0
    %201 = vmatpush1.msra.mxu0 0.0
    %202 = vmatprep.subr.mxu0 0.0
    %203 = vmatpush1.msra.mxu0 0.0
    %204 = vmatprep.mubr.f32.mxu0 0.0
    %205 = vmatmul.mubr.f32.gmra.mrb[0].mxu0 %v67
    %v206 = vpop.f32.mrb[0].mxu0
    %v207 = vadd.f32 %v128, %v206
    %v208 = vpop.f32.mrb[0].mxu0
    %v209 = vadd.f32 %v132, %v208
    %210 = vmatprep.mubr.f32.mxu0 0.0
    %211 = vmatmul.mubr.f32.gmra.mrb[0].mxu0 %v68
    %v212 = vpop.f32.mrb[0].mxu0
    %v213 = vadd.f32 %v128, %v212
    %v214 = vpop.f32.mrb[0].mxu0
    %v215 = vadd.f32 %v132, %v214
    %216 = vmatprep.mubr.f32.mxu0 0.0
    %217 = vmatmul.mubr.f32.gmra.mrb[0].mxu0 %v69
    %v218 = vpop.f32.mrb[0].mxu0
    %v219 = vadd.f32 %v128, %v218
    %v220 = vpop.f32.mrb[0].mxu0
    %v221 = vadd.f32 %v132, %v220
    %222 = vmatprep.mubr.f32.mxu0 0.0
    %223 = vmatmul.mubr.f32.gmra.mrb[0].mxu0 %v70
    %v224 = vpop.f32.mrb[0].mxu0
    %v225 = vadd.f32 %v128, %v224
    %v226 = vpop.f32.mrb[0].mxu0
    %v227 = vadd.f32 %v132, %v226
    %228 = vmatprep.mubr.f32.mxu0 0.0
    %229 = vmatmul.mubr.f32.gmra.mrb[0].mxu0 %v71
    %v230 = vpop.f32.mrb[0].mxu0
    %v231 = vadd.f32 %v128, %v230
    %v232 = vpop.f32.mrb[0].mxu0
    %v233 = vadd.f32 %v132, %v232
    %234 = vmatprep.mubr.f32.mxu0 0.0
    %235 = vmatmul.mubr.f32.gmra.mrb[0].mxu0 %v72
    %v236 = vpop.f32.mrb[0].mxu0
    %v237 = vadd.f32 %v128, %v236
    %v238 = vpop.f32.mrb[0].mxu0
    %v239 = vadd.f32 %v132, %v238
    %240 = vmatprep.mubr.f32.mxu0 0.0
    %241 = vmatmul.mubr.f32.gmra.mrb[0].mxu0 %v73
    %v242 = vpop.f32.mrb[0].mxu0
    %v243 = vadd.f32 %v128, %v242
    %v244 = vpop.f32.mrb[0].mxu0
    %v245 = vadd.f32 %v132, %v244
    %246 = vmatprep.mubr.f32.mxu0 0.0
    %247 = vmatmul.mubr.f32.gmra.mrb[0].mxu0 %v74
    %v248 = vpop.f32.mrb[0].mxu0
    %v249 = vadd.f32 %v128, %v248
    %v250 = vpop.f32.mrb[0].mxu0
    %v251 = vadd.f32 %v132, %v250
    %252 = vdwg.mxu0
    %253 = vmatprep.subr.mxu0 0.0
    %254 = vmatpush1.msra.mxu0 %v77
    %255 = vmatprep.subr.mxu0 0.0
    %256 = vmatpush1.msra.mxu0 %v80
    %257 = vmatprep.subr.mxu0 0.0
    %258 = vmatpush1.msra.mxu0 %v83
    %259 = vmatprep.subr.mxu0 0.0
    %260 = vmatpush1.msra.mxu0 %v86
    %261 = vmatprep.subr.mxu0 0.0
    %262 = vmatpush1.msra.mxu0 %v89
    %263 = vmatprep.subr.mxu0 0.0
    %264 = vmatpush1.msra.mxu0 %v92
    %265 = vmatprep.subr.mxu0 0.0
    %266 = vmatpush1.msra.mxu0 %v95
    %267 = vmatprep.subr.mxu0 0.0
    %268 = vmatpush1.msra.mxu0 %v98
    %269 = vmatprep.subr.mxu0 0.0
    %270 = vmatpush1.msra.mxu0 %v101
    %271 = vmatprep.subr.mxu0 0.0
    %272 = vmatpush1.msra.mxu0 %v104
    %273 = vmatprep.subr.mxu0 0.0
    %274 = vmatpush1.msra.mxu0 %v107
    %275 = vmatprep.subr.mxu0 0.0
    %276 = vmatpush1.msra.mxu0 %v110
    %277 = vmatprep.subr.mxu0 0.0
    %278 = vmatpush1.msra.mxu0 %v113
    %279 = vmatprep.subr.mxu0 0.0
    %280 = vmatpush1.msra.mxu0 %v116
    %281 = vmatprep.subr.mxu0 0.0
    %282 = vmatpush1.msra.mxu0 %v119
    %283 = vmatprep.subr.mxu0 0.0
    %284 = vmatpush1.msra.mxu0 %v122
    %285 = vmatprep.subr.mxu0 0.0
    %286 = vmatpush1.msra.mxu0 0.0
    %287 = vmatprep.subr.mxu0 0.0
    %288 = vmatpush1.msra.mxu0 0.0
    %289 = vmatprep.subr.mxu0 0.0
    %290 = vmatpush1.msra.mxu0 0.0
    %291 = vmatprep.subr.mxu0 0.0
    %292 = vmatpush1.msra.mxu0 0.0
    %293 = vmatprep.subr.mxu0 0.0
    %294 = vmatpush1.msra.mxu0 0.0
    %295 = vmatprep.subr.mxu0 0.0
    %296 = vmatpush1.msra.mxu0 0.0
    %297 = vmatprep.subr.mxu0 0.0
    %298 = vmatpush1.msra.mxu0 0.0
    %299 = vmatprep.subr.mxu0 0.0
    %300 = vmatpush1.msra.mxu0 0.0
    %301 = vmatprep.subr.mxu0 0.0
    %302 = vmatpush1.msra.mxu0 0.0
    %303 = vmatprep.subr.mxu0 0.0
    %304 = vmatpush1.msra.mxu0 0.0
    %305 = vmatprep.subr.mxu0 0.0
    %306 = vmatpush1.msra.mxu0 0.0
    %307 = vmatprep.subr.mxu0 0.0
    %308 = vmatpush1.msra.mxu0 0.0
    %309 = vmatprep.subr.mxu0 0.0
    %310 = vmatpush1.msra.mxu0 0.0
    %311 = vmatprep.subr.mxu0 0.0
    %312 = vmatpush1.msra.mxu0 0.0
    %313 = vmatprep.subr.mxu0 0.0
    %314 = vmatpush1.msra.mxu0 0.0
    %315 = vmatprep.subr.mxu0 0.0
    %316 = vmatpush1.msra.mxu0 0.0
    %317 = vmatprep.mubr.f32.mxu0 0.0
    %318 = vmatmul.mubr.f32.gmra.mrb[0].mxu0 %v67
    %v319 = vpop.f32.mrb[0].mxu0
    %v320 = vadd.f32 %v136, %v319
    %v321 = vpop.f32.mrb[0].mxu0
    %322 = vmatprep.mubr.f32.mxu0 0.0
    %323 = vmatmul.mubr.f32.gmra.mrb[0].mxu0 %v68
    %v324 = vpop.f32.mrb[0].mxu0
    %v325 = vadd.f32 %v136, %v324
    %v326 = vpop.f32.mrb[0].mxu0
    %327 = vmatprep.mubr.f32.mxu0 0.0
    %328 = vmatmul.mubr.f32.gmra.mrb[0].mxu0 %v69
    %v329 = vpop.f32.mrb[0].mxu0
    %v330 = vadd.f32 %v136, %v329
    %v331 = vpop.f32.mrb[0].mxu0
    %332 = vmatprep.mubr.f32.mxu0 0.0
    %333 = vmatmul.mubr.f32.gmra.mrb[0].mxu0 %v70
    %v334 = vpop.f32.mrb[0].mxu0
    %v335 = vadd.f32 %v136, %v334
    %v336 = vpop.f32.mrb[0].mxu0
    %337 = vmatprep.mubr.f32.mxu0 0.0
    %338 = vmatmul.mubr.f32.gmra.mrb[0].mxu0 %v71
    %v339 = vpop.f32.mrb[0].mxu0
    %v340 = vadd.f32 %v136, %v339
    %v341 = vpop.f32.mrb[0].mxu0
    %342 = vmatprep.mubr.f32.mxu0 0.0
    %343 = vmatmul.mubr.f32.gmra.mrb[0].mxu0 %v72
    %v344 = vpop.f32.mrb[0].mxu0
    %v345 = vadd.f32 %v136, %v344
    %v346 = vpop.f32.mrb[0].mxu0
    %347 = vmatprep.mubr.f32.mxu0 0.0
    %348 = vmatmul.mubr.f32.gmra.mrb[0].mxu0 %v73
    %v349 = vpop.f32.mrb[0].mxu0
    %v350 = vadd.f32 %v136, %v349
    %v351 = vpop.f32.mrb[0].mxu0
    %352 = vmatprep.mubr.f32.mxu0 0.0
    %353 = vmatmul.mubr.f32.gmra.mrb[0].mxu0 %v74
    %v354 = vpop.f32.mrb[0].mxu0
    %v355 = vadd.f32 %v136, %v354
    %v356 = vpop.f32.mrb[0].mxu0
    %357 = vdwg.mxu0
    %358 = vst [vmem:[#allocation2] sm:$0xff] %v207
    %359 = vst [vmem:[#allocation2 + $0x8] sm:$0xff] %v209
    %360 = vst [vmem:[#allocation2 + $0x10] sm:$0xff] %v320
    %361 = vst [vmem:[#allocation2 + $0x18] sm:$0xff] %v213
    %362 = vst [vmem:[#allocation2 + $0x20] sm:$0xff] %v215
    %363 = vst [vmem:[#allocation2 + $0x28] sm:$0xff] %v325
    %364 = vst [vmem:[#allocation2 + $0x30] sm:$0xff] %v219
    %365 = vst [vmem:[#allocation2 + $0x38] sm:$0xff] %v221
    %366 = vst [vmem:[#allocation2 + $0x40] sm:$0xff] %v330
    %367 = vst [vmem:[#allocation2 + $0x48] sm:$0xff] %v225
    %368 = vst [vmem:[#allocation2 + $0x50] sm:$0xff] %v227
    %369 = vst [vmem:[#allocation2 + $0x58] sm:$0xff] %v335
    %370 = vst [vmem:[#allocation2 + $0x60] sm:$0xff] %v231
    %371 = vst [vmem:[#allocation2 + $0x68] sm:$0xff] %v233
    %372 = vst [vmem:[#allocation2 + $0x70] sm:$0xff] %v340
    %373 = vst [vmem:[#allocation2 + $0x78] sm:$0xff] %v237
    %374 = vst [vmem:[#allocation2 + $0x80] sm:$0xff] %v239
    %375 = vst [vmem:[#allocation2 + $0x88] sm:$0xff] %v345
    %376 = vst [vmem:[#allocation2 + $0x90] sm:$0xff] %v243
    %377 = vst [vmem:[#allocation2 + $0x98] sm:$0xff] %v245
    %378 = vst [vmem:[#allocation2 + $0xa0] sm:$0xff] %v350
    %379 = vst [vmem:[#allocation2 + $0xa8] sm:$0xff] %v249
    %380 = vst [vmem:[#allocation2 + $0xb0] sm:$0xff] %v251
    %381 = vst [vmem:[#allocation2 + $0xb8] sm:$0xff] %v355
    %v382 = vld [vmem:[#allocation9] sm:$0xff]
    %v383 = vld [vmem:[#allocation9 + $0x8] sm:$0xff]
    %v384 = vld [vmem:[#allocation9 + $0x10] sm:$0xff]
    %v385 = vld [vmem:[#allocation9 + $0x18] sm:$0xff]
    %v386 = vld [vmem:[#allocation9 + $0x20] sm:$0xff]
    %v387 = vld [vmem:[#allocation9 + $0x28] sm:$0xff]
    %v388 = vld [vmem:[#allocation9 + $0x30] sm:$0xff]
    %v389 = vld [vmem:[#allocation9 + $0x38] sm:$0xff]
    %v390 = vld [vmem:[#allocation9 + $0x40] sm:$0xff]
    %v391 = vld [vmem:[#allocation9 + $0x48] sm:$0xff]
    %v392 = vld [vmem:[#allocation9 + $0x50] sm:$0xff]
    %v393 = vld [vmem:[#allocation9 + $0x58] sm:$0xff]
    %v394 = vld [vmem:[#allocation9 + $0x60] sm:$0xff]
    %v395 = vld [vmem:[#allocation9 + $0x68] sm:$0xff]
    %v396 = vld [vmem:[#allocation9 + $0x70] sm:$0xff]
    %v397 = vld [vmem:[#allocation9 + $0x78] sm:$0xff]
    %v398 = vld [vmem:[#allocation9 + $0x80] sm:$0xff]
    %v399 = vld [vmem:[#allocation9 + $0x88] sm:$0xff]
    %v400 = vld [vmem:[#allocation9 + $0x90] sm:$0xff]
    %v401 = vld [vmem:[#allocation9 + $0x98] sm:$0xff]
    %v402 = vld [vmem:[#allocation9 + $0xa0] sm:$0xff]
    %v403 = vld [vmem:[#allocation9 + $0xa8] sm:$0xff]
    %v404 = vld [vmem:[#allocation9 + $0xb0] sm:$0xff]
    %v405 = vld [vmem:[#allocation9 + $0xb8] sm:$0xff]
    %v406 = vld [vmem:[#allocation9 + $0xc0] sm:$0xff]
    %v407 = vld [vmem:[#allocation9 + $0xc8] sm:$0xff]
    %v408 = vld [vmem:[#allocation9 + $0xd0] sm:$0xff]
    %v409 = vld [vmem:[#allocation9 + $0xd8] sm:$0xff]
    %v410 = vld [vmem:[#allocation9 + $0xe0] sm:$0xff]
    %v411 = vld [vmem:[#allocation9 + $0xe8] sm:$0xff]
    %v412 = vld [vmem:[#allocation9 + $0xf0] sm:$0xff]
    %v413 = vld [vmem:[#allocation9 + $0xf8] sm:$0xff]
    %v414 = vld [vmem:[#allocation9 + $0x100] sm:$0xff]
    %v415 = vld [vmem:[#allocation9 + $0x108] sm:$0xff]
    %v416 = vld [vmem:[#allocation9 + $0x110] sm:$0xff]
    %v417 = vld [vmem:[#allocation9 + $0x118] sm:$0xff]
    %v418 = vld [vmem:[#allocation9 + $0x120] sm:$0xff]
    %v419 = vld [vmem:[#allocation9 + $0x128] sm:$0xff]
    %v420 = vld [vmem:[#allocation9 + $0x130] sm:$0xff]
    %v421 = vld [vmem:[#allocation9 + $0x138] sm:$0xff]
    %v422 = vld [vmem:[#allocation9 + $0x140] sm:$0xff]
    %v423 = vld [vmem:[#allocation9 + $0x148] sm:$0xff]
    %v424 = vld [vmem:[#allocation9 + $0x150] sm:$0xff]
    %v425 = vld [vmem:[#allocation9 + $0x158] sm:$0xff]
    %v426 = vld [vmem:[#allocation9 + $0x160] sm:$0xff]
    %v427 = vld [vmem:[#allocation9 + $0x168] sm:$0xff]
    %v428 = vld [vmem:[#allocation9 + $0x170] sm:$0xff]
    %v429 = vld [vmem:[#allocation9 + $0x178] sm:$0xff]
    %v430 = vld [vmem:[%s4] sm:$0x1]
    %v432 = vlaneseq
    %v433 = vshrl.u32 %v432, 7
    %v434 = vsub.s32 0, %v433
    %v435 = vrot.slane %v430, %v434
    %v437 = vld [vmem:[#allocation3] sm:$0xff]
    %v438 = vld [vmem:[#allocation2] sm:$0xff]
    %v439 = vld [vmem:[#allocation2 + $0x8] sm:$0xff]
    %v440 = vld [vmem:[#allocation2 + $0x10] sm:$0xff]
    %441 = vmatprep.subr.mxu0 %v383
    %442 = vmatpush1.msra.mxu0 %v382
    %443 = vmatprep.subr.mxu0 %v386
    %444 = vmatpush1.msra.mxu0 %v385
    %445 = vmatprep.subr.mxu0 %v389
    %446 = vmatpush1.msra.mxu0 %v388
    %447 = vmatprep.subr.mxu0 %v392
    %448 = vmatpush1.msra.mxu0 %v391
    %449 = vmatprep.subr.mxu0 %v395
    %450 = vmatpush1.msra.mxu0 %v394
    %451 = vmatprep.subr.mxu0 %v398
    %452 = vmatpush1.msra.mxu0 %v397
    %453 = vmatprep.subr.mxu0 %v401
    %454 = vmatpush1.msra.mxu0 %v400
    %455 = vmatprep.subr.mxu0 %v404
    %456 = vmatpush1.msra.mxu0 %v403
    %457 = vmatprep.subr.mxu0 %v407
    %458 = vmatpush1.msra.mxu0 %v406
    %459 = vmatprep.subr.mxu0 %v410
    %460 = vmatpush1.msra.mxu0 %v409
    %461 = vmatprep.subr.mxu0 %v413
    %462 = vmatpush1.msra.mxu0 %v412
    %463 = vmatprep.subr.mxu0 %v416
    %464 = vmatpush1.msra.mxu0 %v415
    %465 = vmatprep.subr.mxu0 %v419
    %466 = vmatpush1.msra.mxu0 %v418
    %467 = vmatprep.subr.mxu0 %v422
    %468 = vmatpush1.msra.mxu0 %v421
    %469 = vmatprep.subr.mxu0 %v425
    %470 = vmatpush1.msra.mxu0 %v424
    %471 = vmatprep.subr.mxu0 %v428
    %472 = vmatpush1.msra.mxu0 %v427
    %473 = vmatprep.subr.mxu0 0.0
    %474 = vmatpush1.msra.mxu0 0.0
    %475 = vmatprep.subr.mxu0 0.0
    %476 = vmatpush1.msra.mxu0 0.0
    %477 = vmatprep.subr.mxu0 0.0
    %478 = vmatpush1.msra.mxu0 0.0
    %479 = vmatprep.subr.mxu0 0.0
    %480 = vmatpush1.msra.mxu0 0.0
    %481 = vmatprep.subr.mxu0 0.0
    %482 = vmatpush1.msra.mxu0 0.0
    %483 = vmatprep.subr.mxu0 0.0
    %484 = vmatpush1.msra.mxu0 0.0
    %485 = vmatprep.subr.mxu0 0.0
    %486 = vmatpush1.msra.mxu0 0.0
    %487 = vmatprep.subr.mxu0 0.0
    %488 = vmatpush1.msra.mxu0 0.0
    %489 = vmatprep.subr.mxu0 0.0
    %490 = vmatpush1.msra.mxu0 0.0
    %491 = vmatprep.subr.mxu0 0.0
    %492 = vmatpush1.msra.mxu0 0.0
    %493 = vmatprep.subr.mxu0 0.0
    %494 = vmatpush1.msra.mxu0 0.0
    %495 = vmatprep.subr.mxu0 0.0
    %496 = vmatpush1.msra.mxu0 0.0
    %497 = vmatprep.subr.mxu0 0.0
    %498 = vmatpush1.msra.mxu0 0.0
    %499 = vmatprep.subr.mxu0 0.0
    %500 = vmatpush1.msra.mxu0 0.0
    %501 = vmatprep.subr.mxu0 0.0
    %502 = vmatpush1.msra.mxu0 0.0
    %503 = vmatprep.subr.mxu0 0.0
    %504 = vmatpush1.msra.mxu0 0.0
    %505 = vmatprep.mubr.f32.mxu0 0.0
    %506 = vmatmul.mubr.f32.gmra.mrb[0].mxu0 %v437
    %v507 = vpop.f32.mrb[0].mxu0
    %v508 = vadd.f32 0.0, %v507
    %v509 = vpop.f32.mrb[0].mxu0
    %v510 = vadd.f32 0.0, %v509
    %511 = vdwg.mxu0
    %v512 = vadd.f32 %v438, %v508
    %v513 = vxor.u32 %v512, 2147483648
    %v514 = vmul.f32 %v513, 1.442695
    %v515 = vpow.pop %v514
    %v516 = vadd.f32 %v515, 1.0
    %v517 = vrcp.pop %v516
    %v518 = vmul.f32 1.0, %v517
    %v519 = vadd.f32 %v439, %v510
    %v520 = vxor.u32 %v519, 2147483648
    %v521 = vmul.f32 %v520, 1.442695
    %v522 = vpow.pop %v521
    %v523 = vadd.f32 %v522, 1.0
    %v524 = vrcp.pop %v523
    %v525 = vmul.f32 1.0, %v524
    %526 = vmatprep.subr.mxu0 0.0
    %527 = vmatpush1.msra.mxu0 %v384
    %528 = vmatprep.subr.mxu0 0.0
    %529 = vmatpush1.msra.mxu0 %v387
    %530 = vmatprep.subr.mxu0 0.0
    %531 = vmatpush1.msra.mxu0 %v390
    %532 = vmatprep.subr.mxu0 0.0
    %533 = vmatpush1.msra.mxu0 %v393
    %534 = vmatprep.subr.mxu0 0.0
    %535 = vmatpush1.msra.mxu0 %v396
    %536 = vmatprep.subr.mxu0 0.0
    %537 = vmatpush1.msra.mxu0 %v399
    %538 = vmatprep.subr.mxu0 0.0
    %539 = vmatpush1.msra.mxu0 %v402
    %540 = vmatprep.subr.mxu0 0.0
    %541 = vmatpush1.msra.mxu0 %v405
    %542 = vmatprep.subr.mxu0 0.0
    %543 = vmatpush1.msra.mxu0 %v408
    %544 = vmatprep.subr.mxu0 0.0
    %545 = vmatpush1.msra.mxu0 %v411
    %546 = vmatprep.subr.mxu0 0.0
    %547 = vmatpush1.msra.mxu0 %v414
    %548 = vmatprep.subr.mxu0 0.0
    %549 = vmatpush1.msra.mxu0 %v417
    %550 = vmatprep.subr.mxu0 0.0
    %551 = vmatpush1.msra.mxu0 %v420
    %552 = vmatprep.subr.mxu0 0.0
    %553 = vmatpush1.msra.mxu0 %v423
    %554 = vmatprep.subr.mxu0 0.0
    %555 = vmatpush1.msra.mxu0 %v426
    %556 = vmatprep.subr.mxu0 0.0
    %557 = vmatpush1.msra.mxu0 %v429
    %558 = vmatprep.subr.mxu0 0.0
    %559 = vmatpush1.msra.mxu0 0.0
    %560 = vmatprep.subr.mxu0 0.0
    %561 = vmatpush1.msra.mxu0 0.0
    %562 = vmatprep.subr.mxu0 0.0
    %563 = vmatpush1.msra.mxu0 0.0
    %564 = vmatprep.subr.mxu0 0.0
    %565 = vmatpush1.msra.mxu0 0.0
    %566 = vmatprep.subr.mxu0 0.0
    %567 = vmatpush1.msra.mxu0 0.0
    %568 = vmatprep.subr.mxu0 0.0
    %569 = vmatpush1.msra.mxu0 0.0
    %570 = vmatprep.subr.mxu0 0.0
    %571 = vmatpush1.msra.mxu0 0.0
    %572 = vmatprep.subr.mxu0 0.0
    %573 = vmatpush1.msra.mxu0 0.0
    %574 = vmatprep.subr.mxu0 0.0
    %575 = vmatpush1.msra.mxu0 0.0
    %576 = vmatprep.subr.mxu0 0.0
    %577 = vmatpush1.msra.mxu0 0.0
    %578 = vmatprep.subr.mxu0 0.0
    %579 = vmatpush1.msra.mxu0 0.0
    %580 = vmatprep.subr.mxu0 0.0
    %581 = vmatpush1.msra.mxu0 0.0
    %582 = vmatprep.subr.mxu0 0.0
    %583 = vmatpush1.msra.mxu0 0.0
    %584 = vmatprep.subr.mxu0 0.0
    %585 = vmatpush1.msra.mxu0 0.0
    %586 = vmatprep.subr.mxu0 0.0
    %587 = vmatpush1.msra.mxu0 0.0
    %588 = vmatprep.subr.mxu0 0.0
    %589 = vmatpush1.msra.mxu0 0.0
    %590 = vmatprep.mubr.f32.mxu0 0.0
    %591 = vmatmul.mubr.f32.gmra.mrb[0].mxu0 %v437
    %v592 = vpop.f32.mrb[0].mxu0
    %v593 = vadd.f32 %v435, %v592
    %v594 = vpop.f32.mrb[0].mxu0
    %595 = vdwg.mxu0
    %v596 = vmul.f32 %v518, %v593
    %v597 = vadd.f32 %v440, %v596
    %v598 = vtanh.pop %v597
    %v599 = vsub.f32 1.0, %v525
    %v600 = vmul.f32 %v599, %v598
    %v601 = vmul.f32 %v525, %v437
    %v602 = vadd.f32 %v600, %v601
    %s603 = scalar_lea.vmem [#allocation2], 24
    %v604 = vld [vmem:[%s603] sm:$0xff]
    %v605 = vld [vmem:[%s603 + $0x8] sm:$0xff]
    %v606 = vld [vmem:[%s603 + $0x10] sm:$0xff]
    %607 = vmatprep.subr.mxu0 %v383
    %608 = vmatpush1.msra.mxu0 %v382
    %609 = vmatprep.subr.mxu0 %v386
    %610 = vmatpush1.msra.mxu0 %v385
    %611 = vmatprep.subr.mxu0 %v389
    %612 = vmatpush1.msra.mxu0 %v388
    %613 = vmatprep.subr.mxu0 %v392
    %614 = vmatpush1.msra.mxu0 %v391
    %615 = vmatprep.subr.mxu0 %v395
    %616 = vmatpush1.msra.mxu0 %v394
    %617 = vmatprep.subr.mxu0 %v398
    %618 = vmatpush1.msra.mxu0 %v397
    %619 = vmatprep.subr.mxu0 %v401
    %620 = vmatpush1.msra.mxu0 %v400
    %621 = vmatprep.subr.mxu0 %v404
    %622 = vmatpush1.msra.mxu0 %v403
    %623 = vmatprep.subr.mxu0 %v407
    %624 = vmatpush1.msra.mxu0 %v406
    %625 = vmatprep.subr.mxu0 %v410
    %626 = vmatpush1.msra.mxu0 %v409
    %627 = vmatprep.subr.mxu0 %v413
    %628 = vmatpush1.msra.mxu0 %v412
    %629 = vmatprep.subr.mxu0 %v416
    %630 = vmatpush1.msra.mxu0 %v415
    %631 = vmatprep.subr.mxu0 %v419
    %632 = vmatpush1.msra.mxu0 %v418
    %633 = vmatprep.subr.mxu0 %v422
    %634 = vmatpush1.msra.mxu0 %v421
    %635 = vmatprep.subr.mxu0 %v425
    %636 = vmatpush1.msra.mxu0 %v424
    %637 = vmatprep.subr.mxu0 %v428
    %638 = vmatpush1.msra.mxu0 %v427
    %639 = vmatprep.subr.mxu0 0.0
    %640 = vmatpush1.msra.mxu0 0.0
    %641 = vmatprep.subr.mxu0 0.0
    %642 = vmatpush1.msra.mxu0 0.0
    %643 = vmatprep.subr.mxu0 0.0
    %644 = vmatpush1.msra.mxu0 0.0
    %645 = vmatprep.subr.mxu0 0.0
    %646 = vmatpush1.msra.mxu0 0.0
    %647 = vmatprep.subr.mxu0 0.0
    %648 = vmatpush1.msra.mxu0 0.0
    %649 = vmatprep.subr.mxu0 0.0
    %650 = vmatpush1.msra.mxu0 0.0
    %651 = vmatprep.subr.mxu0 0.0
    %652 = vmatpush1.msra.mxu0 0.0
    %653 = vmatprep.subr.mxu0 0.0
    %654 = vmatpush1.msra.mxu0 0.0
    %655 = vmatprep.subr.mxu0 0.0
    %656 = vmatpush1.msra.mxu0 0.0
    %657 = vmatprep.subr.mxu0 0.0
    %658 = vmatpush1.msra.mxu0 0.0
    %659 = vmatprep.subr.mxu0 0.0
    %660 = vmatpush1.msra.mxu0 0.0
    %661 = vmatprep.subr.mxu0 0.0
    %662 = vmatpush1.msra.mxu0 0.0
    %663 = vmatprep.subr.mxu0 0.0
    %664 = vmatpush1.msra.mxu0 0.0
    %665 = vmatprep.subr.mxu0 0.0
    %666 = vmatpush1.msra.mxu0 0.0
    %667 = vmatprep.subr.mxu0 0.0
    %668 = vmatpush1.msra.mxu0 0.0
    %669 = vmatprep.subr.mxu0 0.0
    %670 = vmatpush1.msra.mxu0 0.0
    %671 = vmatprep.mubr.f32.mxu0 0.0
    %672 = vmatmul.mubr.f32.gmra.mrb[0].mxu0 %v602
    %v673 = vpop.f32.mrb[0].mxu0
    %v674 = vadd.f32 0.0, %v673
    %v675 = vpop.f32.mrb[0].mxu0
    %v676 = vadd.f32 0.0, %v675
    %677 = vdwg.mxu0
    %v678 = vadd.f32 %v604, %v674
    %v679 = vxor.u32 %v678, 2147483648
    %v680 = vmul.f32 %v679, 1.442695
    %v681 = vpow.pop %v680
    %v682 = vadd.f32 %v681, 1.0
    %v683 = vrcp.pop %v682
    %v684 = vmul.f32 1.0, %v683
    %v685 = vadd.f32 %v605, %v676
    %v686 = vxor.u32 %v685, 2147483648
    %v687 = vmul.f32 %v686, 1.442695
    %v688 = vpow.pop %v687
    %v689 = vadd.f32 %v688, 1.0
    %v690 = vrcp.pop %v689
    %v691 = vmul.f32 1.0, %v690
    %692 = vmatprep.subr.mxu0 0.0
    %693 = vmatpush1.msra.mxu0 %v384
    %694 = vmatprep.subr.mxu0 0.0
    %695 = vmatpush1.msra.mxu0 %v387
    %696 = vmatprep.subr.mxu0 0.0
    %697 = vmatpush1.msra.mxu0 %v390
    %698 = vmatprep.subr.mxu0 0.0
    %699 = vmatpush1.msra.mxu0 %v393
    %700 = vmatprep.subr.mxu0 0.0
    %701 = vmatpush1.msra.mxu0 %v396
    %702 = vmatprep.subr.mxu0 0.0
    %703 = vmatpush1.msra.mxu0 %v399
    %704 = vmatprep.subr.mxu0 0.0
    %705 = vmatpush1.msra.mxu0 %v402
    %706 = vmatprep.subr.mxu0 0.0
    %707 = vmatpush1.msra.mxu0 %v405
    %708 = vmatprep.subr.mxu0 0.0
    %709 = vmatpush1.msra.mxu0 %v408
    %710 = vmatprep.subr.mxu0 0.0
    %711 = vmatpush1.msra.mxu0 %v411
    %712 = vmatprep.subr.mxu0 0.0
    %713 = vmatpush1.msra.mxu0 %v414
    %714 = vmatprep.subr.mxu0 0.0
    %715 = vmatpush1.msra.mxu0 %v417
    %716 = vmatprep.subr.mxu0 0.0
    %717 = vmatpush1.msra.mxu0 %v420
    %718 = vmatprep.subr.mxu0 0.0
    %719 = vmatpush1.msra.mxu0 %v423
    %720 = vmatprep.subr.mxu0 0.0
    %721 = vmatpush1.msra.mxu0 %v426
    %722 = vmatprep.subr.mxu0 0.0
    %723 = vmatpush1.msra.mxu0 %v429
    %724 = vmatprep.subr.mxu0 0.0
    %725 = vmatpush1.msra.mxu0 0.0
    %726 = vmatprep.subr.mxu0 0.0
    %727 = vmatpush1.msra.mxu0 0.0
    %728 = vmatprep.subr.mxu0 0.0
    %729 = vmatpush1.msra.mxu0 0.0
    %730 = vmatprep.subr.mxu0 0.0
    %731 = vmatpush1.msra.mxu0 0.0
    %732 = vmatprep.subr.mxu0 0.0
    %733 = vmatpush1.msra.mxu0 0.0
    %734 = vmatprep.subr.mxu0 0.0
    %735 = vmatpush1.msra.mxu0 0.0
    %736 = vmatprep.subr.mxu0 0.0
    %737 = vmatpush1.msra.mxu0 0.0
    %738 = vmatprep.subr.mxu0 0.0
    %739 = vmatpush1.msra.mxu0 0.0
    %740 = vmatprep.subr.mxu0 0.0
    %741 = vmatpush1.msra.mxu0 0.0
    %742 = vmatprep.subr.mxu0 0.0
    %743 = vmatpush1.msra.mxu0 0.0
    %744 = vmatprep.subr.mxu0 0.0
    %745 = vmatpush1.msra.mxu0 0.0
    %746 = vmatprep.subr.mxu0 0.0
    %747 = vmatpush1.msra.mxu0 0.0
    %748 = vmatprep.subr.mxu0 0.0
    %749 = vmatpush1.msra.mxu0 0.0
    %750 = vmatprep.subr.mxu0 0.0
    %751 = vmatpush1.msra.mxu0 0.0
    %752 = vmatprep.subr.mxu0 0.0
    %753 = vmatpush1.msra.mxu0 0.0
    %754 = vmatprep.subr.mxu0 0.0
    %755 = vmatpush1.msra.mxu0 0.0
    %756 = vmatprep.mubr.f32.mxu0 0.0
    %757 = vmatmul.mubr.f32.gmra.mrb[0].mxu0 %v602
    %v758 = vpop.f32.mrb[0].mxu0
    %v759 = vadd.f32 %v435, %v758
    %v760 = vpop.f32.mrb[0].mxu0
    %761 = vdwg.mxu0
    %v762 = vmul.f32 %v684, %v759
    %v763 = vadd.f32 %v606, %v762
    %v764 = vtanh.pop %v763
    %v765 = vsub.f32 1.0, %v691
    %v766 = vmul.f32 %v765, %v764
    %v767 = vmul.f32 %v691, %v602
    %v768 = vadd.f32 %v766, %v767
    %s769 = scalar_lea.vmem [#allocation2], 48
    %v770 = vld [vmem:[%s769] sm:$0xff]
    %v771 = vld [vmem:[%s769 + $0x8] sm:$0xff]
    %v772 = vld [vmem:[%s769 + $0x10] sm:$0xff]
    %773 = vmatprep.subr.mxu0 %v383
    %774 = vmatpush1.msra.mxu0 %v382
    %775 = vmatprep.subr.mxu0 %v386
    %776 = vmatpush1.msra.mxu0 %v385
    %777 = vmatprep.subr.mxu0 %v389
    %778 = vmatpush1.msra.mxu0 %v388
    %779 = vmatprep.subr.mxu0 %v392
    %780 = vmatpush1.msra.mxu0 %v391
    %781 = vmatprep.subr.mxu0 %v395
    %782 = vmatpush1.msra.mxu0 %v394
    %783 = vmatprep.subr.mxu0 %v398
    %784 = vmatpush1.msra.mxu0 %v397
    %785 = vmatprep.subr.mxu0 %v401
    %786 = vmatpush1.msra.mxu0 %v400
    %787 = vmatprep.subr.mxu0 %v404
    %788 = vmatpush1.msra.mxu0 %v403
    %789 = vmatprep.subr.mxu0 %v407
    %790 = vmatpush1.msra.mxu0 %v406
    %791 = vmatprep.subr.mxu0 %v410
    %792 = vmatpush1.msra.mxu0 %v409
    %793 = vmatprep.subr.mxu0 %v413
    %794 = vmatpush1.msra.mxu0 %v412
    %795 = vmatprep.subr.mxu0 %v416
    %796 = vmatpush1.msra.mxu0 %v415
    %797 = vmatprep.subr.mxu0 %v419
    %798 = vmatpush1.msra.mxu0 %v418
    %799 = vmatprep.subr.mxu0 %v422
    %800 = vmatpush1.msra.mxu0 %v421
    %801 = vmatprep.subr.mxu0 %v425
    %802 = vmatpush1.msra.mxu0 %v424
    %803 = vmatprep.subr.mxu0 %v428
    %804 = vmatpush1.msra.mxu0 %v427
    %805 = vmatprep.subr.mxu0 0.0
    %806 = vmatpush1.msra.mxu0 0.0
    %807 = vmatprep.subr.mxu0 0.0
    %808 = vmatpush1.msra.mxu0 0.0
    %809 = vmatprep.subr.mxu0 0.0
    %810 = vmatpush1.msra.mxu0 0.0
    %811 = vmatprep.subr.mxu0 0.0
    %812 = vmatpush1.msra.mxu0 0.0
    %813 = vmatprep.subr.mxu0 0.0
    %814 = vmatpush1.msra.mxu0 0.0
    %815 = vmatprep.subr.mxu0 0.0
    %816 = vmatpush1.msra.mxu0 0.0
    %817 = vmatprep.subr.mxu0 0.0
    %818 = vmatpush1.msra.mxu0 0.0
    %819 = vmatprep.subr.mxu0 0.0
    %820 = vmatpush1.msra.mxu0 0.0
    %821 = vmatprep.subr.mxu0 0.0
    %822 = vmatpush1.msra.mxu0 0.0
    %823 = vmatprep.subr.mxu0 0.0
    %824 = vmatpush1.msra.mxu0 0.0
    %825 = vmatprep.subr.mxu0 0.0
    %826 = vmatpush1.msra.mxu0 0.0
    %827 = vmatprep.subr.mxu0 0.0
    %828 = vmatpush1.msra.mxu0 0.0
    %829 = vmatprep.subr.mxu0 0.0
    %830 = vmatpush1.msra.mxu0 0.0
    %831 = vmatprep.subr.mxu0 0.0
    %832 = vmatpush1.msra.mxu0 0.0
    %833 = vmatprep.subr.mxu0 0.0
    %834 = vmatpush1.msra.mxu0 0.0
    %835 = vmatprep.subr.mxu0 0.0
    %836 = vmatpush1.msra.mxu0 0.0
    %837 = vmatprep.mubr.f32.mxu0 0.0
    %838 = vmatmul.mubr.f32.gmra.mrb[0].mxu0 %v768
    %v839 = vpop.f32.mrb[0].mxu0
    %v840 = vadd.f32 0.0, %v839
    %v841 = vpop.f32.mrb[0].mxu0
    %v842 = vadd.f32 0.0, %v841
    %843 = vdwg.mxu0
    %v844 = vadd.f32 %v770, %v840
    %v845 = vxor.u32 %v844, 2147483648
    %v846 = vmul.f32 %v845, 1.442695
    %v847 = vpow.pop %v846
    %v848 = vadd.f32 %v847, 1.0
    %v849 = vrcp.pop %v848
    %v850 = vmul.f32 1.0, %v849
    %v851 = vadd.f32 %v771, %v842
    %v852 = vxor.u32 %v851, 2147483648
    %v853 = vmul.f32 %v852, 1.442695
    %v854 = vpow.pop %v853
    %v855 = vadd.f32 %v854, 1.0
    %v856 = vrcp.pop %v855
    %v857 = vmul.f32 1.0, %v856
    %858 = vmatprep.subr.mxu0 0.0
    %859 = vmatpush1.msra.mxu0 %v384
    %860 = vmatprep.subr.mxu0 0.0
    %861 = vmatpush1.msra.mxu0 %v387
    %862 = vmatprep.subr.mxu0 0.0
    %863 = vmatpush1.msra.mxu0 %v390
    %864 = vmatprep.subr.mxu0 0.0
    %865 = vmatpush1.msra.mxu0 %v393
    %866 = vmatprep.subr.mxu0 0.0
    %867 = vmatpush1.msra.mxu0 %v396
    %868 = vmatprep.subr.mxu0 0.0
    %869 = vmatpush1.msra.mxu0 %v399
    %870 = vmatprep.subr.mxu0 0.0
    %871 = vmatpush1.msra.mxu0 %v402
    %872 = vmatprep.subr.mxu0 0.0
    %873 = vmatpush1.msra.mxu0 %v405
    %874 = vmatprep.subr.mxu0 0.0
    %875 = vmatpush1.msra.mxu0 %v408
    %876 = vmatprep.subr.mxu0 0.0
    %877 = vmatpush1.msra.mxu0 %v411
    %878 = vmatprep.subr.mxu0 0.0
    %879 = vmatpush1.msra.mxu0 %v414
    %880 = vmatprep.subr.mxu0 0.0
    %881 = vmatpush1.msra.mxu0 %v417
    %882 = vmatprep.subr.mxu0 0.0
    %883 = vmatpush1.msra.mxu0 %v420
    %884 = vmatprep.subr.mxu0 0.0
    %885 = vmatpush1.msra.mxu0 %v423
    %886 = vmatprep.subr.mxu0 0.0
    %887 = vmatpush1.msra.mxu0 %v426
    %888 = vmatprep.subr.mxu0 0.0
    %889 = vmatpush1.msra.mxu0 %v429
    %890 = vmatprep.subr.mxu0 0.0
    %891 = vmatpush1.msra.mxu0 0.0
    %892 = vmatprep.subr.mxu0 0.0
    %893 = vmatpush1.msra.mxu0 0.0
    %894 = vmatprep.subr.mxu0 0.0
    %895 = vmatpush1.msra.mxu0 0.0
    %896 = vmatprep.subr.mxu0 0.0
    %897 = vmatpush1.msra.mxu0 0.0
    %898 = vmatprep.subr.mxu0 0.0
    %899 = vmatpush1.msra.mxu0 0.0
    %900 = vmatprep.subr.mxu0 0.0
    %901 = vmatpush1.msra.mxu0 0.0
    %902 = vmatprep.subr.mxu0 0.0
    %903 = vmatpush1.msra.mxu0 0.0
    %904 = vmatprep.subr.mxu0 0.0
    %905 = vmatpush1.msra.mxu0 0.0
    %906 = vmatprep.subr.mxu0 0.0
    %907 = vmatpush1.msra.mxu0 0.0
    %908 = vmatprep.subr.mxu0 0.0
    %909 = vmatpush1.msra.mxu0 0.0
    %910 = vmatprep.subr.mxu0 0.0
    %911 = vmatpush1.msra.mxu0 0.0
    %912 = vmatprep.subr.mxu0 0.0
    %913 = vmatpush1.msra.mxu0 0.0
    %914 = vmatprep.subr.mxu0 0.0
    %915 = vmatpush1.msra.mxu0 0.0
    %916 = vmatprep.subr.mxu0 0.0
    %917 = vmatpush1.msra.mxu0 0.0
    %918 = vmatprep.subr.mxu0 0.0
    %919 = vmatpush1.msra.mxu0 0.0
    %920 = vmatprep.subr.mxu0 0.0
    %921 = vmatpush1.msra.mxu0 0.0
    %922 = vmatprep.mubr.f32.mxu0 0.0
    %923 = vmatmul.mubr.f32.gmra.mrb[0].mxu0 %v768
    %v924 = vpop.f32.mrb[0].mxu0
    %v925 = vadd.f32 %v435, %v924
    %v926 = vpop.f32.mrb[0].mxu0
    %927 = vdwg.mxu0
    %v928 = vmul.f32 %v850, %v925
    %v929 = vadd.f32 %v772, %v928
    %v930 = vtanh.pop %v929
    %v931 = vsub.f32 1.0, %v857
    %v932 = vmul.f32 %v931, %v930
    %v933 = vmul.f32 %v857, %v768
    %v934 = vadd.f32 %v932, %v933
    %s935 = scalar_lea.vmem [#allocation2], 72
    %v936 = vld [vmem:[%s935] sm:$0xff]
    %v937 = vld [vmem:[%s935 + $0x8] sm:$0xff]
    %v938 = vld [vmem:[%s935 + $0x10] sm:$0xff]
    %939 = vmatprep.subr.mxu0 %v383
    %940 = vmatpush1.msra.mxu0 %v382
    %941 = vmatprep.subr.mxu0 %v386
    %942 = vmatpush1.msra.mxu0 %v385
    %943 = vmatprep.subr.mxu0 %v389
    %944 = vmatpush1.msra.mxu0 %v388
    %945 = vmatprep.subr.mxu0 %v392
    %946 = vmatpush1.msra.mxu0 %v391
    %947 = vmatprep.subr.mxu0 %v395
    %948 = vmatpush1.msra.mxu0 %v394
    %949 = vmatprep.subr.mxu0 %v398
    %950 = vmatpush1.msra.mxu0 %v397
    %951 = vmatprep.subr.mxu0 %v401
    %952 = vmatpush1.msra.mxu0 %v400
    %953 = vmatprep.subr.mxu0 %v404
    %954 = vmatpush1.msra.mxu0 %v403
    %955 = vmatprep.subr.mxu0 %v407
    %956 = vmatpush1.msra.mxu0 %v406
    %957 = vmatprep.subr.mxu0 %v410
    %958 = vmatpush1.msra.mxu0 %v409
    %959 = vmatprep.subr.mxu0 %v413
    %960 = vmatpush1.msra.mxu0 %v412
    %961 = vmatprep.subr.mxu0 %v416
    %962 = vmatpush1.msra.mxu0 %v415
    %963 = vmatprep.subr.mxu0 %v419
    %964 = vmatpush1.msra.mxu0 %v418
    %965 = vmatprep.subr.mxu0 %v422
    %966 = vmatpush1.msra.mxu0 %v421
    %967 = vmatprep.subr.mxu0 %v425
    %968 = vmatpush1.msra.mxu0 %v424
    %969 = vmatprep.subr.mxu0 %v428
    %970 = vmatpush1.msra.mxu0 %v427
    %971 = vmatprep.subr.mxu0 0.0
    %972 = vmatpush1.msra.mxu0 0.0
    %973 = vmatprep.subr.mxu0 0.0
    %974 = vmatpush1.msra.mxu0 0.0
    %975 = vmatprep.subr.mxu0 0.0
    %976 = vmatpush1.msra.mxu0 0.0
    %977 = vmatprep.subr.mxu0 0.0
    %978 = vmatpush1.msra.mxu0 0.0
    %979 = vmatprep.subr.mxu0 0.0
    %980 = vmatpush1.msra.mxu0 0.0
    %981 = vmatprep.subr.mxu0 0.0
    %982 = vmatpush1.msra.mxu0 0.0
    %983 = vmatprep.subr.mxu0 0.0
    %984 = vmatpush1.msra.mxu0 0.0
    %985 = vmatprep.subr.mxu0 0.0
    %986 = vmatpush1.msra.mxu0 0.0
    %987 = vmatprep.subr.mxu0 0.0
    %988 = vmatpush1.msra.mxu0 0.0
    %989 = vmatprep.subr.mxu0 0.0
    %990 = vmatpush1.msra.mxu0 0.0
    %991 = vmatprep.subr.mxu0 0.0
    %992 = vmatpush1.msra.mxu0 0.0
    %993 = vmatprep.subr.mxu0 0.0
    %994 = vmatpush1.msra.mxu0 0.0
    %995 = vmatprep.subr.mxu0 0.0
    %996 = vmatpush1.msra.mxu0 0.0
    %997 = vmatprep.subr.mxu0 0.0
    %998 = vmatpush1.msra.mxu0 0.0
    %999 = vmatprep.subr.mxu0 0.0
    %1000 = vmatpush1.msra.mxu0 0.0
    %1001 = vmatprep.subr.mxu0 0.0
    %1002 = vmatpush1.msra.mxu0 0.0
    %1003 = vmatprep.mubr.f32.mxu0 0.0
    %1004 = vmatmul.mubr.f32.gmra.mrb[0].mxu0 %v934
    %v1005 = vpop.f32.mrb[0].mxu0
    %v1006 = vadd.f32 0.0, %v1005
    %v1007 = vpop.f32.mrb[0].mxu0
    %v1008 = vadd.f32 0.0, %v1007
    %1009 = vdwg.mxu0
    %v1010 = vadd.f32 %v936, %v1006
    %v1011 = vxor.u32 %v1010, 2147483648
    %v1012 = vmul.f32 %v1011, 1.442695
    %v1013 = vpow.pop %v1012
    %v1014 = vadd.f32 %v1013, 1.0
    %v1015 = vrcp.pop %v1014
    %v1016 = vmul.f32 1.0, %v1015
    %v1017 = vadd.f32 %v937, %v1008
    %v1018 = vxor.u32 %v1017, 2147483648
    %v1019 = vmul.f32 %v1018, 1.442695
    %v1020 = vpow.pop %v1019
    %v1021 = vadd.f32 %v1020, 1.0
    %v1022 = vrcp.pop %v1021
    %v1023 = vmul.f32 1.0, %v1022
    %1024 = vmatprep.subr.mxu0 0.0
    %1025 = vmatpush1.msra.mxu0 %v384
    %1026 = vmatprep.subr.mxu0 0.0
    %1027 = vmatpush1.msra.mxu0 %v387
    %1028 = vmatprep.subr.mxu0 0.0
    %1029 = vmatpush1.msra.mxu0 %v390
    %1030 = vmatprep.subr.mxu0 0.0
    %1031 = vmatpush1.msra.mxu0 %v393
    %1032 = vmatprep.subr.mxu0 0.0
    %1033 = vmatpush1.msra.mxu0 %v396
    %1034 = vmatprep.subr.mxu0 0.0
    %1035 = vmatpush1.msra.mxu0 %v399
    %1036 = vmatprep.subr.mxu0 0.0
    %1037 = vmatpush1.msra.mxu0 %v402
    %1038 = vmatprep.subr.mxu0 0.0
    %1039 = vmatpush1.msra.mxu0 %v405
    %1040 = vmatprep.subr.mxu0 0.0
    %1041 = vmatpush1.msra.mxu0 %v408
    %1042 = vmatprep.subr.mxu0 0.0
    %1043 = vmatpush1.msra.mxu0 %v411
    %1044 = vmatprep.subr.mxu0 0.0
    %1045 = vmatpush1.msra.mxu0 %v414
    %1046 = vmatprep.subr.mxu0 0.0
    %1047 = vmatpush1.msra.mxu0 %v417
    %1048 = vmatprep.subr.mxu0 0.0
    %1049 = vmatpush1.msra.mxu0 %v420
    %1050 = vmatprep.subr.mxu0 0.0
    %1051 = vmatpush1.msra.mxu0 %v423
    %1052 = vmatprep.subr.mxu0 0.0
    %1053 = vmatpush1.msra.mxu0 %v426
    %1054 = vmatprep.subr.mxu0 0.0
    %1055 = vmatpush1.msra.mxu0 %v429
    %1056 = vmatprep.subr.mxu0 0.0
    %1057 = vmatpush1.msra.mxu0 0.0
    %1058 = vmatprep.subr.mxu0 0.0
    %1059 = vmatpush1.msra.mxu0 0.0
    %1060 = vmatprep.subr.mxu0 0.0
    %1061 = vmatpush1.msra.mxu0 0.0
    %1062 = vmatprep.subr.mxu0 0.0
    %1063 = vmatpush1.msra.mxu0 0.0
    %1064 = vmatprep.subr.mxu0 0.0
    %1065 = vmatpush1.msra.mxu0 0.0
    %1066 = vmatprep.subr.mxu0 0.0
    %1067 = vmatpush1.msra.mxu0 0.0
    %1068 = vmatprep.subr.mxu0 0.0
    %1069 = vmatpush1.msra.mxu0 0.0
    %1070 = vmatprep.subr.mxu0 0.0
    %1071 = vmatpush1.msra.mxu0 0.0
    %1072 = vmatprep.subr.mxu0 0.0
    %1073 = vmatpush1.msra.mxu0 0.0
    %1074 = vmatprep.subr.mxu0 0.0
    %1075 = vmatpush1.msra.mxu0 0.0
    %1076 = vmatprep.subr.mxu0 0.0
    %1077 = vmatpush1.msra.mxu0 0.0
    %1078 = vmatprep.subr.mxu0 0.0
    %1079 = vmatpush1.msra.mxu0 0.0
    %1080 = vmatprep.subr.mxu0 0.0
    %1081 = vmatpush1.msra.mxu0 0.0
    %1082 = vmatprep.subr.mxu0 0.0
    %1083 = vmatpush1.msra.mxu0 0.0
    %1084 = vmatprep.subr.mxu0 0.0
    %1085 = vmatpush1.msra.mxu0 0.0
    %1086 = vmatprep.subr.mxu0 0.0
    %1087 = vmatpush1.msra.mxu0 0.0
    %1088 = vmatprep.mubr.f32.mxu0 0.0
    %1089 = vmatmul.mubr.f32.gmra.mrb[0].mxu0 %v934
    %v1090 = vpop.f32.mrb[0].mxu0
    %v1091 = vadd.f32 %v435, %v1090
    %v1092 = vpop.f32.mrb[0].mxu0
    %1093 = vdwg.mxu0
    %v1094 = vmul.f32 %v1016, %v1091
    %v1095 = vadd.f32 %v938, %v1094
    %v1096 = vtanh.pop %v1095
    %v1097 = vsub.f32 1.0, %v1023
    %v1098 = vmul.f32 %v1097, %v1096
    %v1099 = vmul.f32 %v1023, %v934
    %v1100 = vadd.f32 %v1098, %v1099
    %s1101 = scalar_lea.vmem [#allocation2], 96
    %v1102 = vld [vmem:[%s1101] sm:$0xff]
    %v1103 = vld [vmem:[%s1101 + $0x8] sm:$0xff]
    %v1104 = vld [vmem:[%s1101 + $0x10] sm:$0xff]
    %1105 = vmatprep.subr.mxu0 %v383
    %1106 = vmatpush1.msra.mxu0 %v382
    %1107 = vmatprep.subr.mxu0 %v386
    %1108 = vmatpush1.msra.mxu0 %v385
    %1109 = vmatprep.subr.mxu0 %v389
    %1110 = vmatpush1.msra.mxu0 %v388
    %1111 = vmatprep.subr.mxu0 %v392
    %1112 = vmatpush1.msra.mxu0 %v391
    %1113 = vmatprep.subr.mxu0 %v395
    %1114 = vmatpush1.msra.mxu0 %v394
    %1115 = vmatprep.subr.mxu0 %v398
    %1116 = vmatpush1.msra.mxu0 %v397
    %1117 = vmatprep.subr.mxu0 %v401
    %1118 = vmatpush1.msra.mxu0 %v400
    %1119 = vmatprep.subr.mxu0 %v404
    %1120 = vmatpush1.msra.mxu0 %v403
    %1121 = vmatprep.subr.mxu0 %v407
    %1122 = vmatpush1.msra.mxu0 %v406
    %1123 = vmatprep.subr.mxu0 %v410
    %1124 = vmatpush1.msra.mxu0 %v409
    %1125 = vmatprep.subr.mxu0 %v413
    %1126 = vmatpush1.msra.mxu0 %v412
    %1127 = vmatprep.subr.mxu0 %v416
    %1128 = vmatpush1.msra.mxu0 %v415
    %1129 = vmatprep.subr.mxu0 %v419
    %1130 = vmatpush1.msra.mxu0 %v418
    %1131 = vmatprep.subr.mxu0 %v422
    %1132 = vmatpush1.msra.mxu0 %v421
    %1133 = vmatprep.subr.mxu0 %v425
    %1134 = vmatpush1.msra.mxu0 %v424
    %1135 = vmatprep.subr.mxu0 %v428
    %1136 = vmatpush1.msra.mxu0 %v427
    %1137 = vmatprep.subr.mxu0 0.0
    %1138 = vmatpush1.msra.mxu0 0.0
    %1139 = vmatprep.subr.mxu0 0.0
    %1140 = vmatpush1.msra.mxu0 0.0
    %1141 = vmatprep.subr.mxu0 0.0
    %1142 = vmatpush1.msra.mxu0 0.0
    %1143 = vmatprep.subr.mxu0 0.0
    %1144 = vmatpush1.msra.mxu0 0.0
    %1145 = vmatprep.subr.mxu0 0.0
    %1146 = vmatpush1.msra.mxu0 0.0
    %1147 = vmatprep.subr.mxu0 0.0
    %1148 = vmatpush1.msra.mxu0 0.0
    %1149 = vmatprep.subr.mxu0 0.0
    %1150 = vmatpush1.msra.mxu0 0.0
    %1151 = vmatprep.subr.mxu0 0.0
    %1152 = vmatpush1.msra.mxu0 0.0
    %1153 = vmatprep.subr.mxu0 0.0
    %1154 = vmatpush1.msra.mxu0 0.0
    %1155 = vmatprep.subr.mxu0 0.0
    %1156 = vmatpush1.msra.mxu0 0.0
    %1157 = vmatprep.subr.mxu0 0.0
    %1158 = vmatpush1.msra.mxu0 0.0
    %1159 = vmatprep.subr.mxu0 0.0
    %1160 = vmatpush1.msra.mxu0 0.0
    %1161 = vmatprep.subr.mxu0 0.0
    %1162 = vmatpush1.msra.mxu0 0.0
    %1163 = vmatprep.subr.mxu0 0.0
    %1164 = vmatpush1.msra.mxu0 0.0
    %1165 = vmatprep.subr.mxu0 0.0
    %1166 = vmatpush1.msra.mxu0 0.0
    %1167 = vmatprep.subr.mxu0 0.0
    %1168 = vmatpush1.msra.mxu0 0.0
    %1169 = vmatprep.mubr.f32.mxu0 0.0
    %1170 = vmatmul.mubr.f32.gmra.mrb[0].mxu0 %v1100
    %v1171 = vpop.f32.mrb[0].mxu0
    %v1172 = vadd.f32 0.0, %v1171
    %v1173 = vpop.f32.mrb[0].mxu0
    %v1174 = vadd.f32 0.0, %v1173
    %1175 = vdwg.mxu0
    %v1176 = vadd.f32 %v1102, %v1172
    %v1177 = vxor.u32 %v1176, 2147483648
    %v1178 = vmul.f32 %v1177, 1.442695
    %v1179 = vpow.pop %v1178
    %v1180 = vadd.f32 %v1179, 1.0
    %v1181 = vrcp.pop %v1180
    %v1182 = vmul.f32 1.0, %v1181
    %v1183 = vadd.f32 %v1103, %v1174
    %v1184 = vxor.u32 %v1183, 2147483648
    %v1185 = vmul.f32 %v1184, 1.442695
    %v1186 = vpow.pop %v1185
    %v1187 = vadd.f32 %v1186, 1.0
    %v1188 = vrcp.pop %v1187
    %v1189 = vmul.f32 1.0, %v1188
    %1190 = vmatprep.subr.mxu0 0.0
    %1191 = vmatpush1.msra.mxu0 %v384
    %1192 = vmatprep.subr.mxu0 0.0
    %1193 = vmatpush1.msra.mxu0 %v387
    %1194 = vmatprep.subr.mxu0 0.0
    %1195 = vmatpush1.msra.mxu0 %v390
    %1196 = vmatprep.subr.mxu0 0.0
    %1197 = vmatpush1.msra.mxu0 %v393
    %1198 = vmatprep.subr.mxu0 0.0
    %1199 = vmatpush1.msra.mxu0 %v396
    %1200 = vmatprep.subr.mxu0 0.0
    %1201 = vmatpush1.msra.mxu0 %v399
    %1202 = vmatprep.subr.mxu0 0.0
    %1203 = vmatpush1.msra.mxu0 %v402
    %1204 = vmatprep.subr.mxu0 0.0
    %1205 = vmatpush1.msra.mxu0 %v405
    %1206 = vmatprep.subr.mxu0 0.0
    %1207 = vmatpush1.msra.mxu0 %v408
    %1208 = vmatprep.subr.mxu0 0.0
    %1209 = vmatpush1.msra.mxu0 %v411
    %1210 = vmatprep.subr.mxu0 0.0
    %1211 = vmatpush1.msra.mxu0 %v414
    %1212 = vmatprep.subr.mxu0 0.0
    %1213 = vmatpush1.msra.mxu0 %v417
    %1214 = vmatprep.subr.mxu0 0.0
    %1215 = vmatpush1.msra.mxu0 %v420
    %1216 = vmatprep.subr.mxu0 0.0
    %1217 = vmatpush1.msra.mxu0 %v423
    %1218 = vmatprep.subr.mxu0 0.0
    %1219 = vmatpush1.msra.mxu0 %v426
    %1220 = vmatprep.subr.mxu0 0.0
    %1221 = vmatpush1.msra.mxu0 %v429
    %1222 = vmatprep.subr.mxu0 0.0
    %1223 = vmatpush1.msra.mxu0 0.0
    %1224 = vmatprep.subr.mxu0 0.0
    %1225 = vmatpush1.msra.mxu0 0.0
    %1226 = vmatprep.subr.mxu0 0.0
    %1227 = vmatpush1.msra.mxu0 0.0
    %1228 = vmatprep.subr.mxu0 0.0
    %1229 = vmatpush1.msra.mxu0 0.0
    %1230 = vmatprep.subr.mxu0 0.0
    %1231 = vmatpush1.msra.mxu0 0.0
    %1232 = vmatprep.subr.mxu0 0.0
    %1233 = vmatpush1.msra.mxu0 0.0
    %1234 = vmatprep.subr.mxu0 0.0
    %1235 = vmatpush1.msra.mxu0 0.0
    %1236 = vmatprep.subr.mxu0 0.0
    %1237 = vmatpush1.msra.mxu0 0.0
    %1238 = vmatprep.subr.mxu0 0.0
    %1239 = vmatpush1.msra.mxu0 0.0
    %1240 = vmatprep.subr.mxu0 0.0
    %1241 = vmatpush1.msra.mxu0 0.0
    %1242 = vmatprep.subr.mxu0 0.0
    %1243 = vmatpush1.msra.mxu0 0.0
    %1244 = vmatprep.subr.mxu0 0.0
    %1245 = vmatpush1.msra.mxu0 0.0
    %1246 = vmatprep.subr.mxu0 0.0
    %1247 = vmatpush1.msra.mxu0 0.0
    %1248 = vmatprep.subr.mxu0 0.0
    %1249 = vmatpush1.msra.mxu0 0.0
    %1250 = vmatprep.subr.mxu0 0.0
    %1251 = vmatpush1.msra.mxu0 0.0
    %1252 = vmatprep.subr.mxu0 0.0
    %1253 = vmatpush1.msra.mxu0 0.0
    %1254 = vmatprep.mubr.f32.mxu0 0.0
    %1255 = vmatmul.mubr.f32.gmra.mrb[0].mxu0 %v1100
    %v1256 = vpop.f32.mrb[0].mxu0
    %v1257 = vadd.f32 %v435, %v1256
    %v1258 = vpop.f32.mrb[0].mxu0
    %1259 = vdwg.mxu0
    %v1260 = vmul.f32 %v1182, %v1257
    %v1261 = vadd.f32 %v1104, %v1260
    %v1262 = vtanh.pop %v1261
    %v1263 = vsub.f32 1.0, %v1189
    %v1264 = vmul.f32 %v1263, %v1262
    %v1265 = vmul.f32 %v1189, %v1100
    %v1266 = vadd.f32 %v1264, %v1265
    %s1267 = scalar_lea.vmem [#allocation2], 120
    %v1268 = vld [vmem:[%s1267] sm:$0xff]
    %v1269 = vld [vmem:[%s1267 + $0x8] sm:$0xff]
    %v1270 = vld [vmem:[%s1267 + $0x10] sm:$0xff]
    %1271 = vmatprep.subr.mxu0 %v383
    %1272 = vmatpush1.msra.mxu0 %v382
    %1273 = vmatprep.subr.mxu0 %v386
    %1274 = vmatpush1.msra.mxu0 %v385
    %1275 = vmatprep.subr.mxu0 %v389
    %1276 = vmatpush1.msra.mxu0 %v388
    %1277 = vmatprep.subr.mxu0 %v392
    %1278 = vmatpush1.msra.mxu0 %v391
    %1279 = vmatprep.subr.mxu0 %v395
    %1280 = vmatpush1.msra.mxu0 %v394
    %1281 = vmatprep.subr.mxu0 %v398
    %1282 = vmatpush1.msra.mxu0 %v397
    %1283 = vmatprep.subr.mxu0 %v401
    %1284 = vmatpush1.msra.mxu0 %v400
    %1285 = vmatprep.subr.mxu0 %v404
    %1286 = vmatpush1.msra.mxu0 %v403
    %1287 = vmatprep.subr.mxu0 %v407
    %1288 = vmatpush1.msra.mxu0 %v406
    %1289 = vmatprep.subr.mxu0 %v410
    %1290 = vmatpush1.msra.mxu0 %v409
    %1291 = vmatprep.subr.mxu0 %v413
    %1292 = vmatpush1.msra.mxu0 %v412
    %1293 = vmatprep.subr.mxu0 %v416
    %1294 = vmatpush1.msra.mxu0 %v415
    %1295 = vmatprep.subr.mxu0 %v419
    %1296 = vmatpush1.msra.mxu0 %v418
    %1297 = vmatprep.subr.mxu0 %v422
    %1298 = vmatpush1.msra.mxu0 %v421
    %1299 = vmatprep.subr.mxu0 %v425
    %1300 = vmatpush1.msra.mxu0 %v424
    %1301 = vmatprep.subr.mxu0 %v428
    %1302 = vmatpush1.msra.mxu0 %v427
    %1303 = vmatprep.subr.mxu0 0.0
    %1304 = vmatpush1.msra.mxu0 0.0
    %1305 = vmatprep.subr.mxu0 0.0
    %1306 = vmatpush1.msra.mxu0 0.0
    %1307 = vmatprep.subr.mxu0 0.0
    %1308 = vmatpush1.msra.mxu0 0.0
    %1309 = vmatprep.subr.mxu0 0.0
    %1310 = vmatpush1.msra.mxu0 0.0
    %1311 = vmatprep.subr.mxu0 0.0
    %1312 = vmatpush1.msra.mxu0 0.0
    %1313 = vmatprep.subr.mxu0 0.0
    %1314 = vmatpush1.msra.mxu0 0.0
    %1315 = vmatprep.subr.mxu0 0.0
    %1316 = vmatpush1.msra.mxu0 0.0
    %1317 = vmatprep.subr.mxu0 0.0
    %1318 = vmatpush1.msra.mxu0 0.0
    %1319 = vmatprep.subr.mxu0 0.0
    %1320 = vmatpush1.msra.mxu0 0.0
    %1321 = vmatprep.subr.mxu0 0.0
    %1322 = vmatpush1.msra.mxu0 0.0
    %1323 = vmatprep.subr.mxu0 0.0
    %1324 = vmatpush1.msra.mxu0 0.0
    %1325 = vmatprep.subr.mxu0 0.0
    %1326 = vmatpush1.msra.mxu0 0.0
    %1327 = vmatprep.subr.mxu0 0.0
    %1328 = vmatpush1.msra.mxu0 0.0
    %1329 = vmatprep.subr.mxu0 0.0
    %1330 = vmatpush1.msra.mxu0 0.0
    %1331 = vmatprep.subr.mxu0 0.0
    %1332 = vmatpush1.msra.mxu0 0.0
    %1333 = vmatprep.subr.mxu0 0.0
    %1334 = vmatpush1.msra.mxu0 0.0
    %1335 = vmatprep.mubr.f32.mxu0 0.0
    %1336 = vmatmul.mubr.f32.gmra.mrb[0].mxu0 %v1266
    %v1337 = vpop.f32.mrb[0].mxu0
    %v1338 = vadd.f32 0.0, %v1337
    %v1339 = vpop.f32.mrb[0].mxu0
    %v1340 = vadd.f32 0.0, %v1339
    %1341 = vdwg.mxu0
    %v1342 = vadd.f32 %v1268, %v1338
    %v1343 = vxor.u32 %v1342, 2147483648
    %v1344 = vmul.f32 %v1343, 1.442695
    %v1345 = vpow.pop %v1344
    %v1346 = vadd.f32 %v1345, 1.0
    %v1347 = vrcp.pop %v1346
    %v1348 = vmul.f32 1.0, %v1347
    %v1349 = vadd.f32 %v1269, %v1340
    %v1350 = vxor.u32 %v1349, 2147483648
    %v1351 = vmul.f32 %v1350, 1.442695
    %v1352 = vpow.pop %v1351
    %v1353 = vadd.f32 %v1352, 1.0
    %v1354 = vrcp.pop %v1353
    %v1355 = vmul.f32 1.0, %v1354
    %1356 = vmatprep.subr.mxu0 0.0
    %1357 = vmatpush1.msra.mxu0 %v384
    %1358 = vmatprep.subr.mxu0 0.0
    %1359 = vmatpush1.msra.mxu0 %v387
    %1360 = vmatprep.subr.mxu0 0.0
    %1361 = vmatpush1.msra.mxu0 %v390
    %1362 = vmatprep.subr.mxu0 0.0
    %1363 = vmatpush1.msra.mxu0 %v393
    %1364 = vmatprep.subr.mxu0 0.0
    %1365 = vmatpush1.msra.mxu0 %v396
    %1366 = vmatprep.subr.mxu0 0.0
    %1367 = vmatpush1.msra.mxu0 %v399
    %1368 = vmatprep.subr.mxu0 0.0
    %1369 = vmatpush1.msra.mxu0 %v402
    %1370 = vmatprep.subr.mxu0 0.0
    %1371 = vmatpush1.msra.mxu0 %v405
    %1372 = vmatprep.subr.mxu0 0.0
    %1373 = vmatpush1.msra.mxu0 %v408
    %1374 = vmatprep.subr.mxu0 0.0
    %1375 = vmatpush1.msra.mxu0 %v411
    %1376 = vmatprep.subr.mxu0 0.0
    %1377 = vmatpush1.msra.mxu0 %v414
    %1378 = vmatprep.subr.mxu0 0.0
    %1379 = vmatpush1.msra.mxu0 %v417
    %1380 = vmatprep.subr.mxu0 0.0
    %1381 = vmatpush1.msra.mxu0 %v420
    %1382 = vmatprep.subr.mxu0 0.0
    %1383 = vmatpush1.msra.mxu0 %v423
    %1384 = vmatprep.subr.mxu0 0.0
    %1385 = vmatpush1.msra.mxu0 %v426
    %1386 = vmatprep.subr.mxu0 0.0
    %1387 = vmatpush1.msra.mxu0 %v429
    %1388 = vmatprep.subr.mxu0 0.0
    %1389 = vmatpush1.msra.mxu0 0.0
    %1390 = vmatprep.subr.mxu0 0.0
    %1391 = vmatpush1.msra.mxu0 0.0
    %1392 = vmatprep.subr.mxu0 0.0
    %1393 = vmatpush1.msra.mxu0 0.0
    %1394 = vmatprep.subr.mxu0 0.0
    %1395 = vmatpush1.msra.mxu0 0.0
    %1396 = vmatprep.subr.mxu0 0.0
    %1397 = vmatpush1.msra.mxu0 0.0
    %1398 = vmatprep.subr.mxu0 0.0
    %1399 = vmatpush1.msra.mxu0 0.0
    %1400 = vmatprep.subr.mxu0 0.0
    %1401 = vmatpush1.msra.mxu0 0.0
    %1402 = vmatprep.subr.mxu0 0.0
    %1403 = vmatpush1.msra.mxu0 0.0
    %1404 = vmatprep.subr.mxu0 0.0
    %1405 = vmatpush1.msra.mxu0 0.0
    %1406 = vmatprep.subr.mxu0 0.0
    %1407 = vmatpush1.msra.mxu0 0.0
    %1408 = vmatprep.subr.mxu0 0.0
    %1409 = vmatpush1.msra.mxu0 0.0
    %1410 = vmatprep.subr.mxu0 0.0
    %1411 = vmatpush1.msra.mxu0 0.0
    %1412 = vmatprep.subr.mxu0 0.0
    %1413 = vmatpush1.msra.mxu0 0.0
    %1414 = vmatprep.subr.mxu0 0.0
    %1415 = vmatpush1.msra.mxu0 0.0
    %1416 = vmatprep.subr.mxu0 0.0
    %1417 = vmatpush1.msra.mxu0 0.0
    %1418 = vmatprep.subr.mxu0 0.0
    %1419 = vmatpush1.msra.mxu0 0.0
    %1420 = vmatprep.mubr.f32.mxu0 0.0
    %1421 = vmatmul.mubr.f32.gmra.mrb[0].mxu0 %v1266
    %v1422 = vpop.f32.mrb[0].mxu0
    %v1423 = vadd.f32 %v435, %v1422
    %v1424 = vpop.f32.mrb[0].mxu0
    %1425 = vdwg.mxu0
    %v1426 = vmul.f32 %v1348, %v1423
    %v1427 = vadd.f32 %v1270, %v1426
    %v1428 = vtanh.pop %v1427
    %v1429 = vsub.f32 1.0, %v1355
    %v1430 = vmul.f32 %v1429, %v1428
    %v1431 = vmul.f32 %v1355, %v1266
    %v1432 = vadd.f32 %v1430, %v1431
    %s1433 = scalar_lea.vmem [#allocation2], 144
    %v1434 = vld [vmem:[%s1433] sm:$0xff]
    %v1435 = vld [vmem:[%s1433 + $0x8] sm:$0xff]
    %v1436 = vld [vmem:[%s1433 + $0x10] sm:$0xff]
    %1437 = vmatprep.subr.mxu0 %v383
    %1438 = vmatpush1.msra.mxu0 %v382
    %1439 = vmatprep.subr.mxu0 %v386
    %1440 = vmatpush1.msra.mxu0 %v385
    %1441 = vmatprep.subr.mxu0 %v389
    %1442 = vmatpush1.msra.mxu0 %v388
    %1443 = vmatprep.subr.mxu0 %v392
    %1444 = vmatpush1.msra.mxu0 %v391
    %1445 = vmatprep.subr.mxu0 %v395
    %1446 = vmatpush1.msra.mxu0 %v394
    %1447 = vmatprep.subr.mxu0 %v398
    %1448 = vmatpush1.msra.mxu0 %v397
    %1449 = vmatprep.subr.mxu0 %v401
    %1450 = vmatpush1.msra.mxu0 %v400
    %1451 = vmatprep.subr.mxu0 %v404
    %1452 = vmatpush1.msra.mxu0 %v403
    %1453 = vmatprep.subr.mxu0 %v407
    %1454 = vmatpush1.msra.mxu0 %v406
    %1455 = vmatprep.subr.mxu0 %v410
    %1456 = vmatpush1.msra.mxu0 %v409
    %1457 = vmatprep.subr.mxu0 %v413
    %1458 = vmatpush1.msra.mxu0 %v412
    %1459 = vmatprep.subr.mxu0 %v416
    %1460 = vmatpush1.msra.mxu0 %v415
    %1461 = vmatprep.subr.mxu0 %v419
    %1462 = vmatpush1.msra.mxu0 %v418
    %1463 = vmatprep.subr.mxu0 %v422
    %1464 = vmatpush1.msra.mxu0 %v421
    %1465 = vmatprep.subr.mxu0 %v425
    %1466 = vmatpush1.msra.mxu0 %v424
    %1467 = vmatprep.subr.mxu0 %v428
    %1468 = vmatpush1.msra.mxu0 %v427
    %1469 = vmatprep.subr.mxu0 0.0
    %1470 = vmatpush1.msra.mxu0 0.0
    %1471 = vmatprep.subr.mxu0 0.0
    %1472 = vmatpush1.msra.mxu0 0.0
    %1473 = vmatprep.subr.mxu0 0.0
    %1474 = vmatpush1.msra.mxu0 0.0
    %1475 = vmatprep.subr.mxu0 0.0
    %1476 = vmatpush1.msra.mxu0 0.0
    %1477 = vmatprep.subr.mxu0 0.0
    %1478 = vmatpush1.msra.mxu0 0.0
    %1479 = vmatprep.subr.mxu0 0.0
    %1480 = vmatpush1.msra.mxu0 0.0
    %1481 = vmatprep.subr.mxu0 0.0
    %1482 = vmatpush1.msra.mxu0 0.0
    %1483 = vmatprep.subr.mxu0 0.0
    %1484 = vmatpush1.msra.mxu0 0.0
    %1485 = vmatprep.subr.mxu0 0.0
    %1486 = vmatpush1.msra.mxu0 0.0
    %1487 = vmatprep.subr.mxu0 0.0
    %1488 = vmatpush1.msra.mxu0 0.0
    %1489 = vmatprep.subr.mxu0 0.0
    %1490 = vmatpush1.msra.mxu0 0.0
    %1491 = vmatprep.subr.mxu0 0.0
    %1492 = vmatpush1.msra.mxu0 0.0
    %1493 = vmatprep.subr.mxu0 0.0
    %1494 = vmatpush1.msra.mxu0 0.0
    %1495 = vmatprep.subr.mxu0 0.0
    %1496 = vmatpush1.msra.mxu0 0.0
    %1497 = vmatprep.subr.mxu0 0.0
    %1498 = vmatpush1.msra.mxu0 0.0
    %1499 = vmatprep.subr.mxu0 0.0
    %1500 = vmatpush1.msra.mxu0 0.0
    %1501 = vmatprep.mubr.f32.mxu0 0.0
    %1502 = vmatmul.mubr.f32.gmra.mrb[0].mxu0 %v1432
    %v1503 = vpop.f32.mrb[0].mxu0
    %v1504 = vadd.f32 0.0, %v1503
    %v1505 = vpop.f32.mrb[0].mxu0
    %v1506 = vadd.f32 0.0, %v1505
    %1507 = vdwg.mxu0
    %v1508 = vadd.f32 %v1434, %v1504
    %v1509 = vxor.u32 %v1508, 2147483648
    %v1510 = vmul.f32 %v1509, 1.442695
    %v1511 = vpow.pop %v1510
    %v1512 = vadd.f32 %v1511, 1.0
    %v1513 = vrcp.pop %v1512
    %v1514 = vmul.f32 1.0, %v1513
    %v1515 = vadd.f32 %v1435, %v1506
    %v1516 = vxor.u32 %v1515, 2147483648
    %v1517 = vmul.f32 %v1516, 1.442695
    %v1518 = vpow.pop %v1517
    %v1519 = vadd.f32 %v1518, 1.0
    %v1520 = vrcp.pop %v1519
    %v1521 = vmul.f32 1.0, %v1520
    %1522 = vmatprep.subr.mxu0 0.0
    %1523 = vmatpush1.msra.mxu0 %v384
    %1524 = vmatprep.subr.mxu0 0.0
    %1525 = vmatpush1.msra.mxu0 %v387
    %1526 = vmatprep.subr.mxu0 0.0
    %1527 = vmatpush1.msra.mxu0 %v390
    %1528 = vmatprep.subr.mxu0 0.0
    %1529 = vmatpush1.msra.mxu0 %v393
    %1530 = vmatprep.subr.mxu0 0.0
    %1531 = vmatpush1.msra.mxu0 %v396
    %1532 = vmatprep.subr.mxu0 0.0
    %1533 = vmatpush1.msra.mxu0 %v399
    %1534 = vmatprep.subr.mxu0 0.0
    %1535 = vmatpush1.msra.mxu0 %v402
    %1536 = vmatprep.subr.mxu0 0.0
    %1537 = vmatpush1.msra.mxu0 %v405
    %1538 = vmatprep.subr.mxu0 0.0
    %1539 = vmatpush1.msra.mxu0 %v408
    %1540 = vmatprep.subr.mxu0 0.0
    %1541 = vmatpush1.msra.mxu0 %v411
    %1542 = vmatprep.subr.mxu0 0.0
    %1543 = vmatpush1.msra.mxu0 %v414
    %1544 = vmatprep.subr.mxu0 0.0
    %1545 = vmatpush1.msra.mxu0 %v417
    %1546 = vmatprep.subr.mxu0 0.0
    %1547 = vmatpush1.msra.mxu0 %v420
    %1548 = vmatprep.subr.mxu0 0.0
    %1549 = vmatpush1.msra.mxu0 %v423
    %1550 = vmatprep.subr.mxu0 0.0
    %1551 = vmatpush1.msra.mxu0 %v426
    %1552 = vmatprep.subr.mxu0 0.0
    %1553 = vmatpush1.msra.mxu0 %v429
    %1554 = vmatprep.subr.mxu0 0.0
    %1555 = vmatpush1.msra.mxu0 0.0
    %1556 = vmatprep.subr.mxu0 0.0
    %1557 = vmatpush1.msra.mxu0 0.0
    %1558 = vmatprep.subr.mxu0 0.0
    %1559 = vmatpush1.msra.mxu0 0.0
    %1560 = vmatprep.subr.mxu0 0.0
    %1561 = vmatpush1.msra.mxu0 0.0
    %1562 = vmatprep.subr.mxu0 0.0
    %1563 = vmatpush1.msra.mxu0 0.0
    %1564 = vmatprep.subr.mxu0 0.0
    %1565 = vmatpush1.msra.mxu0 0.0
    %1566 = vmatprep.subr.mxu0 0.0
    %1567 = vmatpush1.msra.mxu0 0.0
    %1568 = vmatprep.subr.mxu0 0.0
    %1569 = vmatpush1.msra.mxu0 0.0
    %1570 = vmatprep.subr.mxu0 0.0
    %1571 = vmatpush1.msra.mxu0 0.0
    %1572 = vmatprep.subr.mxu0 0.0
    %1573 = vmatpush1.msra.mxu0 0.0
    %1574 = vmatprep.subr.mxu0 0.0
    %1575 = vmatpush1.msra.mxu0 0.0
    %1576 = vmatprep.subr.mxu0 0.0
    %1577 = vmatpush1.msra.mxu0 0.0
    %1578 = vmatprep.subr.mxu0 0.0
    %1579 = vmatpush1.msra.mxu0 0.0
    %1580 = vmatprep.subr.mxu0 0.0
    %1581 = vmatpush1.msra.mxu0 0.0
    %1582 = vmatprep.subr.mxu0 0.0
    %1583 = vmatpush1.msra.mxu0 0.0
    %1584 = vmatprep.subr.mxu0 0.0
    %1585 = vmatpush1.msra.mxu0 0.0
    %1586 = vmatprep.mubr.f32.mxu0 0.0
    %1587 = vmatmul.mubr.f32.gmra.mrb[0].mxu0 %v1432
    %v1588 = vpop.f32.mrb[0].mxu0
    %v1589 = vadd.f32 %v435, %v1588
    %v1590 = vpop.f32.mrb[0].mxu0
    %1591 = vdwg.mxu0
    %v1592 = vmul.f32 %v1514, %v1589
    %v1593 = vadd.f32 %v1436, %v1592
    %v1594 = vtanh.pop %v1593
    %v1595 = vsub.f32 1.0, %v1521
    %v1596 = vmul.f32 %v1595, %v1594
    %v1597 = vmul.f32 %v1521, %v1432
    %v1598 = vadd.f32 %v1596, %v1597
    %s1599 = scalar_lea.vmem [#allocation2], 168
    %v1600 = vld [vmem:[%s1599] sm:$0xff]
    %v1601 = vld [vmem:[%s1599 + $0x8] sm:$0xff]
    %v1602 = vld [vmem:[%s1599 + $0x10] sm:$0xff]
    %1603 = vmatprep.subr.mxu0 %v383
    %1604 = vmatpush1.msra.mxu0 %v382
    %1605 = vmatprep.subr.mxu0 %v386
    %1606 = vmatpush1.msra.mxu0 %v385
    %1607 = vmatprep.subr.mxu0 %v389
    %1608 = vmatpush1.msra.mxu0 %v388
    %1609 = vmatprep.subr.mxu0 %v392
    %1610 = vmatpush1.msra.mxu0 %v391
    %1611 = vmatprep.subr.mxu0 %v395
    %1612 = vmatpush1.msra.mxu0 %v394
    %1613 = vmatprep.subr.mxu0 %v398
    %1614 = vmatpush1.msra.mxu0 %v397
    %1615 = vmatprep.subr.mxu0 %v401
    %1616 = vmatpush1.msra.mxu0 %v400
    %1617 = vmatprep.subr.mxu0 %v404
    %1618 = vmatpush1.msra.mxu0 %v403
    %1619 = vmatprep.subr.mxu0 %v407
    %1620 = vmatpush1.msra.mxu0 %v406
    %1621 = vmatprep.subr.mxu0 %v410
    %1622 = vmatpush1.msra.mxu0 %v409
    %1623 = vmatprep.subr.mxu0 %v413
    %1624 = vmatpush1.msra.mxu0 %v412
    %1625 = vmatprep.subr.mxu0 %v416
    %1626 = vmatpush1.msra.mxu0 %v415
    %1627 = vmatprep.subr.mxu0 %v419
    %1628 = vmatpush1.msra.mxu0 %v418
    %1629 = vmatprep.subr.mxu0 %v422
    %1630 = vmatpush1.msra.mxu0 %v421
    %1631 = vmatprep.subr.mxu0 %v425
    %1632 = vmatpush1.msra.mxu0 %v424
    %1633 = vmatprep.subr.mxu0 %v428
    %1634 = vmatpush1.msra.mxu0 %v427
    %1635 = vmatprep.subr.mxu0 0.0
    %1636 = vmatpush1.msra.mxu0 0.0
    %1637 = vmatprep.subr.mxu0 0.0
    %1638 = vmatpush1.msra.mxu0 0.0
    %1639 = vmatprep.subr.mxu0 0.0
    %1640 = vmatpush1.msra.mxu0 0.0
    %1641 = vmatprep.subr.mxu0 0.0
    %1642 = vmatpush1.msra.mxu0 0.0
    %1643 = vmatprep.subr.mxu0 0.0
    %1644 = vmatpush1.msra.mxu0 0.0
    %1645 = vmatprep.subr.mxu0 0.0
    %1646 = vmatpush1.msra.mxu0 0.0
    %1647 = vmatprep.subr.mxu0 0.0
    %1648 = vmatpush1.msra.mxu0 0.0
    %1649 = vmatprep.subr.mxu0 0.0
    %1650 = vmatpush1.msra.mxu0 0.0
    %1651 = vmatprep.subr.mxu0 0.0
    %1652 = vmatpush1.msra.mxu0 0.0
    %1653 = vmatprep.subr.mxu0 0.0
    %1654 = vmatpush1.msra.mxu0 0.0
    %1655 = vmatprep.subr.mxu0 0.0
    %1656 = vmatpush1.msra.mxu0 0.0
    %1657 = vmatprep.subr.mxu0 0.0
    %1658 = vmatpush1.msra.mxu0 0.0
    %1659 = vmatprep.subr.mxu0 0.0
    %1660 = vmatpush1.msra.mxu0 0.0
    %1661 = vmatprep.subr.mxu0 0.0
    %1662 = vmatpush1.msra.mxu0 0.0
    %1663 = vmatprep.subr.mxu0 0.0
    %1664 = vmatpush1.msra.mxu0 0.0
    %1665 = vmatprep.subr.mxu0 0.0
    %1666 = vmatpush1.msra.mxu0 0.0
    %1667 = vmatprep.mubr.f32.mxu0 0.0
    %1668 = vmatmul.mubr.f32.gmra.mrb[0].mxu0 %v1598
    %v1669 = vpop.f32.mrb[0].mxu0
    %v1670 = vadd.f32 0.0, %v1669
    %v1671 = vpop.f32.mrb[0].mxu0
    %v1672 = vadd.f32 0.0, %v1671
    %1673 = vdwg.mxu0
    %v1674 = vadd.f32 %v1600, %v1670
    %v1675 = vxor.u32 %v1674, 2147483648
    %v1676 = vmul.f32 %v1675, 1.442695
    %v1677 = vpow.pop %v1676
    %v1678 = vadd.f32 %v1677, 1.0
    %v1679 = vrcp.pop %v1678
    %v1680 = vmul.f32 1.0, %v1679
    %v1681 = vadd.f32 %v1601, %v1672
    %v1682 = vxor.u32 %v1681, 2147483648
    %v1683 = vmul.f32 %v1682, 1.442695
    %v1684 = vpow.pop %v1683
    %v1685 = vadd.f32 %v1684, 1.0
    %v1686 = vrcp.pop %v1685
    %v1687 = vmul.f32 1.0, %v1686
    %1688 = vmatprep.subr.mxu0 0.0
    %1689 = vmatpush1.msra.mxu0 %v384
    %1690 = vmatprep.subr.mxu0 0.0
    %1691 = vmatpush1.msra.mxu0 %v387
    %1692 = vmatprep.subr.mxu0 0.0
    %1693 = vmatpush1.msra.mxu0 %v390
    %1694 = vmatprep.subr.mxu0 0.0
    %1695 = vmatpush1.msra.mxu0 %v393
    %1696 = vmatprep.subr.mxu0 0.0
    %1697 = vmatpush1.msra.mxu0 %v396
    %1698 = vmatprep.subr.mxu0 0.0
    %1699 = vmatpush1.msra.mxu0 %v399
    %1700 = vmatprep.subr.mxu0 0.0
    %1701 = vmatpush1.msra.mxu0 %v402
    %1702 = vmatprep.subr.mxu0 0.0
    %1703 = vmatpush1.msra.mxu0 %v405
    %1704 = vmatprep.subr.mxu0 0.0
    %1705 = vmatpush1.msra.mxu0 %v408
    %1706 = vmatprep.subr.mxu0 0.0
    %1707 = vmatpush1.msra.mxu0 %v411
    %1708 = vmatprep.subr.mxu0 0.0
    %1709 = vmatpush1.msra.mxu0 %v414
    %1710 = vmatprep.subr.mxu0 0.0
    %1711 = vmatpush1.msra.mxu0 %v417
    %1712 = vmatprep.subr.mxu0 0.0
    %1713 = vmatpush1.msra.mxu0 %v420
    %1714 = vmatprep.subr.mxu0 0.0
    %1715 = vmatpush1.msra.mxu0 %v423
    %1716 = vmatprep.subr.mxu0 0.0
    %1717 = vmatpush1.msra.mxu0 %v426
    %1718 = vmatprep.subr.mxu0 0.0
    %1719 = vmatpush1.msra.mxu0 %v429
    %1720 = vmatprep.subr.mxu0 0.0
    %1721 = vmatpush1.msra.mxu0 0.0
    %1722 = vmatprep.subr.mxu0 0.0
    %1723 = vmatpush1.msra.mxu0 0.0
    %1724 = vmatprep.subr.mxu0 0.0
    %1725 = vmatpush1.msra.mxu0 0.0
    %1726 = vmatprep.subr.mxu0 0.0
    %1727 = vmatpush1.msra.mxu0 0.0
    %1728 = vmatprep.subr.mxu0 0.0
    %1729 = vmatpush1.msra.mxu0 0.0
    %1730 = vmatprep.subr.mxu0 0.0
    %1731 = vmatpush1.msra.mxu0 0.0
    %1732 = vmatprep.subr.mxu0 0.0
    %1733 = vmatpush1.msra.mxu0 0.0
    %1734 = vmatprep.subr.mxu0 0.0
    %1735 = vmatpush1.msra.mxu0 0.0
    %1736 = vmatprep.subr.mxu0 0.0
    %1737 = vmatpush1.msra.mxu0 0.0
    %1738 = vmatprep.subr.mxu0 0.0
    %1739 = vmatpush1.msra.mxu0 0.0
    %1740 = vmatprep.subr.mxu0 0.0
    %1741 = vmatpush1.msra.mxu0 0.0
    %1742 = vmatprep.subr.mxu0 0.0
    %1743 = vmatpush1.msra.mxu0 0.0
    %1744 = vmatprep.subr.mxu0 0.0
    %1745 = vmatpush1.msra.mxu0 0.0
    %1746 = vmatprep.subr.mxu0 0.0
    %1747 = vmatpush1.msra.mxu0 0.0
    %1748 = vmatprep.subr.mxu0 0.0
    %1749 = vmatpush1.msra.mxu0 0.0
    %1750 = vmatprep.subr.mxu0 0.0
    %1751 = vmatpush1.msra.mxu0 0.0
    %1752 = vmatprep.mubr.f32.mxu0 0.0
    %1753 = vmatmul.mubr.f32.gmra.mrb[0].mxu0 %v1598
    %v1754 = vpop.f32.mrb[0].mxu0
    %v1755 = vadd.f32 %v435, %v1754
    %v1756 = vpop.f32.mrb[0].mxu0
    %1757 = vdwg.mxu0
    %v1758 = vmul.f32 %v1680, %v1755
    %v1759 = vadd.f32 %v1602, %v1758
    %v1760 = vtanh.pop %v1759
    %v1761 = vsub.f32 1.0, %v1687
    %v1762 = vmul.f32 %v1761, %v1760
    %v1763 = vmul.f32 %v1687, %v1598
    %v1764 = vadd.f32 %v1762, %v1763
    %1765 = vst [vmem:[#allocation3] sm:$0xff] %v1764
    // Predicated region
    $region38: #{tpu_custom_call.1} parent=1 // pred_check
      %p1766 = pneg %p62
    $region39: #{tpu_custom_call.1} parent=1 // pred_check_branch
      %1768 = sbr.rel (%p1766) target = $region41
    $region40: #{tpu_custom_call.1} parent=1 // pred_region
      %1769 = vst [vmem:[#allocation10] sm:$0xff] %v1764
    $region41: #{tpu_custom_call.1} parent=1 // pred_fallthru
      _
    // Predicated region
    $region42: #{tpu_custom_call.1} parent=1 // pred_check
      _
    $region43: #{tpu_custom_call.1} parent=1 // pred_check_branch
      %1771 = sbr.rel (0) target = $region45
    $region44: #{tpu_custom_call.1} parent=1 // pred_region
      %s1773 = ssub.s32 128, 128
      %1774 = vsyncadd [#allocation6], %s1773
      %s1776 = sshll.u32 [#allocation10], 4
      %s1777 = int_to_ptr.vmem [resolvable:$true] %s1776
      %1779 = dma.vmem_to_hbm [thread:$0]  %s1777, 128, %s5, [#allocation6]
    $region45: #{tpu_custom_call.1} parent=1 // pred_fallthru
      _
    // Predicated region
    $region46: #{tpu_custom_call.1} parent=1 // pred_check
      _
    $region47: #{tpu_custom_call.1} parent=1 // pred_check_branch
      %1781 = sbr.rel (0) target = $region49
    $region48: #{tpu_custom_call.1} parent=1 // pred_region
      %1782 = dma.done [#allocation6], 128
    $region49: #{tpu_custom_call.1} parent=1 // pred_fallthru
      _
    %1783 = vsyncpa [#allocation5], 1
    %1784 = vsyncpa [#allocation8], 1
    %1785 = vsyncpa [#allocation6], 1

</llo_original>
